<compile_context>
chip_gen: v6e
topology: v6e:2x2x1
jax: 0.10.0
libtpu: 0.0.40
codegen_flags: <defaults>
</compile_context>

<pallas_src>
import functools

import jax
import jax.numpy as jnp
from jax.experimental import pallas as pl
from jax.experimental.pallas import tpu as pltpu  # noqa: F401

LANE_W = 128  # lane width of the packed parameter slab


# ----------------------------------------------------------------------------
# Parameter slab layout (per layer, row offsets relative to l * rows_per_layer)
#   [0      , 2D)      : block-diag fused QKV weight (2D, 3D), lanes [0, 3D)
#                          rows [0, D)  = [Wq^T | Wk^T |  0  ]
#                          rows [D, 2D) = [ 0   |  0   | Wv^T]
#   [2D     , 3D)      : Wo^T  (D, D)   lanes [0, D)
#   [3D     , 4D)      : W1^T  (D, FF)  lanes [0, FF)
#   [4D     , 4D+FF)   : W2^T  (FF, D)  lanes [0, D)
#   [4D+FF  , 4D+FF+8) : bias/gain block (8, 128):
#       row 0: [bq | bk | bv] (3D lanes)   row 1: bo
#       row 2: norm1.gain   row 3: norm1.bias
#       row 4: b1 (FF)      row 5: b2      row 6: norm2.gain   row 7: norm2.bias
# Final block (after L layers), 8 rows: row 0 = final LN gain, row 1 = bias.
# ----------------------------------------------------------------------------
def _rows_per_layer(D, FF):
    return 4 * D + FF + 8


def pack_param_slab(params, D, FF):
    L = params["wq_t"].shape[0]
    assert 3 * D <= LANE_W and FF <= LANE_W and 2 * D <= LANE_W
    rpl = _rows_per_layer(D, FF)
    total = L * rpl + 8
    slab = jnp.zeros((total, LANE_W), jnp.float32)

    def put(s, r0, arr):
        r, c = arr.shape
        return s.at[r0:r0 + r, 0:c].set(arr)

    for l in range(L):
        base = l * rpl
        wqkv = jnp.zeros((2 * D, 3 * D), jnp.float32)
        wqkv = wqkv.at[0:D, 0:D].set(params["wq_t"][l])
        wqkv = wqkv.at[0:D, D:2 * D].set(params["wk_t"][l])
        wqkv = wqkv.at[D:2 * D, 2 * D:3 * D].set(params["wv_t"][l])
        slab = put(slab, base, wqkv)
        slab = put(slab, base + 2 * D, params["wo_t"][l])
        slab = put(slab, base + 3 * D, params["w1_t"][l])
        slab = put(slab, base + 4 * D, params["w2_t"][l])
        bb = base + 4 * D + FF
        bqkv = jnp.concatenate(
            [params["bq"][l], params["bk"][l], params["bv"][l]], axis=-1)
        slab = put(slab, bb + 0, bqkv)
        slab = put(slab, bb + 1, params["bo"][l])
        slab = put(slab, bb + 2, params["g1"][l])
        slab = put(slab, bb + 3, params["be1"][l])
        slab = put(slab, bb + 4, params["b1"][l])
        slab = put(slab, bb + 5, params["b2"][l])
        slab = put(slab, bb + 6, params["g2"][l])
        slab = put(slab, bb + 7, params["be2"][l])
    fb = L * rpl
    slab = put(slab, fb + 0, params["final_g"])
    slab = put(slab, fb + 1, params["final_b"])
    return slab


# ----------------------------------------------------------------------------
# Fused Pallas kernel: [layer0 -> layer1 -> final LayerNorm] for the full batch
# ----------------------------------------------------------------------------
def _fused_encoder_kernel(x_ref, pos_ref, p_ref, o_ref, *,
                          nhead, nlayers, batch, d_ff, dense_out, eps=1e-5):
    BS, D = x_ref.shape
    S = BS // batch
    FF = d_ff
    H = nhead
    dh = D // H
    scale = 1.0 / float(dh) ** 0.5
    RPL = _rows_per_layer(D, FF)

    x = x_ref[...].astype(jnp.float32)                       # (B*S, D)
    pos = pos_ref[...].astype(jnp.float32)                   # (S, D)
    # broadcast pos over batch once (hoisted out of the layer loop)
    pos_b = jnp.broadcast_to(pos[None], (batch, S, D)).reshape(BS, D)

    def layer_norm(y, g, b):
        mu = jnp.mean(y, axis=-1, keepdims=True)
        var = jnp.mean((y - mu) ** 2, axis=-1, keepdims=True)
        return (y - mu) * jax.lax.rsqrt(var + eps) * g + b

    for l in range(nlayers):                                 # static unroll
        base = l * RPL
        wqkv = p_ref[base:base + 2 * D, 0:3 * D]             # (2D, 3D)
        wo = p_ref[base + 2 * D:base + 3 * D, 0:D]           # (D, D)
        w1 = p_ref[base + 3 * D:base + 4 * D, 0:FF]          # (D, FF)
        w2 = p_ref[base + 4 * D:base + 4 * D + FF, 0:D]      # (FF, D)
        bl = p_ref[base + 4 * D + FF:base + RPL, :]          # (8, 128)
        bqkv = bl[0:1, 0:3 * D]
        bo = bl[1:2, 0:D]
        g1 = bl[2:3, 0:D]
        be1 = bl[3:4, 0:D]
        b1 = bl[4:5, 0:FF]
        b2 = bl[5:6, 0:D]
        g2 = bl[6:7, 0:D]
        be2 = bl[7:8, 0:D]

        # ONE fused QKV projection: [x+pos | x] @ block-diag(Wqk, Wv)
        xp = jnp.concatenate([x + pos_b, x], axis=-1)                     # (B*S, 2D)
        qkv = jnp.dot(xp, wqkv, preferred_element_type=jnp.float32) + bqkv  # (B*S, 3D)
        qkv3 = qkv.reshape(batch, S, 3 * D)

        # per-head attention; contexts collected then ONE W_O dot
        ctx_heads = []
        for h in range(H):
            qh = qkv3[:, :, h * dh:(h + 1) * dh] * scale                  # (B, S, dh)
            kh = qkv3[:, :, D + h * dh:D + (h + 1) * dh]                  # (B, S, dh)
            vh = qkv3[:, :, 2 * D + h * dh:2 * D + (h + 1) * dh]          # (B, S, dh)
            s = jnp.einsum('bqd,bkd->bqk', qh, kh,
                           preferred_element_type=jnp.float32)            # (B, S, S)
            s = s - jnp.max(s, axis=-1, keepdims=True)
            e = jnp.exp(s)
            p = e * pl.reciprocal(jnp.sum(e, axis=-1, keepdims=True), approx=True)
            ctx = jnp.einsum('bqk,bkd->bqd', p, vh,
                             preferred_element_type=jnp.float32)          # (B, S, dh)
            ctx_heads.append(ctx.reshape(BS, dh))
        ctx_all = jnp.concatenate(ctx_heads, axis=-1)                     # (B*S, D)
        attn_out = jnp.dot(ctx_all, wo, preferred_element_type=jnp.float32) + bo

        # residual + norm1
        src = layer_norm(x + attn_out, g1, be1)
        # FFN: linear1 -> relu -> linear2 (dropout = identity at inference)
        h1 = jnp.maximum(
            jnp.dot(src, w1, preferred_element_type=jnp.float32) + b1, 0.0)
        src2 = jnp.dot(h1, w2, preferred_element_type=jnp.float32) + b2
        # residual + norm2
        x = layer_norm(src + src2, g2, be2)

    # final encoder LayerNorm
    fb = nlayers * RPL
    x = layer_norm(x, p_ref[fb:fb + 1, 0:D], p_ref[fb + 1:fb + 2, 0:D])

    if dense_out:
        # lane-dense store: repack (B*S, D) -> (B*S*D/128, 128) row-major using
        # a leading-dim split + lane concat (no exotic reshape needed).
        g = LANE_W // D
        xg = x.reshape(BS // g, g, D)
        dense = jnp.concatenate([xg[:, i, :] for i in range(g)], axis=-1)
        o_ref[...] = dense.astype(o_ref.dtype)
    else:
        o_ref[...] = x.astype(o_ref.dtype)


# ----------------------------------------------------------------------------
# Wrapper
# ----------------------------------------------------------------------------
def graphtiencoder_forward(tgt_sbd, params, nhead):
    """tgt_sbd: (S, B, D) like the PyTorch module; returns (S, B, D)."""
    S, B, D = tgt_sbd.shape
    L = params["wq_t"].shape[0]
    FF = params["w1_t"].shape[-1]
    BS = B * S

    # single boundary transpose (S,B,D) -> (B,S,D), then flatten to (B*S, D)
    x2d = jnp.transpose(tgt_sbd, (1, 0, 2)).reshape(BS, D)

    dense_out = (D < LANE_W) and (LANE_W % D == 0) and (BS % (LANE_W // D) == 0)
    out_shape = (BS * D // LANE_W, LANE_W) if dense_out else (BS, D)

    kernel = functools.partial(_fused_encoder_kernel, nhead=nhead, nlayers=L,
                               batch=B, d_ff=FF, dense_out=dense_out)

    # One fused call, no grid, 3 operands; activations + all weights (<250 KB)
    # stay resident in VMEM for both layers and the final LayerNorm.
    out = pl.pallas_call(
        kernel,
        out_shape=jax.ShapeDtypeStruct(out_shape, tgt_sbd.dtype),
    )(x2d, params["pos"], params["slab"])

    return out.reshape(B, S, D).transpose(1, 0, 2)            # -> (S, B, D)


# ----------------------------------------------------------------------------
# Deterministic parameter init (stacked over layers) + pure-JAX reference
# ----------------------------------------------------------------------------
def init_params(key, S, D, FF, num_layers):
    names = ["wq_t", "wk_t", "wv_t", "bq", "bk", "bv", "wo_t", "bo",
             "g1", "be1", "w1_t", "b1", "w2_t", "b2", "g2", "be2"]
    per_layer = {k: [] for k in names}
    for _ in range(num_layers):
        keys = jax.random.split(key, 17)
        key = keys[-1]
        per_layer["wq_t"].append(0.05 * jax.random.normal(keys[0], (D, D), jnp.float32))
        per_layer["wk_t"].append(0.05 * jax.random.normal(keys[1], (D, D), jnp.float32))
        per_layer["bq"].append(0.02 * jax.random.normal(keys[2], (1, D), jnp.float32))
        per_layer["bk"].append(0.02 * jax.random.normal(keys[3], (1, D), jnp.float32))
        per_layer["wv_t"].append(0.05 * jax.random.normal(keys[4], (D, D), jnp.float32))
        per_layer["bv"].append(0.02 * jax.random.normal(keys[5], (1, D), jnp.float32))
        per_layer["wo_t"].append(0.05 * jax.random.normal(keys[6], (D, D), jnp.float32))
        per_layer["bo"].append(0.02 * jax.random.normal(keys[7], (1, D), jnp.float32))
        per_layer["g1"].append(1.0 + 0.1 * jax.random.normal(keys[8], (1, D), jnp.float32))
        per_layer["be1"].append(0.1 * jax.random.normal(keys[9], (1, D), jnp.float32))
        per_layer["w1_t"].append(0.05 * jax.random.normal(keys[10], (D, FF), jnp.float32))
        per_layer["b1"].append(0.02 * jax.random.normal(keys[11], (1, FF), jnp.float32))
        per_layer["w2_t"].append(0.05 * jax.random.normal(keys[12], (FF, D), jnp.float32))
        per_layer["b2"].append(0.02 * jax.random.normal(keys[13], (1, D), jnp.float32))
        per_layer["g2"].append(1.0 + 0.1 * jax.random.normal(keys[14], (1, D), jnp.float32))
        per_layer["be2"].append(0.1 * jax.random.normal(keys[15], (1, D), jnp.float32))
    params = {k: jnp.stack(v, axis=0) for k, v in per_layer.items()}
    k1, k2, k3 = jax.random.split(key, 3)
    params["pos"] = 0.1 * jax.random.normal(k1, (S, D), jnp.float32)  # nn.Embedding(S, D)
    params["final_g"] = 1.0 + 0.1 * jax.random.normal(k2, (1, D), jnp.float32)
    params["final_b"] = 0.1 * jax.random.normal(k3, (1, D), jnp.float32)
    params["slab"] = pack_param_slab(params, D, FF)            # packed once
    return params


def reference_forward(tgt_sbd, params, nhead, eps=1e-5):
    def ln(y, g, b):
        mu = y.mean(-1, keepdims=True)
        var = ((y - mu) ** 2).mean(-1, keepdims=True)
        return (y - mu) / jnp.sqrt(var + eps) * g + b

    x = jnp.transpose(tgt_sbd, (1, 0, 2))      # (B, S, D)
    B, S, D = x.shape
    dh = D // nhead
    pos = params["pos"][None]
    L = params["wq_t"].shape[0]
    for l in range(L):
        qk_in = x + pos
        q = qk_in @ params["wq_t"][l] + params["bq"][l][0]
        k = qk_in @ params["wk_t"][l] + params["bk"][l][0]
        v = x @ params["wv_t"][l] + params["bv"][l][0]
        qh = q.reshape(B, S, nhead, dh).transpose(0, 2, 1, 3)
        kh = k.reshape(B, S, nhead, dh).transpose(0, 2, 1, 3)
        vh = v.reshape(B, S, nhead, dh).transpose(0, 2, 1, 3)
        scores = jnp.einsum("bhqd,bhkd->bhqk", qh, kh) / jnp.sqrt(float(dh))
        attn = jax.nn.softmax(scores, axis=-1)
        out = jnp.einsum("bhqk,bhkd->bhqd", attn, vh)
        out = out.transpose(0, 2, 1, 3).reshape(B, S, D) @ params["wo_t"][l] + params["bo"][l][0]
        x = ln(x + out, params["g1"][l][0], params["be1"][l][0])
        h = jax.nn.relu(x @ params["w1_t"][l] + params["b1"][l][0])
        x = ln(x + h @ params["w2_t"][l] + params["b2"][l][0],
               params["g2"][l][0], params["be2"][l][0])
    x = ln(x, params["final_g"][0], params["final_b"][0])
    return jnp.transpose(x, (1, 0, 2))


# ----------------------------------------------------------------------------
if __name__ == "__main__":
    # small config: hidden=32, heads=4, ffn=64, layers=2, seq=8, batch=2
    S, B, D, FF, NHEAD, NLAYERS = 8, 2, 32, 64, 4, 2

    key = jax.random.PRNGKey(0)
    k_in, k_par = jax.random.split(key)
    tgt = jax.random.normal(k_in, (S, B, D), jnp.float32)     # (seq, batch, hidden)
    params = init_params(k_par, S, D, FF, NLAYERS)

    fwd = jax.jit(lambda t, p: graphtiencoder_forward(t, p, NHEAD))
    out = jax.block_until_ready(fwd(tgt, params))

    ref = reference_forward(tgt, params, NHEAD)
    assert out.shape == (S, B, D)
    # tolerance slightly relaxed vs 1e-4 because the softmax denominator uses
    # the approximate (EUP) reciprocal.
    assert jnp.allclose(out, ref, rtol=2e-3, atol=2e-3), "mismatch vs JAX reference"

    print("KERNEL_OK")
</pallas_src>

<mosaic_0001>
module attributes {stable_mosaic.version = 11 : i64} {
  func.func @_fused_encoder_kernel(%arg0: memref<16x32xf32, #tpu.memory_space<vmem>>, %arg1: memref<8x32xf32, #tpu.memory_space<vmem>>, %arg2: memref<408x128xf32, #tpu.memory_space<vmem>>, %arg3: memref<4x128xf32, #tpu.memory_space<vmem>>) attributes {dimension_semantics = [], scalar_prefetch = 0 : i64, scratch_operands = 0 : i64, tpu.core_type = #tpu.core_type<tc>} {
    %c0 = arith.constant 0 : index
    %c0_0 = arith.constant 0 : index
    %0 = vector.load %arg0[%c0, %c0_0] : memref<16x32xf32, #tpu.memory_space<vmem>>, vector<16x32xf32>
    %c0_1 = arith.constant 0 : index
    %c0_2 = arith.constant 0 : index
    %1 = vector.load %arg1[%c0_1, %c0_2] : memref<8x32xf32, #tpu.memory_space<vmem>>, vector<8x32xf32>
    %2 = vector.shape_cast %1 : vector<8x32xf32> to vector<1x8x32xf32>
    %3 = vector.shape_cast %2 : vector<1x8x32xf32> to vector<1x8x32xf32>
    %4 = vector.broadcast %3 : vector<1x8x32xf32> to vector<2x8x32xf32>
    %5 = vector.shape_cast %4 : vector<2x8x32xf32> to vector<16x32xf32>
    %c0_3 = arith.constant 0 : index
    %c0_4 = arith.constant 0 : index
    %6 = vector.load %arg2[%c0_3, %c0_4] : memref<408x128xf32, #tpu.memory_space<vmem>>, vector<64x96xf32>
    %c64 = arith.constant 64 : index
    %c0_5 = arith.constant 0 : index
    %7 = vector.load %arg2[%c64, %c0_5] : memref<408x128xf32, #tpu.memory_space<vmem>>, vector<32x32xf32>
    %c96 = arith.constant 96 : index
    %c0_6 = arith.constant 0 : index
    %8 = vector.load %arg2[%c96, %c0_6] : memref<408x128xf32, #tpu.memory_space<vmem>>, vector<32x64xf32>
    %c128 = arith.constant 128 : index
    %c0_7 = arith.constant 0 : index
    %9 = vector.load %arg2[%c128, %c0_7] : memref<408x128xf32, #tpu.memory_space<vmem>>, vector<64x32xf32>
    %c192 = arith.constant 192 : index
    %c0_8 = arith.constant 0 : index
    %10 = vector.load %arg2[%c192, %c0_8] : memref<408x128xf32, #tpu.memory_space<vmem>>, vector<8x128xf32>
    %11 = vector.extract_strided_slice %10 {offsets = [0, 0], sizes = [1, 96], strides = [1, 1]} : vector<8x128xf32> to vector<1x96xf32>
    %12 = vector.extract_strided_slice %10 {offsets = [1, 0], sizes = [1, 32], strides = [1, 1]} : vector<8x128xf32> to vector<1x32xf32>
    %13 = vector.extract_strided_slice %10 {offsets = [2, 0], sizes = [1, 32], strides = [1, 1]} : vector<8x128xf32> to vector<1x32xf32>
    %14 = vector.extract_strided_slice %10 {offsets = [3, 0], sizes = [1, 32], strides = [1, 1]} : vector<8x128xf32> to vector<1x32xf32>
    %15 = vector.extract_strided_slice %10 {offsets = [4, 0], sizes = [1, 64], strides = [1, 1]} : vector<8x128xf32> to vector<1x64xf32>
    %16 = vector.extract_strided_slice %10 {offsets = [5, 0], sizes = [1, 32], strides = [1, 1]} : vector<8x128xf32> to vector<1x32xf32>
    %17 = vector.extract_strided_slice %10 {offsets = [6, 0], sizes = [1, 32], strides = [1, 1]} : vector<8x128xf32> to vector<1x32xf32>
    %18 = vector.extract_strided_slice %10 {offsets = [7, 0], sizes = [1, 32], strides = [1, 1]} : vector<8x128xf32> to vector<1x32xf32>
    %19 = arith.addf %0, %5 : vector<16x32xf32>
    %20 = tpu.concatenate %19, %0 in 1 : vector<16x32xf32>, vector<16x32xf32> -> vector<16x64xf32>
    %cst = arith.constant dense<0.000000e+00> : vector<16x96xf32>
    %21 = tpu.matmul %20, %6, %cst {dimension_numbers = #tpu.dot_dimension_numbers<[1], [0], [0], [1], [0, 0, 1, 1], [], []>} : vector<16x64xf32>, vector<64x96xf32>, vector<16x96xf32> -> vector<16x96xf32>
    %22 = vector.broadcast %11 : vector<1x96xf32> to vector<16x96xf32>
    %23 = arith.addf %21, %22 : vector<16x96xf32>
    %24 = vector.shape_cast %23 : vector<16x96xf32> to vector<2x8x96xf32>
    %25 = vector.extract_strided_slice %24 {offsets = [0, 0, 0], sizes = [2, 8, 8], strides = [1, 1, 1]} : vector<2x8x96xf32> to vector<2x8x8xf32>
    %cst_9 = arith.constant 0.353553385 : f32
    %26 = vector.broadcast %cst_9 : f32 to vector<2x8x8xf32>
    %27 = arith.mulf %25, %26 : vector<2x8x8xf32>
    %28 = vector.extract_strided_slice %24 {offsets = [0, 0, 32], sizes = [2, 8, 8], strides = [1, 1, 1]} : vector<2x8x96xf32> to vector<2x8x8xf32>
    %29 = vector.extract_strided_slice %24 {offsets = [0, 0, 64], sizes = [2, 8, 8], strides = [1, 1, 1]} : vector<2x8x96xf32> to vector<2x8x8xf32>
    "tpu.trace_start"() <{level = 10 : i32, message = "bqd,bkd->bqk"}> : () -> ()
    %cst_10 = arith.constant dense<0.000000e+00> : vector<2x8x8xf32>
    %30 = tpu.matmul %27, %28, %cst_10 {dimension_numbers = #tpu.dot_dimension_numbers<[2], [2], [1], [1], [0, 0, 0, 1, 1, 1], [0], [0]>} : vector<2x8x8xf32>, vector<2x8x8xf32>, vector<2x8x8xf32> -> vector<2x8x8xf32>
    "tpu.trace_stop"() : () -> ()
    %cst_11 = arith.constant dense<0xFF800000> : vector<2x8xf32>
    %31 = vector.multi_reduction <maximumf>, %30, %cst_11 [2] : vector<2x8x8xf32> to vector<2x8xf32>
    %32 = vector.shape_cast %31 : vector<2x8xf32> to vector<2x8x1xf32>
    %33 = vector.broadcast %32 : vector<2x8x1xf32> to vector<2x8x8xf32>
    %34 = arith.subf %30, %33 : vector<2x8x8xf32>
    %35 = math.exp %34 : vector<2x8x8xf32>
    %cst_12 = arith.constant dense<0.000000e+00> : vector<2x8xf32>
    %36 = vector.multi_reduction <add>, %35, %cst_12 [2] : vector<2x8x8xf32> to vector<2x8xf32>
    %37 = vector.shape_cast %36 : vector<2x8xf32> to vector<2x8x1xf32>
    %38 = tpu.reciprocal %37 {approx = true} : vector<2x8x1xf32> -> vector<2x8x1xf32>
    %39 = vector.broadcast %38 : vector<2x8x1xf32> to vector<2x8x8xf32>
    %40 = arith.mulf %35, %39 : vector<2x8x8xf32>
    "tpu.trace_start"() <{level = 10 : i32, message = "bqk,bkd->bqd"}> : () -> ()
    %cst_13 = arith.constant dense<0.000000e+00> : vector<2x8x8xf32>
    %41 = tpu.matmul %40, %29, %cst_13 {dimension_numbers = #tpu.dot_dimension_numbers<[2], [1], [1], [2], [0, 0, 0, 1, 1, 2], [0], [0]>} : vector<2x8x8xf32>, vector<2x8x8xf32>, vector<2x8x8xf32> -> vector<2x8x8xf32>
    "tpu.trace_stop"() : () -> ()
    %42 = vector.shape_cast %41 : vector<2x8x8xf32> to vector<16x8xf32>
    %43 = vector.extract_strided_slice %24 {offsets = [0, 0, 8], sizes = [2, 8, 8], strides = [1, 1, 1]} : vector<2x8x96xf32> to vector<2x8x8xf32>
    %cst_14 = arith.constant 0.353553385 : f32
    %44 = vector.broadcast %cst_14 : f32 to vector<2x8x8xf32>
    %45 = arith.mulf %43, %44 : vector<2x8x8xf32>
    %46 = vector.extract_strided_slice %24 {offsets = [0, 0, 40], sizes = [2, 8, 8], strides = [1, 1, 1]} : vector<2x8x96xf32> to vector<2x8x8xf32>
    %47 = vector.extract_strided_slice %24 {offsets = [0, 0, 72], sizes = [2, 8, 8], strides = [1, 1, 1]} : vector<2x8x96xf32> to vector<2x8x8xf32>
    "tpu.trace_start"() <{level = 10 : i32, message = "bqd,bkd->bqk"}> : () -> ()
    %cst_15 = arith.constant dense<0.000000e+00> : vector<2x8x8xf32>
    %48 = tpu.matmul %45, %46, %cst_15 {dimension_numbers = #tpu.dot_dimension_numbers<[2], [2], [1], [1], [0, 0, 0, 1, 1, 1], [0], [0]>} : vector<2x8x8xf32>, vector<2x8x8xf32>, vector<2x8x8xf32> -> vector<2x8x8xf32>
    "tpu.trace_stop"() : () -> ()
    %cst_16 = arith.constant dense<0xFF800000> : vector<2x8xf32>
    %49 = vector.multi_reduction <maximumf>, %48, %cst_16 [2] : vector<2x8x8xf32> to vector<2x8xf32>
    %50 = vector.shape_cast %49 : vector<2x8xf32> to vector<2x8x1xf32>
    %51 = vector.broadcast %50 : vector<2x8x1xf32> to vector<2x8x8xf32>
    %52 = arith.subf %48, %51 : vector<2x8x8xf32>
    %53 = math.exp %52 : vector<2x8x8xf32>
    %cst_17 = arith.constant dense<0.000000e+00> : vector<2x8xf32>
    %54 = vector.multi_reduction <add>, %53, %cst_17 [2] : vector<2x8x8xf32> to vector<2x8xf32>
    %55 = vector.shape_cast %54 : vector<2x8xf32> to vector<2x8x1xf32>
    %56 = tpu.reciprocal %55 {approx = true} : vector<2x8x1xf32> -> vector<2x8x1xf32>
    %57 = vector.broadcast %56 : vector<2x8x1xf32> to vector<2x8x8xf32>
    %58 = arith.mulf %53, %57 : vector<2x8x8xf32>
    "tpu.trace_start"() <{level = 10 : i32, message = "bqk,bkd->bqd"}> : () -> ()
    %cst_18 = arith.constant dense<0.000000e+00> : vector<2x8x8xf32>
    %59 = tpu.matmul %58, %47, %cst_18 {dimension_numbers = #tpu.dot_dimension_numbers<[2], [1], [1], [2], [0, 0, 0, 1, 1, 2], [0], [0]>} : vector<2x8x8xf32>, vector<2x8x8xf32>, vector<2x8x8xf32> -> vector<2x8x8xf32>
    "tpu.trace_stop"() : () -> ()
    %60 = vector.shape_cast %59 : vector<2x8x8xf32> to vector<16x8xf32>
    %61 = vector.extract_strided_slice %24 {offsets = [0, 0, 16], sizes = [2, 8, 8], strides = [1, 1, 1]} : vector<2x8x96xf32> to vector<2x8x8xf32>
    %cst_19 = arith.constant 0.353553385 : f32
    %62 = vector.broadcast %cst_19 : f32 to vector<2x8x8xf32>
    %63 = arith.mulf %61, %62 : vector<2x8x8xf32>
    %64 = vector.extract_strided_slice %24 {offsets = [0, 0, 48], sizes = [2, 8, 8], strides = [1, 1, 1]} : vector<2x8x96xf32> to vector<2x8x8xf32>
    %65 = vector.extract_strided_slice %24 {offsets = [0, 0, 80], sizes = [2, 8, 8], strides = [1, 1, 1]} : vector<2x8x96xf32> to vector<2x8x8xf32>
    "tpu.trace_start"() <{level = 10 : i32, message = "bqd,bkd->bqk"}> : () -> ()
    %cst_20 = arith.constant dense<0.000000e+00> : vector<2x8x8xf32>
    %66 = tpu.matmul %63, %64, %cst_20 {dimension_numbers = #tpu.dot_dimension_numbers<[2], [2], [1], [1], [0, 0, 0, 1, 1, 1], [0], [0]>} : vector<2x8x8xf32>, vector<2x8x8xf32>, vector<2x8x8xf32> -> vector<2x8x8xf32>
    "tpu.trace_stop"() : () -> ()
    %cst_21 = arith.constant dense<0xFF800000> : vector<2x8xf32>
    %67 = vector.multi_reduction <maximumf>, %66, %cst_21 [2] : vector<2x8x8xf32> to vector<2x8xf32>
    %68 = vector.shape_cast %67 : vector<2x8xf32> to vector<2x8x1xf32>
    %69 = vector.broadcast %68 : vector<2x8x1xf32> to vector<2x8x8xf32>
    %70 = arith.subf %66, %69 : vector<2x8x8xf32>
    %71 = math.exp %70 : vector<2x8x8xf32>
    %cst_22 = arith.constant dense<0.000000e+00> : vector<2x8xf32>
    %72 = vector.multi_reduction <add>, %71, %cst_22 [2] : vector<2x8x8xf32> to vector<2x8xf32>
    %73 = vector.shape_cast %72 : vector<2x8xf32> to vector<2x8x1xf32>
    %74 = tpu.reciprocal %73 {approx = true} : vector<2x8x1xf32> -> vector<2x8x1xf32>
    %75 = vector.broadcast %74 : vector<2x8x1xf32> to vector<2x8x8xf32>
    %76 = arith.mulf %71, %75 : vector<2x8x8xf32>
    "tpu.trace_start"() <{level = 10 : i32, message = "bqk,bkd->bqd"}> : () -> ()
    %cst_23 = arith.constant dense<0.000000e+00> : vector<2x8x8xf32>
    %77 = tpu.matmul %76, %65, %cst_23 {dimension_numbers = #tpu.dot_dimension_numbers<[2], [1], [1], [2], [0, 0, 0, 1, 1, 2], [0], [0]>} : vector<2x8x8xf32>, vector<2x8x8xf32>, vector<2x8x8xf32> -> vector<2x8x8xf32>
    "tpu.trace_stop"() : () -> ()
    %78 = vector.shape_cast %77 : vector<2x8x8xf32> to vector<16x8xf32>
    %79 = vector.extract_strided_slice %24 {offsets = [0, 0, 24], sizes = [2, 8, 8], strides = [1, 1, 1]} : vector<2x8x96xf32> to vector<2x8x8xf32>
    %cst_24 = arith.constant 0.353553385 : f32
    %80 = vector.broadcast %cst_24 : f32 to vector<2x8x8xf32>
    %81 = arith.mulf %79, %80 : vector<2x8x8xf32>
    %82 = vector.extract_strided_slice %24 {offsets = [0, 0, 56], sizes = [2, 8, 8], strides = [1, 1, 1]} : vector<2x8x96xf32> to vector<2x8x8xf32>
    %83 = vector.extract_strided_slice %24 {offsets = [0, 0, 88], sizes = [2, 8, 8], strides = [1, 1, 1]} : vector<2x8x96xf32> to vector<2x8x8xf32>
    "tpu.trace_start"() <{level = 10 : i32, message = "bqd,bkd->bqk"}> : () -> ()
    %cst_25 = arith.constant dense<0.000000e+00> : vector<2x8x8xf32>
    %84 = tpu.matmul %81, %82, %cst_25 {dimension_numbers = #tpu.dot_dimension_numbers<[2], [2], [1], [1], [0, 0, 0, 1, 1, 1], [0], [0]>} : vector<2x8x8xf32>, vector<2x8x8xf32>, vector<2x8x8xf32> -> vector<2x8x8xf32>
    "tpu.trace_stop"() : () -> ()
    %cst_26 = arith.constant dense<0xFF800000> : vector<2x8xf32>
    %85 = vector.multi_reduction <maximumf>, %84, %cst_26 [2] : vector<2x8x8xf32> to vector<2x8xf32>
    %86 = vector.shape_cast %85 : vector<2x8xf32> to vector<2x8x1xf32>
    %87 = vector.broadcast %86 : vector<2x8x1xf32> to vector<2x8x8xf32>
    %88 = arith.subf %84, %87 : vector<2x8x8xf32>
    %89 = math.exp %88 : vector<2x8x8xf32>
    %cst_27 = arith.constant dense<0.000000e+00> : vector<2x8xf32>
    %90 = vector.multi_reduction <add>, %89, %cst_27 [2] : vector<2x8x8xf32> to vector<2x8xf32>
    %91 = vector.shape_cast %90 : vector<2x8xf32> to vector<2x8x1xf32>
    %92 = tpu.reciprocal %91 {approx = true} : vector<2x8x1xf32> -> vector<2x8x1xf32>
    %93 = vector.broadcast %92 : vector<2x8x1xf32> to vector<2x8x8xf32>
    %94 = arith.mulf %89, %93 : vector<2x8x8xf32>
    "tpu.trace_start"() <{level = 10 : i32, message = "bqk,bkd->bqd"}> : () -> ()
    %cst_28 = arith.constant dense<0.000000e+00> : vector<2x8x8xf32>
    %95 = tpu.matmul %94, %83, %cst_28 {dimension_numbers = #tpu.dot_dimension_numbers<[2], [1], [1], [2], [0, 0, 0, 1, 1, 2], [0], [0]>} : vector<2x8x8xf32>, vector<2x8x8xf32>, vector<2x8x8xf32> -> vector<2x8x8xf32>
    "tpu.trace_stop"() : () -> ()
    %96 = vector.shape_cast %95 : vector<2x8x8xf32> to vector<16x8xf32>
    %97 = tpu.concatenate %42, %60, %78, %96 in 1 : vector<16x8xf32>, vector<16x8xf32>, vector<16x8xf32>, vector<16x8xf32> -> vector<16x32xf32>
    %cst_29 = arith.constant dense<0.000000e+00> : vector<16x32xf32>
    %98 = tpu.matmul %97, %7, %cst_29 {dimension_numbers = #tpu.dot_dimension_numbers<[1], [0], [0], [1], [0, 0, 1, 1], [], []>} : vector<16x32xf32>, vector<32x32xf32>, vector<16x32xf32> -> vector<16x32xf32>
    %99 = vector.broadcast %12 : vector<1x32xf32> to vector<16x32xf32>
    %100 = arith.addf %98, %99 : vector<16x32xf32>
    %101 = arith.addf %0, %100 : vector<16x32xf32>
    %cst_30 = arith.constant dense<0.000000e+00> : vector<16xf32>
    %102 = vector.multi_reduction <add>, %101, %cst_30 [1] : vector<16x32xf32> to vector<16xf32>
    %103 = vector.shape_cast %102 : vector<16xf32> to vector<16x1xf32>
    %cst_31 = arith.constant 3.200000e+01 : f32
    %104 = vector.broadcast %cst_31 : f32 to vector<16x1xf32>
    %105 = arith.divf %103, %104 : vector<16x1xf32>
    %106 = vector.broadcast %105 : vector<16x1xf32> to vector<16x32xf32>
    %107 = arith.subf %101, %106 : vector<16x32xf32>
    %108 = arith.mulf %107, %107 : vector<16x32xf32>
    %cst_32 = arith.constant dense<0.000000e+00> : vector<16xf32>
    %109 = vector.multi_reduction <add>, %108, %cst_32 [1] : vector<16x32xf32> to vector<16xf32>
    %110 = vector.shape_cast %109 : vector<16xf32> to vector<16x1xf32>
    %cst_33 = arith.constant 3.200000e+01 : f32
    %111 = vector.broadcast %cst_33 : f32 to vector<16x1xf32>
    %112 = arith.divf %110, %111 : vector<16x1xf32>
    %113 = vector.broadcast %105 : vector<16x1xf32> to vector<16x32xf32>
    %114 = arith.subf %101, %113 : vector<16x32xf32>
    %cst_34 = arith.constant 9.99999974E-6 : f32
    %115 = vector.broadcast %cst_34 : f32 to vector<16x1xf32>
    %116 = arith.addf %112, %115 : vector<16x1xf32>
    %117 = math.rsqrt %116 : vector<16x1xf32>
    %118 = vector.broadcast %117 : vector<16x1xf32> to vector<16x32xf32>
    %119 = arith.mulf %114, %118 : vector<16x32xf32>
    %120 = vector.broadcast %13 : vector<1x32xf32> to vector<16x32xf32>
    %121 = arith.mulf %119, %120 : vector<16x32xf32>
    %122 = vector.broadcast %14 : vector<1x32xf32> to vector<16x32xf32>
    %123 = arith.addf %121, %122 : vector<16x32xf32>
    %cst_35 = arith.constant dense<0.000000e+00> : vector<16x64xf32>
    %124 = tpu.matmul %123, %8, %cst_35 {dimension_numbers = #tpu.dot_dimension_numbers<[1], [0], [0], [1], [0, 0, 1, 1], [], []>} : vector<16x32xf32>, vector<32x64xf32>, vector<16x64xf32> -> vector<16x64xf32>
    %125 = vector.broadcast %15 : vector<1x64xf32> to vector<16x64xf32>
    %126 = arith.addf %124, %125 : vector<16x64xf32>
    %cst_36 = arith.constant 0.000000e+00 : f32
    %127 = vector.broadcast %cst_36 : f32 to vector<16x64xf32>
    %128 = arith.maximumf %126, %127 : vector<16x64xf32>
    %cst_37 = arith.constant dense<0.000000e+00> : vector<16x32xf32>
    %129 = tpu.matmul %128, %9, %cst_37 {dimension_numbers = #tpu.dot_dimension_numbers<[1], [0], [0], [1], [0, 0, 1, 1], [], []>} : vector<16x64xf32>, vector<64x32xf32>, vector<16x32xf32> -> vector<16x32xf32>
    %130 = vector.broadcast %16 : vector<1x32xf32> to vector<16x32xf32>
    %131 = arith.addf %129, %130 : vector<16x32xf32>
    %132 = arith.addf %123, %131 : vector<16x32xf32>
    %cst_38 = arith.constant dense<0.000000e+00> : vector<16xf32>
    %133 = vector.multi_reduction <add>, %132, %cst_38 [1] : vector<16x32xf32> to vector<16xf32>
    %134 = vector.shape_cast %133 : vector<16xf32> to vector<16x1xf32>
    %cst_39 = arith.constant 3.200000e+01 : f32
    %135 = vector.broadcast %cst_39 : f32 to vector<16x1xf32>
    %136 = arith.divf %134, %135 : vector<16x1xf32>
    %137 = vector.broadcast %136 : vector<16x1xf32> to vector<16x32xf32>
    %138 = arith.subf %132, %137 : vector<16x32xf32>
    %139 = arith.mulf %138, %138 : vector<16x32xf32>
    %cst_40 = arith.constant dense<0.000000e+00> : vector<16xf32>
    %140 = vector.multi_reduction <add>, %139, %cst_40 [1] : vector<16x32xf32> to vector<16xf32>
    %141 = vector.shape_cast %140 : vector<16xf32> to vector<16x1xf32>
    %cst_41 = arith.constant 3.200000e+01 : f32
    %142 = vector.broadcast %cst_41 : f32 to vector<16x1xf32>
    %143 = arith.divf %141, %142 : vector<16x1xf32>
    %144 = vector.broadcast %136 : vector<16x1xf32> to vector<16x32xf32>
    %145 = arith.subf %132, %144 : vector<16x32xf32>
    %cst_42 = arith.constant 9.99999974E-6 : f32
    %146 = vector.broadcast %cst_42 : f32 to vector<16x1xf32>
    %147 = arith.addf %143, %146 : vector<16x1xf32>
    %148 = math.rsqrt %147 : vector<16x1xf32>
    %149 = vector.broadcast %148 : vector<16x1xf32> to vector<16x32xf32>
    %150 = arith.mulf %145, %149 : vector<16x32xf32>
    %151 = vector.broadcast %17 : vector<1x32xf32> to vector<16x32xf32>
    %152 = arith.mulf %150, %151 : vector<16x32xf32>
    %153 = vector.broadcast %18 : vector<1x32xf32> to vector<16x32xf32>
    %154 = arith.addf %152, %153 : vector<16x32xf32>
    %c200 = arith.constant 200 : index
    %c0_43 = arith.constant 0 : index
    %155 = vector.load %arg2[%c200, %c0_43] : memref<408x128xf32, #tpu.memory_space<vmem>>, vector<64x96xf32>
    %c264 = arith.constant 264 : index
    %c0_44 = arith.constant 0 : index
    %156 = vector.load %arg2[%c264, %c0_44] : memref<408x128xf32, #tpu.memory_space<vmem>>, vector<32x32xf32>
    %c296 = arith.constant 296 : index
    %c0_45 = arith.constant 0 : index
    %157 = vector.load %arg2[%c296, %c0_45] : memref<408x128xf32, #tpu.memory_space<vmem>>, vector<32x64xf32>
    %c328 = arith.constant 328 : index
    %c0_46 = arith.constant 0 : index
    %158 = vector.load %arg2[%c328, %c0_46] : memref<408x128xf32, #tpu.memory_space<vmem>>, vector<64x32xf32>
    %c392 = arith.constant 392 : index
    %c0_47 = arith.constant 0 : index
    %159 = vector.load %arg2[%c392, %c0_47] : memref<408x128xf32, #tpu.memory_space<vmem>>, vector<8x128xf32>
    %160 = vector.extract_strided_slice %159 {offsets = [0, 0], sizes = [1, 96], strides = [1, 1]} : vector<8x128xf32> to vector<1x96xf32>
    %161 = vector.extract_strided_slice %159 {offsets = [1, 0], sizes = [1, 32], strides = [1, 1]} : vector<8x128xf32> to vector<1x32xf32>
    %162 = vector.extract_strided_slice %159 {offsets = [2, 0], sizes = [1, 32], strides = [1, 1]} : vector<8x128xf32> to vector<1x32xf32>
    %163 = vector.extract_strided_slice %159 {offsets = [3, 0], sizes = [1, 32], strides = [1, 1]} : vector<8x128xf32> to vector<1x32xf32>
    %164 = vector.extract_strided_slice %159 {offsets = [4, 0], sizes = [1, 64], strides = [1, 1]} : vector<8x128xf32> to vector<1x64xf32>
    %165 = vector.extract_strided_slice %159 {offsets = [5, 0], sizes = [1, 32], strides = [1, 1]} : vector<8x128xf32> to vector<1x32xf32>
    %166 = vector.extract_strided_slice %159 {offsets = [6, 0], sizes = [1, 32], strides = [1, 1]} : vector<8x128xf32> to vector<1x32xf32>
    %167 = vector.extract_strided_slice %159 {offsets = [7, 0], sizes = [1, 32], strides = [1, 1]} : vector<8x128xf32> to vector<1x32xf32>
    %168 = arith.addf %154, %5 : vector<16x32xf32>
    %169 = tpu.concatenate %168, %154 in 1 : vector<16x32xf32>, vector<16x32xf32> -> vector<16x64xf32>
    %cst_48 = arith.constant dense<0.000000e+00> : vector<16x96xf32>
    %170 = tpu.matmul %169, %155, %cst_48 {dimension_numbers = #tpu.dot_dimension_numbers<[1], [0], [0], [1], [0, 0, 1, 1], [], []>} : vector<16x64xf32>, vector<64x96xf32>, vector<16x96xf32> -> vector<16x96xf32>
    %171 = vector.broadcast %160 : vector<1x96xf32> to vector<16x96xf32>
    %172 = arith.addf %170, %171 : vector<16x96xf32>
    %173 = vector.shape_cast %172 : vector<16x96xf32> to vector<2x8x96xf32>
    %174 = vector.extract_strided_slice %173 {offsets = [0, 0, 0], sizes = [2, 8, 8], strides = [1, 1, 1]} : vector<2x8x96xf32> to vector<2x8x8xf32>
    %cst_49 = arith.constant 0.353553385 : f32
    %175 = vector.broadcast %cst_49 : f32 to vector<2x8x8xf32>
    %176 = arith.mulf %174, %175 : vector<2x8x8xf32>
    %177 = vector.extract_strided_slice %173 {offsets = [0, 0, 32], sizes = [2, 8, 8], strides = [1, 1, 1]} : vector<2x8x96xf32> to vector<2x8x8xf32>
    %178 = vector.extract_strided_slice %173 {offsets = [0, 0, 64], sizes = [2, 8, 8], strides = [1, 1, 1]} : vector<2x8x96xf32> to vector<2x8x8xf32>
    "tpu.trace_start"() <{level = 10 : i32, message = "bqd,bkd->bqk"}> : () -> ()
    %cst_50 = arith.constant dense<0.000000e+00> : vector<2x8x8xf32>
    %179 = tpu.matmul %176, %177, %cst_50 {dimension_numbers = #tpu.dot_dimension_numbers<[2], [2], [1], [1], [0, 0, 0, 1, 1, 1], [0], [0]>} : vector<2x8x8xf32>, vector<2x8x8xf32>, vector<2x8x8xf32> -> vector<2x8x8xf32>
    "tpu.trace_stop"() : () -> ()
    %cst_51 = arith.constant dense<0xFF800000> : vector<2x8xf32>
    %180 = vector.multi_reduction <maximumf>, %179, %cst_51 [2] : vector<2x8x8xf32> to vector<2x8xf32>
    %181 = vector.shape_cast %180 : vector<2x8xf32> to vector<2x8x1xf32>
    %182 = vector.broadcast %181 : vector<2x8x1xf32> to vector<2x8x8xf32>
    %183 = arith.subf %179, %182 : vector<2x8x8xf32>
    %184 = math.exp %183 : vector<2x8x8xf32>
    %cst_52 = arith.constant dense<0.000000e+00> : vector<2x8xf32>
    %185 = vector.multi_reduction <add>, %184, %cst_52 [2] : vector<2x8x8xf32> to vector<2x8xf32>
    %186 = vector.shape_cast %185 : vector<2x8xf32> to vector<2x8x1xf32>
    %187 = tpu.reciprocal %186 {approx = true} : vector<2x8x1xf32> -> vector<2x8x1xf32>
    %188 = vector.broadcast %187 : vector<2x8x1xf32> to vector<2x8x8xf32>
    %189 = arith.mulf %184, %188 : vector<2x8x8xf32>
    "tpu.trace_start"() <{level = 10 : i32, message = "bqk,bkd->bqd"}> : () -> ()
    %cst_53 = arith.constant dense<0.000000e+00> : vector<2x8x8xf32>
    %190 = tpu.matmul %189, %178, %cst_53 {dimension_numbers = #tpu.dot_dimension_numbers<[2], [1], [1], [2], [0, 0, 0, 1, 1, 2], [0], [0]>} : vector<2x8x8xf32>, vector<2x8x8xf32>, vector<2x8x8xf32> -> vector<2x8x8xf32>
    "tpu.trace_stop"() : () -> ()
    %191 = vector.shape_cast %190 : vector<2x8x8xf32> to vector<16x8xf32>
    %192 = vector.extract_strided_slice %173 {offsets = [0, 0, 8], sizes = [2, 8, 8], strides = [1, 1, 1]} : vector<2x8x96xf32> to vector<2x8x8xf32>
    %cst_54 = arith.constant 0.353553385 : f32
    %193 = vector.broadcast %cst_54 : f32 to vector<2x8x8xf32>
    %194 = arith.mulf %192, %193 : vector<2x8x8xf32>
    %195 = vector.extract_strided_slice %173 {offsets = [0, 0, 40], sizes = [2, 8, 8], strides = [1, 1, 1]} : vector<2x8x96xf32> to vector<2x8x8xf32>
    %196 = vector.extract_strided_slice %173 {offsets = [0, 0, 72], sizes = [2, 8, 8], strides = [1, 1, 1]} : vector<2x8x96xf32> to vector<2x8x8xf32>
    "tpu.trace_start"() <{level = 10 : i32, message = "bqd,bkd->bqk"}> : () -> ()
    %cst_55 = arith.constant dense<0.000000e+00> : vector<2x8x8xf32>
    %197 = tpu.matmul %194, %195, %cst_55 {dimension_numbers = #tpu.dot_dimension_numbers<[2], [2], [1], [1], [0, 0, 0, 1, 1, 1], [0], [0]>} : vector<2x8x8xf32>, vector<2x8x8xf32>, vector<2x8x8xf32> -> vector<2x8x8xf32>
    "tpu.trace_stop"() : () -> ()
    %cst_56 = arith.constant dense<0xFF800000> : vector<2x8xf32>
    %198 = vector.multi_reduction <maximumf>, %197, %cst_56 [2] : vector<2x8x8xf32> to vector<2x8xf32>
    %199 = vector.shape_cast %198 : vector<2x8xf32> to vector<2x8x1xf32>
    %200 = vector.broadcast %199 : vector<2x8x1xf32> to vector<2x8x8xf32>
    %201 = arith.subf %197, %200 : vector<2x8x8xf32>
    %202 = math.exp %201 : vector<2x8x8xf32>
    %cst_57 = arith.constant dense<0.000000e+00> : vector<2x8xf32>
    %203 = vector.multi_reduction <add>, %202, %cst_57 [2] : vector<2x8x8xf32> to vector<2x8xf32>
    %204 = vector.shape_cast %203 : vector<2x8xf32> to vector<2x8x1xf32>
    %205 = tpu.reciprocal %204 {approx = true} : vector<2x8x1xf32> -> vector<2x8x1xf32>
    %206 = vector.broadcast %205 : vector<2x8x1xf32> to vector<2x8x8xf32>
    %207 = arith.mulf %202, %206 : vector<2x8x8xf32>
    "tpu.trace_start"() <{level = 10 : i32, message = "bqk,bkd->bqd"}> : () -> ()
    %cst_58 = arith.constant dense<0.000000e+00> : vector<2x8x8xf32>
    %208 = tpu.matmul %207, %196, %cst_58 {dimension_numbers = #tpu.dot_dimension_numbers<[2], [1], [1], [2], [0, 0, 0, 1, 1, 2], [0], [0]>} : vector<2x8x8xf32>, vector<2x8x8xf32>, vector<2x8x8xf32> -> vector<2x8x8xf32>
    "tpu.trace_stop"() : () -> ()
    %209 = vector.shape_cast %208 : vector<2x8x8xf32> to vector<16x8xf32>
    %210 = vector.extract_strided_slice %173 {offsets = [0, 0, 16], sizes = [2, 8, 8], strides = [1, 1, 1]} : vector<2x8x96xf32> to vector<2x8x8xf32>
    %cst_59 = arith.constant 0.353553385 : f32
    %211 = vector.broadcast %cst_59 : f32 to vector<2x8x8xf32>
    %212 = arith.mulf %210, %211 : vector<2x8x8xf32>
    %213 = vector.extract_strided_slice %173 {offsets = [0, 0, 48], sizes = [2, 8, 8], strides = [1, 1, 1]} : vector<2x8x96xf32> to vector<2x8x8xf32>
    %214 = vector.extract_strided_slice %173 {offsets = [0, 0, 80], sizes = [2, 8, 8], strides = [1, 1, 1]} : vector<2x8x96xf32> to vector<2x8x8xf32>
    "tpu.trace_start"() <{level = 10 : i32, message = "bqd,bkd->bqk"}> : () -> ()
    %cst_60 = arith.constant dense<0.000000e+00> : vector<2x8x8xf32>
    %215 = tpu.matmul %212, %213, %cst_60 {dimension_numbers = #tpu.dot_dimension_numbers<[2], [2], [1], [1], [0, 0, 0, 1, 1, 1], [0], [0]>} : vector<2x8x8xf32>, vector<2x8x8xf32>, vector<2x8x8xf32> -> vector<2x8x8xf32>
    "tpu.trace_stop"() : () -> ()
    %cst_61 = arith.constant dense<0xFF800000> : vector<2x8xf32>
    %216 = vector.multi_reduction <maximumf>, %215, %cst_61 [2] : vector<2x8x8xf32> to vector<2x8xf32>
    %217 = vector.shape_cast %216 : vector<2x8xf32> to vector<2x8x1xf32>
    %218 = vector.broadcast %217 : vector<2x8x1xf32> to vector<2x8x8xf32>
    %219 = arith.subf %215, %218 : vector<2x8x8xf32>
    %220 = math.exp %219 : vector<2x8x8xf32>
    %cst_62 = arith.constant dense<0.000000e+00> : vector<2x8xf32>
    %221 = vector.multi_reduction <add>, %220, %cst_62 [2] : vector<2x8x8xf32> to vector<2x8xf32>
    %222 = vector.shape_cast %221 : vector<2x8xf32> to vector<2x8x1xf32>
    %223 = tpu.reciprocal %222 {approx = true} : vector<2x8x1xf32> -> vector<2x8x1xf32>
    %224 = vector.broadcast %223 : vector<2x8x1xf32> to vector<2x8x8xf32>
    %225 = arith.mulf %220, %224 : vector<2x8x8xf32>
    "tpu.trace_start"() <{level = 10 : i32, message = "bqk,bkd->bqd"}> : () -> ()
    %cst_63 = arith.constant dense<0.000000e+00> : vector<2x8x8xf32>
    %226 = tpu.matmul %225, %214, %cst_63 {dimension_numbers = #tpu.dot_dimension_numbers<[2], [1], [1], [2], [0, 0, 0, 1, 1, 2], [0], [0]>} : vector<2x8x8xf32>, vector<2x8x8xf32>, vector<2x8x8xf32> -> vector<2x8x8xf32>
    "tpu.trace_stop"() : () -> ()
    %227 = vector.shape_cast %226 : vector<2x8x8xf32> to vector<16x8xf32>
    %228 = vector.extract_strided_slice %173 {offsets = [0, 0, 24], sizes = [2, 8, 8], strides = [1, 1, 1]} : vector<2x8x96xf32> to vector<2x8x8xf32>
    %cst_64 = arith.constant 0.353553385 : f32
    %229 = vector.broadcast %cst_64 : f32 to vector<2x8x8xf32>
    %230 = arith.mulf %228, %229 : vector<2x8x8xf32>
    %231 = vector.extract_strided_slice %173 {offsets = [0, 0, 56], sizes = [2, 8, 8], strides = [1, 1, 1]} : vector<2x8x96xf32> to vector<2x8x8xf32>
    %232 = vector.extract_strided_slice %173 {offsets = [0, 0, 88], sizes = [2, 8, 8], strides = [1, 1, 1]} : vector<2x8x96xf32> to vector<2x8x8xf32>
    "tpu.trace_start"() <{level = 10 : i32, message = "bqd,bkd->bqk"}> : () -> ()
    %cst_65 = arith.constant dense<0.000000e+00> : vector<2x8x8xf32>
    %233 = tpu.matmul %230, %231, %cst_65 {dimension_numbers = #tpu.dot_dimension_numbers<[2], [2], [1], [1], [0, 0, 0, 1, 1, 1], [0], [0]>} : vector<2x8x8xf32>, vector<2x8x8xf32>, vector<2x8x8xf32> -> vector<2x8x8xf32>
    "tpu.trace_stop"() : () -> ()
    %cst_66 = arith.constant dense<0xFF800000> : vector<2x8xf32>
    %234 = vector.multi_reduction <maximumf>, %233, %cst_66 [2] : vector<2x8x8xf32> to vector<2x8xf32>
    %235 = vector.shape_cast %234 : vector<2x8xf32> to vector<2x8x1xf32>
    %236 = vector.broadcast %235 : vector<2x8x1xf32> to vector<2x8x8xf32>
    %237 = arith.subf %233, %236 : vector<2x8x8xf32>
    %238 = math.exp %237 : vector<2x8x8xf32>
    %cst_67 = arith.constant dense<0.000000e+00> : vector<2x8xf32>
    %239 = vector.multi_reduction <add>, %238, %cst_67 [2] : vector<2x8x8xf32> to vector<2x8xf32>
    %240 = vector.shape_cast %239 : vector<2x8xf32> to vector<2x8x1xf32>
    %241 = tpu.reciprocal %240 {approx = true} : vector<2x8x1xf32> -> vector<2x8x1xf32>
    %242 = vector.broadcast %241 : vector<2x8x1xf32> to vector<2x8x8xf32>
    %243 = arith.mulf %238, %242 : vector<2x8x8xf32>
    "tpu.trace_start"() <{level = 10 : i32, message = "bqk,bkd->bqd"}> : () -> ()
    %cst_68 = arith.constant dense<0.000000e+00> : vector<2x8x8xf32>
    %244 = tpu.matmul %243, %232, %cst_68 {dimension_numbers = #tpu.dot_dimension_numbers<[2], [1], [1], [2], [0, 0, 0, 1, 1, 2], [0], [0]>} : vector<2x8x8xf32>, vector<2x8x8xf32>, vector<2x8x8xf32> -> vector<2x8x8xf32>
    "tpu.trace_stop"() : () -> ()
    %245 = vector.shape_cast %244 : vector<2x8x8xf32> to vector<16x8xf32>
    %246 = tpu.concatenate %191, %209, %227, %245 in 1 : vector<16x8xf32>, vector<16x8xf32>, vector<16x8xf32>, vector<16x8xf32> -> vector<16x32xf32>
    %cst_69 = arith.constant dense<0.000000e+00> : vector<16x32xf32>
    %247 = tpu.matmul %246, %156, %cst_69 {dimension_numbers = #tpu.dot_dimension_numbers<[1], [0], [0], [1], [0, 0, 1, 1], [], []>} : vector<16x32xf32>, vector<32x32xf32>, vector<16x32xf32> -> vector<16x32xf32>
    %248 = vector.broadcast %161 : vector<1x32xf32> to vector<16x32xf32>
    %249 = arith.addf %247, %248 : vector<16x32xf32>
    %250 = arith.addf %154, %249 : vector<16x32xf32>
    %cst_70 = arith.constant dense<0.000000e+00> : vector<16xf32>
    %251 = vector.multi_reduction <add>, %250, %cst_70 [1] : vector<16x32xf32> to vector<16xf32>
    %252 = vector.shape_cast %251 : vector<16xf32> to vector<16x1xf32>
    %cst_71 = arith.constant 3.200000e+01 : f32
    %253 = vector.broadcast %cst_71 : f32 to vector<16x1xf32>
    %254 = arith.divf %252, %253 : vector<16x1xf32>
    %255 = vector.broadcast %254 : vector<16x1xf32> to vector<16x32xf32>
    %256 = arith.subf %250, %255 : vector<16x32xf32>
    %257 = arith.mulf %256, %256 : vector<16x32xf32>
    %cst_72 = arith.constant dense<0.000000e+00> : vector<16xf32>
    %258 = vector.multi_reduction <add>, %257, %cst_72 [1] : vector<16x32xf32> to vector<16xf32>
    %259 = vector.shape_cast %258 : vector<16xf32> to vector<16x1xf32>
    %cst_73 = arith.constant 3.200000e+01 : f32
    %260 = vector.broadcast %cst_73 : f32 to vector<16x1xf32>
    %261 = arith.divf %259, %260 : vector<16x1xf32>
    %262 = vector.broadcast %254 : vector<16x1xf32> to vector<16x32xf32>
    %263 = arith.subf %250, %262 : vector<16x32xf32>
    %cst_74 = arith.constant 9.99999974E-6 : f32
    %264 = vector.broadcast %cst_74 : f32 to vector<16x1xf32>
    %265 = arith.addf %261, %264 : vector<16x1xf32>
    %266 = math.rsqrt %265 : vector<16x1xf32>
    %267 = vector.broadcast %266 : vector<16x1xf32> to vector<16x32xf32>
    %268 = arith.mulf %263, %267 : vector<16x32xf32>
    %269 = vector.broadcast %162 : vector<1x32xf32> to vector<16x32xf32>
    %270 = arith.mulf %268, %269 : vector<16x32xf32>
    %271 = vector.broadcast %163 : vector<1x32xf32> to vector<16x32xf32>
    %272 = arith.addf %270, %271 : vector<16x32xf32>
    %cst_75 = arith.constant dense<0.000000e+00> : vector<16x64xf32>
    %273 = tpu.matmul %272, %157, %cst_75 {dimension_numbers = #tpu.dot_dimension_numbers<[1], [0], [0], [1], [0, 0, 1, 1], [], []>} : vector<16x32xf32>, vector<32x64xf32>, vector<16x64xf32> -> vector<16x64xf32>
    %274 = vector.broadcast %164 : vector<1x64xf32> to vector<16x64xf32>
    %275 = arith.addf %273, %274 : vector<16x64xf32>
    %cst_76 = arith.constant 0.000000e+00 : f32
    %276 = vector.broadcast %cst_76 : f32 to vector<16x64xf32>
    %277 = arith.maximumf %275, %276 : vector<16x64xf32>
    %cst_77 = arith.constant dense<0.000000e+00> : vector<16x32xf32>
    %278 = tpu.matmul %277, %158, %cst_77 {dimension_numbers = #tpu.dot_dimension_numbers<[1], [0], [0], [1], [0, 0, 1, 1], [], []>} : vector<16x64xf32>, vector<64x32xf32>, vector<16x32xf32> -> vector<16x32xf32>
    %279 = vector.broadcast %165 : vector<1x32xf32> to vector<16x32xf32>
    %280 = arith.addf %278, %279 : vector<16x32xf32>
    %281 = arith.addf %272, %280 : vector<16x32xf32>
    %cst_78 = arith.constant dense<0.000000e+00> : vector<16xf32>
    %282 = vector.multi_reduction <add>, %281, %cst_78 [1] : vector<16x32xf32> to vector<16xf32>
    %283 = vector.shape_cast %282 : vector<16xf32> to vector<16x1xf32>
    %cst_79 = arith.constant 3.200000e+01 : f32
    %284 = vector.broadcast %cst_79 : f32 to vector<16x1xf32>
    %285 = arith.divf %283, %284 : vector<16x1xf32>
    %286 = vector.broadcast %285 : vector<16x1xf32> to vector<16x32xf32>
    %287 = arith.subf %281, %286 : vector<16x32xf32>
    %288 = arith.mulf %287, %287 : vector<16x32xf32>
    %cst_80 = arith.constant dense<0.000000e+00> : vector<16xf32>
    %289 = vector.multi_reduction <add>, %288, %cst_80 [1] : vector<16x32xf32> to vector<16xf32>
    %290 = vector.shape_cast %289 : vector<16xf32> to vector<16x1xf32>
    %cst_81 = arith.constant 3.200000e+01 : f32
    %291 = vector.broadcast %cst_81 : f32 to vector<16x1xf32>
    %292 = arith.divf %290, %291 : vector<16x1xf32>
    %293 = vector.broadcast %285 : vector<16x1xf32> to vector<16x32xf32>
    %294 = arith.subf %281, %293 : vector<16x32xf32>
    %cst_82 = arith.constant 9.99999974E-6 : f32
    %295 = vector.broadcast %cst_82 : f32 to vector<16x1xf32>
    %296 = arith.addf %292, %295 : vector<16x1xf32>
    %297 = math.rsqrt %296 : vector<16x1xf32>
    %298 = vector.broadcast %297 : vector<16x1xf32> to vector<16x32xf32>
    %299 = arith.mulf %294, %298 : vector<16x32xf32>
    %300 = vector.broadcast %166 : vector<1x32xf32> to vector<16x32xf32>
    %301 = arith.mulf %299, %300 : vector<16x32xf32>
    %302 = vector.broadcast %167 : vector<1x32xf32> to vector<16x32xf32>
    %303 = arith.addf %301, %302 : vector<16x32xf32>
    %c400 = arith.constant 400 : index
    %c0_83 = arith.constant 0 : index
    %304 = vector.load %arg2[%c400, %c0_83] : memref<408x128xf32, #tpu.memory_space<vmem>>, vector<1x32xf32>
    %c401 = arith.constant 401 : index
    %c0_84 = arith.constant 0 : index
    %305 = vector.load %arg2[%c401, %c0_84] : memref<408x128xf32, #tpu.memory_space<vmem>>, vector<1x32xf32>
    %cst_85 = arith.constant dense<0.000000e+00> : vector<16xf32>
    %306 = vector.multi_reduction <add>, %303, %cst_85 [1] : vector<16x32xf32> to vector<16xf32>
    %307 = vector.shape_cast %306 : vector<16xf32> to vector<16x1xf32>
    %cst_86 = arith.constant 3.200000e+01 : f32
    %308 = vector.broadcast %cst_86 : f32 to vector<16x1xf32>
    %309 = arith.divf %307, %308 : vector<16x1xf32>
    %310 = vector.broadcast %309 : vector<16x1xf32> to vector<16x32xf32>
    %311 = arith.subf %303, %310 : vector<16x32xf32>
    %312 = arith.mulf %311, %311 : vector<16x32xf32>
    %cst_87 = arith.constant dense<0.000000e+00> : vector<16xf32>
    %313 = vector.multi_reduction <add>, %312, %cst_87 [1] : vector<16x32xf32> to vector<16xf32>
    %314 = vector.shape_cast %313 : vector<16xf32> to vector<16x1xf32>
    %cst_88 = arith.constant 3.200000e+01 : f32
    %315 = vector.broadcast %cst_88 : f32 to vector<16x1xf32>
    %316 = arith.divf %314, %315 : vector<16x1xf32>
    %317 = vector.broadcast %309 : vector<16x1xf32> to vector<16x32xf32>
    %318 = arith.subf %303, %317 : vector<16x32xf32>
    %cst_89 = arith.constant 9.99999974E-6 : f32
    %319 = vector.broadcast %cst_89 : f32 to vector<16x1xf32>
    %320 = arith.addf %316, %319 : vector<16x1xf32>
    %321 = math.rsqrt %320 : vector<16x1xf32>
    %322 = vector.broadcast %321 : vector<16x1xf32> to vector<16x32xf32>
    %323 = arith.mulf %318, %322 : vector<16x32xf32>
    %324 = vector.broadcast %304 : vector<1x32xf32> to vector<16x32xf32>
    %325 = arith.mulf %323, %324 : vector<16x32xf32>
    %326 = vector.broadcast %305 : vector<1x32xf32> to vector<16x32xf32>
    %327 = arith.addf %325, %326 : vector<16x32xf32>
    %328 = vector.shape_cast %327 : vector<16x32xf32> to vector<4x4x32xf32>
    %329 = vector.extract_strided_slice %328 {offsets = [0, 0, 0], sizes = [4, 1, 32], strides = [1, 1, 1]} : vector<4x4x32xf32> to vector<4x1x32xf32>
    %330 = vector.shape_cast %329 : vector<4x1x32xf32> to vector<4x32xf32>
    %331 = vector.extract_strided_slice %328 {offsets = [0, 1, 0], sizes = [4, 1, 32], strides = [1, 1, 1]} : vector<4x4x32xf32> to vector<4x1x32xf32>
    %332 = vector.shape_cast %331 : vector<4x1x32xf32> to vector<4x32xf32>
    %333 = vector.extract_strided_slice %328 {offsets = [0, 2, 0], sizes = [4, 1, 32], strides = [1, 1, 1]} : vector<4x4x32xf32> to vector<4x1x32xf32>
    %334 = vector.shape_cast %333 : vector<4x1x32xf32> to vector<4x32xf32>
    %335 = vector.extract_strided_slice %328 {offsets = [0, 3, 0], sizes = [4, 1, 32], strides = [1, 1, 1]} : vector<4x4x32xf32> to vector<4x1x32xf32>
    %336 = vector.shape_cast %335 : vector<4x1x32xf32> to vector<4x32xf32>
    %337 = tpu.concatenate %330, %332, %334, %336 in 1 : vector<4x32xf32>, vector<4x32xf32>, vector<4x32xf32>, vector<4x32xf32> -> vector<4x128xf32>
    %c0_90 = arith.constant 0 : index
    %c0_91 = arith.constant 0 : index
    %338 = vector.load %arg3[%c0_90, %c0_91] : memref<4x128xf32, #tpu.memory_space<vmem>>, vector<4x128xf32>
    tpu.vector_store %arg3[%c0_90, %c0_91], %337 {strides = array<i32>} : memref<4x128xf32, #tpu.memory_space<vmem>>, vector<4x128xf32>,
    return
  }
}

</mosaic_0001>

<llo_original>
// kernel: _lambda_.1
$region0: #{_lambda_.1}
  #allocation0 [shape = 'u32[]', space=smem, size = 0x4, offset = 0x4, fixed_abs, tag = 'smem constant byte address 0x4 - core index']
  #allocation1 [shape = 'u32[144,128]{1,0:T(1,128)}', space=vmem, size = 0x12000, scoped, tag = 'internal scratch']
  %s0 = inlined_call_operand.vmem [shape: f32[16,32], index: 0, kind: input, shape index: {}]
  %s1 = inlined_call_operand.vmem [shape: f32[8,32], index: 1, kind: input, shape index: {}]
  %s2 = inlined_call_operand.hbm [shape: f32[408,128], index: 2, kind: input, shape index: {}]
  %s3 = inlined_call_operand.vmem [shape: f32[4,128], index: 3, kind: output, shape index: {}]
  %s4 = sld [smem:[#allocation0]]
  $region26: #{_lambda_.1} parent=0
    _
  %s6 = ssub.s32 1, %s4
  %s7 = scalar_select 0, %s6, %s4
  $region1: #{_lambda_.1} parent=0
    #allocation2 [shape = 'u8[208896]{0}', space=vmem, size = 0x33000, scoped, tag = 'input window, operand 2, single buffered']
    #allocation3 [shape = 's32[1]{0}', space=sflag, size = 0x4, scoped, tag = 'scoped memory for _lambda_.1']
    %8 = vsyncpa [#allocation3], 0
    // Predicated region
    $region2: #{_lambda_.1} parent=1 // pred_check
      _
    $region3: #{_lambda_.1} parent=1 // pred_check_branch
      %10 = sbr.rel (0) target = $region5
    $region4: #{_lambda_.1} parent=1 // pred_region
      _
    $region5: #{_lambda_.1} parent=1 // pred_fallthru
      _
    // Predicated region
    $region6: #{_lambda_.1} parent=1 // pred_check
      _
    $region7: #{_lambda_.1} parent=1 // pred_check_branch
      %12 = sbr.rel (0) target = $region9
    $region8: #{_lambda_.1} parent=1 // pred_region
      _
    $region9: #{_lambda_.1} parent=1 // pred_fallthru
      _
    // Predicated region
    $region10: #{_lambda_.1} parent=1 // pred_check
      _
    $region11: #{_lambda_.1} parent=1 // pred_check_branch
      %14 = sbr.rel (0) target = $region13
    $region12: #{_lambda_.1} parent=1 // pred_region
      %s16 = ssub.s32 6528, 6528
      %17 = vsyncadd [#allocation3], %s16
      %s18 = sshll.u32 [#allocation2], 4
      %s19 = int_to_ptr.vmem [resolvable:$true] %s18
      %24 = dma.hbm_to_vmem [thread:$0]  %s2, 6528, %s19, [#allocation3], 128, 128, 8
    $region13: #{_lambda_.1} parent=1 // pred_fallthru
      _
    // Predicated region
    $region14: #{_lambda_.1} parent=1 // pred_check
      _
    $region15: #{_lambda_.1} parent=1 // pred_check_branch
      %26 = sbr.rel (0) target = $region17
    $region16: #{_lambda_.1} parent=1 // pred_region
      %27 = dma.done [#allocation3], 6528
    $region17: #{_lambda_.1} parent=1 // pred_fallthru
      _
    %v28 = vld [vmem:[%s0] sm:$0xff]
    %v29 = vld [vmem:[%s0 + $0x8] sm:$0xff]
    %v30 = vld [vmem:[%s1] sm:$0xff]
    %v31 = vld [vmem:[#allocation2] sm:$0xff]
    %v32 = vld [vmem:[#allocation2 + $0x8] sm:$0xff]
    %v33 = vld [vmem:[#allocation2 + $0x10] sm:$0xff]
    %v34 = vld [vmem:[#allocation2 + $0x18] sm:$0xff]
    %v35 = vld [vmem:[#allocation2 + $0x20] sm:$0xff]
    %v36 = vld [vmem:[#allocation2 + $0x28] sm:$0xff]
    %v37 = vld [vmem:[#allocation2 + $0x30] sm:$0xff]
    %v38 = vld [vmem:[#allocation2 + $0x38] sm:$0xff]
    %v39 = vld [vmem:[#allocation2 + $0x40] sm:$0xff]
    %v40 = vld [vmem:[#allocation2 + $0x48] sm:$0xff]
    %v41 = vld [vmem:[#allocation2 + $0x50] sm:$0xff]
    %v42 = vld [vmem:[#allocation2 + $0x58] sm:$0xff]
    %v43 = vld [vmem:[#allocation2 + $0x60] sm:$0xff]
    %v44 = vld [vmem:[#allocation2 + $0x68] sm:$0xff]
    %v45 = vld [vmem:[#allocation2 + $0x70] sm:$0xff]
    %v46 = vld [vmem:[#allocation2 + $0x78] sm:$0xff]
    %v47 = vld [vmem:[#allocation2 + $0x80] sm:$0xff]
    %v48 = vld [vmem:[#allocation2 + $0x88] sm:$0xff]
    %v49 = vld [vmem:[#allocation2 + $0x90] sm:$0xff]
    %v50 = vld [vmem:[#allocation2 + $0x98] sm:$0xff]
    %v51 = vld [vmem:[#allocation2 + $0xa0] sm:$0xff]
    %v52 = vld [vmem:[#allocation2 + $0xa8] sm:$0xff]
    %v53 = vld [vmem:[#allocation2 + $0xb0] sm:$0xff]
    %v54 = vld [vmem:[#allocation2 + $0xb8] sm:$0xff]
    %v55 = vld [vmem:[#allocation2 + $0xc0] sm:$0xff]
    %v56 = vadd.f32 %v28, %v30
    %v57 = vadd.f32 %v29, %v30
    %60 = vrot.lane.b32.xlu0 %v28, 32
    %v61 = vpop.permute.xlu0 %60
    %62 = vrot.lane.b32.xlu0 %v29, 32
    %v63 = vpop.permute.xlu0 %62
    %vm66 = vcmask 261120
    %v67 = vsel %vm66, %v56, %v61
    %v68 = vsel %vm66, %v57, %v63
    %v69 = vlaneseq
    %v70 = vshrl.u32 %v69, 7
    %v71 = vsub.s32 0, %v70
    %v72 = vrot.slane %v55, %v71
    %vm73 = vcmask 523264
    %v75 = vsel %vm73, %v67, 0
    %v78 = vsel %vm73, %v68, 0
    %80 = vmatprep.subr.mxu0 0.0
    %81 = vmatpush1.msra.mxu0 0.0
    %82 = vmatprep.subr.mxu0 0.0
    %83 = vmatpush1.msra.mxu0 0.0
    %84 = vmatprep.subr.mxu0 0.0
    %85 = vmatpush1.msra.mxu0 0.0
    %86 = vmatprep.subr.mxu0 0.0
    %87 = vmatpush1.msra.mxu0 0.0
    %88 = vmatprep.subr.mxu0 0.0
    %89 = vmatpush1.msra.mxu0 0.0
    %90 = vmatprep.subr.mxu0 0.0
    %91 = vmatpush1.msra.mxu0 0.0
    %92 = vmatprep.subr.mxu0 0.0
    %93 = vmatpush1.msra.mxu0 0.0
    %94 = vmatprep.subr.mxu0 0.0
    %95 = vmatpush1.msra.mxu0 0.0
    %96 = vmatprep.subr.mxu0 0.0
    %97 = vmatpush1.msra.mxu0 %v38
    %98 = vmatprep.subr.mxu0 0.0
    %99 = vmatpush1.msra.mxu0 %v37
    %100 = vmatprep.subr.mxu0 0.0
    %101 = vmatpush1.msra.mxu0 %v36
    %102 = vmatprep.subr.mxu0 0.0
    %103 = vmatpush1.msra.mxu0 %v35
    %104 = vmatprep.subr.mxu0 0.0
    %105 = vmatpush1.msra.mxu0 %v34
    %106 = vmatprep.subr.mxu0 0.0
    %107 = vmatpush1.msra.mxu0 %v33
    %108 = vmatprep.subr.mxu0 0.0
    %109 = vmatpush1.msra.mxu0 %v32
    %110 = vmatprep.subr.mxu0 0.0
    %111 = vmatpush1.msra.mxu0 %v31
    %112 = vmatprep.subr.mxu0 0.0
    %113 = vmatpush2.msra.mxu0 0.0
    %114 = vmatprep.subr.mxu0 0.0
    %115 = vmatpush2.msra.mxu0 0.0
    %116 = vmatprep.subr.mxu0 0.0
    %117 = vmatpush2.msra.mxu0 0.0
    %118 = vmatprep.subr.mxu0 0.0
    %119 = vmatpush2.msra.mxu0 0.0
    %120 = vmatprep.subr.mxu0 0.0
    %121 = vmatpush2.msra.mxu0 0.0
    %122 = vmatprep.subr.mxu0 0.0
    %123 = vmatpush2.msra.mxu0 0.0
    %124 = vmatprep.subr.mxu0 0.0
    %125 = vmatpush2.msra.mxu0 0.0
    %126 = vmatprep.subr.mxu0 0.0
    %127 = vmatpush2.msra.mxu0 0.0
    %128 = vmatprep.subr.mxu0 0.0
    %129 = vmatpush2.msra.mxu0 0.0
    %130 = vmatprep.subr.mxu0 0.0
    %131 = vmatpush2.msra.mxu0 0.0
    %132 = vmatprep.subr.mxu0 0.0
    %133 = vmatpush2.msra.mxu0 0.0
    %134 = vmatprep.subr.mxu0 0.0
    %135 = vmatpush2.msra.mxu0 0.0
    %136 = vmatprep.subr.mxu0 0.0
    %137 = vmatpush2.msra.mxu0 0.0
    %138 = vmatprep.subr.mxu0 0.0
    %139 = vmatpush2.msra.mxu0 0.0
    %140 = vmatprep.subr.mxu0 0.0
    %141 = vmatpush2.msra.mxu0 0.0
    %142 = vmatprep.subr.mxu0 0.0
    %143 = vmatpush2.msra.mxu0 0.0
    %144 = vmatprep.mubr.f32.mxu0 0.0
    %145 = vmatmul.mubr.f32.gmra.mxu0 %v75
    %v146 = vpop.f32.mrf.mxu0
    %v147 = vadd.f32 %v72, %v146
    %v148 = vpop.f32.mrf.mxu0
    %149 = vmatprep.mubr.f32.mxu0 0.0
    %150 = vmatmul.mubr.f32.gmra.mxu0 %v78
    %v151 = vpop.f32.mrf.mxu0
    %v152 = vadd.f32 %v72, %v151
    %v153 = vpop.f32.mrf.mxu0
    %154 = vdwg.mxu0
    %v155 = vmul.f32 %v147, 0.35355338
    %v156 = vmul.f32 %v152, 0.35355338
    %158 = vrot.lane.b32.xlu0 %v147, 96
    %v159 = vpop.permute.xlu0 %158
    %vm160 = vcmask 64512
    %v162 = vsel %vm160, %v155, 0
    %v164 = vsel %vm160, %v159, 0
    %166 = vmatprep.subr.mxu0 0.0
    %167 = vmatpush1.xpose.msra.mxu0 0.0
    %168 = vmatprep.subr.mxu0 0.0
    %169 = vmatpush1.xpose.msra.mxu0 0.0
    %170 = vmatprep.subr.mxu0 0.0
    %171 = vmatpush1.xpose.msra.mxu0 0.0
    %172 = vmatprep.subr.mxu0 0.0
    %173 = vmatpush1.xpose.msra.mxu0 0.0
    %174 = vmatprep.subr.mxu0 0.0
    %175 = vmatpush1.xpose.msra.mxu0 0.0
    %176 = vmatprep.subr.mxu0 0.0
    %177 = vmatpush1.xpose.msra.mxu0 0.0
    %178 = vmatprep.subr.mxu0 0.0
    %179 = vmatpush1.xpose.msra.mxu0 0.0
    %180 = vmatprep.subr.mxu0 0.0
    %181 = vmatpush1.xpose.msra.mxu0 0.0
    %182 = vmatprep.subr.mxu0 0.0
    %183 = vmatpush1.xpose.msra.mxu0 0.0
    %184 = vmatprep.subr.mxu0 0.0
    %185 = vmatpush1.xpose.msra.mxu0 0.0
    %186 = vmatprep.subr.mxu0 0.0
    %187 = vmatpush1.xpose.msra.mxu0 0.0
    %188 = vmatprep.subr.mxu0 0.0
    %189 = vmatpush1.xpose.msra.mxu0 0.0
    %190 = vmatprep.subr.mxu0 0.0
    %191 = vmatpush1.xpose.msra.mxu0 0.0
    %192 = vmatprep.subr.mxu0 0.0
    %193 = vmatpush1.xpose.msra.mxu0 0.0
    %194 = vmatprep.subr.mxu0 0.0
    %195 = vmatpush1.xpose.msra.mxu0 0.0
    %196 = vmatprep.subr.mxu0 0.0
    %197 = vmatpush1.xpose.msra.mxu0 %v164
    %198 = vmatprep.subr.mxu0 0.0
    %199 = vmatpush2.xpose.msra.mxu0 0.0
    %200 = vmatprep.subr.mxu0 0.0
    %201 = vmatpush2.xpose.msra.mxu0 0.0
    %202 = vmatprep.subr.mxu0 0.0
    %203 = vmatpush2.xpose.msra.mxu0 0.0
    %204 = vmatprep.subr.mxu0 0.0
    %205 = vmatpush2.xpose.msra.mxu0 0.0
    %206 = vmatprep.subr.mxu0 0.0
    %207 = vmatpush2.xpose.msra.mxu0 0.0
    %208 = vmatprep.subr.mxu0 0.0
    %209 = vmatpush2.xpose.msra.mxu0 0.0
    %210 = vmatprep.subr.mxu0 0.0
    %211 = vmatpush2.xpose.msra.mxu0 0.0
    %212 = vmatprep.subr.mxu0 0.0
    %213 = vmatpush2.xpose.msra.mxu0 0.0
    %214 = vmatprep.subr.mxu0 0.0
    %215 = vmatpush2.xpose.msra.mxu0 0.0
    %216 = vmatprep.subr.mxu0 0.0
    %217 = vmatpush2.xpose.msra.mxu0 0.0
    %218 = vmatprep.subr.mxu0 0.0
    %219 = vmatpush2.xpose.msra.mxu0 0.0
    %220 = vmatprep.subr.mxu0 0.0
    %221 = vmatpush2.xpose.msra.mxu0 0.0
    %222 = vmatprep.subr.mxu0 0.0
    %223 = vmatpush2.xpose.msra.mxu0 0.0
    %224 = vmatprep.subr.mxu0 0.0
    %225 = vmatpush2.xpose.msra.mxu0 0.0
    %226 = vmatprep.subr.mxu0 0.0
    %227 = vmatpush2.xpose.msra.mxu0 0.0
    %228 = vmatprep.subr.mxu0 0.0
    %229 = vmatpush2.xpose.msra.mxu0 0.0
    %230 = vmatprep.mubr.f32.mxu0 0.0
    %231 = vmatmul.mubr.f32.gmra.mxu0 %v162
    %v232 = vpop.f32.mrf.mxu0
    %v233 = vadd.f32 0.0, %v232
    %v234 = vpop.f32.mrf.mxu0
    %235 = vdwg.mxu0
    %237 = vrot.lane.b32.xlu0 %v152, 96
    %v238 = vpop.permute.xlu0 %237
    %v240 = vsel %vm160, %v156, 0
    %v242 = vsel %vm160, %v238, 0
    %244 = vmatprep.subr.mxu0 0.0
    %245 = vmatpush1.xpose.msra.mxu0 0.0
    %246 = vmatprep.subr.mxu0 0.0
    %247 = vmatpush1.xpose.msra.mxu0 0.0
    %248 = vmatprep.subr.mxu0 0.0
    %249 = vmatpush1.xpose.msra.mxu0 0.0
    %250 = vmatprep.subr.mxu0 0.0
    %251 = vmatpush1.xpose.msra.mxu0 0.0
    %252 = vmatprep.subr.mxu0 0.0
    %253 = vmatpush1.xpose.msra.mxu0 0.0
    %254 = vmatprep.subr.mxu0 0.0
    %255 = vmatpush1.xpose.msra.mxu0 0.0
    %256 = vmatprep.subr.mxu0 0.0
    %257 = vmatpush1.xpose.msra.mxu0 0.0
    %258 = vmatprep.subr.mxu0 0.0
    %259 = vmatpush1.xpose.msra.mxu0 0.0
    %260 = vmatprep.subr.mxu0 0.0
    %261 = vmatpush1.xpose.msra.mxu0 0.0
    %262 = vmatprep.subr.mxu0 0.0
    %263 = vmatpush1.xpose.msra.mxu0 0.0
    %264 = vmatprep.subr.mxu0 0.0
    %265 = vmatpush1.xpose.msra.mxu0 0.0
    %266 = vmatprep.subr.mxu0 0.0
    %267 = vmatpush1.xpose.msra.mxu0 0.0
    %268 = vmatprep.subr.mxu0 0.0
    %269 = vmatpush1.xpose.msra.mxu0 0.0
    %270 = vmatprep.subr.mxu0 0.0
    %271 = vmatpush1.xpose.msra.mxu0 0.0
    %272 = vmatprep.subr.mxu0 0.0
    %273 = vmatpush1.xpose.msra.mxu0 0.0
    %274 = vmatprep.subr.mxu0 0.0
    %275 = vmatpush1.xpose.msra.mxu0 %v242
    %276 = vmatprep.subr.mxu0 0.0
    %277 = vmatpush2.xpose.msra.mxu0 0.0
    %278 = vmatprep.subr.mxu0 0.0
    %279 = vmatpush2.xpose.msra.mxu0 0.0
    %280 = vmatprep.subr.mxu0 0.0
    %281 = vmatpush2.xpose.msra.mxu0 0.0
    %282 = vmatprep.subr.mxu0 0.0
    %283 = vmatpush2.xpose.msra.mxu0 0.0
    %284 = vmatprep.subr.mxu0 0.0
    %285 = vmatpush2.xpose.msra.mxu0 0.0
    %286 = vmatprep.subr.mxu0 0.0
    %287 = vmatpush2.xpose.msra.mxu0 0.0
    %288 = vmatprep.subr.mxu0 0.0
    %289 = vmatpush2.xpose.msra.mxu0 0.0
    %290 = vmatprep.subr.mxu0 0.0
    %291 = vmatpush2.xpose.msra.mxu0 0.0
    %292 = vmatprep.subr.mxu0 0.0
    %293 = vmatpush2.xpose.msra.mxu0 0.0
    %294 = vmatprep.subr.mxu0 0.0
    %295 = vmatpush2.xpose.msra.mxu0 0.0
    %296 = vmatprep.subr.mxu0 0.0
    %297 = vmatpush2.xpose.msra.mxu0 0.0
    %298 = vmatprep.subr.mxu0 0.0
    %299 = vmatpush2.xpose.msra.mxu0 0.0
    %300 = vmatprep.subr.mxu0 0.0
    %301 = vmatpush2.xpose.msra.mxu0 0.0
    %302 = vmatprep.subr.mxu0 0.0
    %303 = vmatpush2.xpose.msra.mxu0 0.0
    %304 = vmatprep.subr.mxu0 0.0
    %305 = vmatpush2.xpose.msra.mxu0 0.0
    %306 = vmatprep.subr.mxu0 0.0
    %307 = vmatpush2.xpose.msra.mxu0 0.0
    %308 = vmatprep.mubr.f32.mxu0 0.0
    %309 = vmatmul.mubr.f32.gmra.mxu0 %v240
    %v310 = vpop.f32.mrf.mxu0
    %v311 = vadd.f32 0.0, %v310
    %v312 = vpop.f32.mrf.mxu0
    %313 = vdwg.mxu0
    %v314 = vsel %vm160, %v233, -inf
    %315 = vmax.xlane.f32.xlu0 %v314
    %v316 = vpop.xlane.xlu0 %315
    %v317 = vsel %vm160, %v311, -inf
    %318 = vmax.xlane.f32.xlu0 %v317
    %v319 = vpop.xlane.xlu0 %318
    %v320 = vsub.f32 %v233, %v316
    %v321 = vsub.f32 %v311, %v319
    %v322 = vmul.f32 %v320, 1.442695
    %v323 = vpow.pop %v322
    %v324 = vmul.f32 %v321, 1.442695
    %v325 = vpow.pop %v324
    %v326 = vsel %vm160, %v323, 0.0
    %327 = vadd.xlane.f32.xlu0 %v326
    %v328 = vpop.xlane.xlu0 %327
    %v329 = vsel %vm160, %v325, 0.0
    %330 = vadd.xlane.f32.xlu0 %v329
    %v331 = vpop.xlane.xlu0 %330
    %v332 = vrcp.pop %v328
    %v333 = vrcp.pop %v331
    %v334 = vmul.f32 %v323, %v332
    %v335 = vmul.f32 %v325, %v333
    %336 = vrot.lane.b32.xlu0 %v147, 64
    %v337 = vpop.permute.xlu0 %336
    %v340 = vsel %vm160, %v334, 0
    %342 = vmatprep.subr.mxu0 0.0
    %343 = vmatpush1.msra.mxu0 0.0
    %344 = vmatprep.subr.mxu0 0.0
    %345 = vmatpush1.msra.mxu0 0.0
    %346 = vmatprep.subr.mxu0 0.0
    %347 = vmatpush1.msra.mxu0 0.0
    %348 = vmatprep.subr.mxu0 0.0
    %349 = vmatpush1.msra.mxu0 0.0
    %350 = vmatprep.subr.mxu0 0.0
    %351 = vmatpush1.msra.mxu0 0.0
    %352 = vmatprep.subr.mxu0 0.0
    %353 = vmatpush1.msra.mxu0 0.0
    %354 = vmatprep.subr.mxu0 0.0
    %355 = vmatpush1.msra.mxu0 0.0
    %356 = vmatprep.subr.mxu0 0.0
    %357 = vmatpush1.msra.mxu0 0.0
    %358 = vmatprep.subr.mxu0 0.0
    %359 = vmatpush1.msra.mxu0 0.0
    %360 = vmatprep.subr.mxu0 0.0
    %361 = vmatpush1.msra.mxu0 0.0
    %362 = vmatprep.subr.mxu0 0.0
    %363 = vmatpush1.msra.mxu0 0.0
    %364 = vmatprep.subr.mxu0 0.0
    %365 = vmatpush1.msra.mxu0 0.0
    %366 = vmatprep.subr.mxu0 0.0
    %367 = vmatpush1.msra.mxu0 0.0
    %368 = vmatprep.subr.mxu0 0.0
    %369 = vmatpush1.msra.mxu0 0.0
    %370 = vmatprep.subr.mxu0 0.0
    %371 = vmatpush1.msra.mxu0 0.0
    %372 = vmatprep.subr.mxu0 0.0
    %373 = vmatpush1.msra.mxu0 %v337
    %374 = vmatprep.subr.mxu0 0.0
    %375 = vmatpush2.msra.mxu0 0.0
    %376 = vmatprep.subr.mxu0 0.0
    %377 = vmatpush2.msra.mxu0 0.0
    %378 = vmatprep.subr.mxu0 0.0
    %379 = vmatpush2.msra.mxu0 0.0
    %380 = vmatprep.subr.mxu0 0.0
    %381 = vmatpush2.msra.mxu0 0.0
    %382 = vmatprep.subr.mxu0 0.0
    %383 = vmatpush2.msra.mxu0 0.0
    %384 = vmatprep.subr.mxu0 0.0
    %385 = vmatpush2.msra.mxu0 0.0
    %386 = vmatprep.subr.mxu0 0.0
    %387 = vmatpush2.msra.mxu0 0.0
    %388 = vmatprep.subr.mxu0 0.0
    %389 = vmatpush2.msra.mxu0 0.0
    %390 = vmatprep.subr.mxu0 0.0
    %391 = vmatpush2.msra.mxu0 0.0
    %392 = vmatprep.subr.mxu0 0.0
    %393 = vmatpush2.msra.mxu0 0.0
    %394 = vmatprep.subr.mxu0 0.0
    %395 = vmatpush2.msra.mxu0 0.0
    %396 = vmatprep.subr.mxu0 0.0
    %397 = vmatpush2.msra.mxu0 0.0
    %398 = vmatprep.subr.mxu0 0.0
    %399 = vmatpush2.msra.mxu0 0.0
    %400 = vmatprep.subr.mxu0 0.0
    %401 = vmatpush2.msra.mxu0 0.0
    %402 = vmatprep.subr.mxu0 0.0
    %403 = vmatpush2.msra.mxu0 0.0
    %404 = vmatprep.subr.mxu0 0.0
    %405 = vmatpush2.msra.mxu0 0.0
    %406 = vmatprep.mubr.f32.mxu0 0.0
    %407 = vmatmul.mubr.f32.gmra.mxu0 %v340
    %v408 = vpop.f32.mrf.mxu0
    %v409 = vadd.f32 0.0, %v408
    %v410 = vpop.f32.mrf.mxu0
    %411 = vdwg.mxu0
    %412 = vrot.lane.b32.xlu0 %v152, 64
    %v413 = vpop.permute.xlu0 %412
    %v416 = vsel %vm160, %v335, 0
    %418 = vmatprep.subr.mxu0 0.0
    %419 = vmatpush1.msra.mxu0 0.0
    %420 = vmatprep.subr.mxu0 0.0
    %421 = vmatpush1.msra.mxu0 0.0
    %422 = vmatprep.subr.mxu0 0.0
    %423 = vmatpush1.msra.mxu0 0.0
    %424 = vmatprep.subr.mxu0 0.0
    %425 = vmatpush1.msra.mxu0 0.0
    %426 = vmatprep.subr.mxu0 0.0
    %427 = vmatpush1.msra.mxu0 0.0
    %428 = vmatprep.subr.mxu0 0.0
    %429 = vmatpush1.msra.mxu0 0.0
    %430 = vmatprep.subr.mxu0 0.0
    %431 = vmatpush1.msra.mxu0 0.0
    %432 = vmatprep.subr.mxu0 0.0
    %433 = vmatpush1.msra.mxu0 0.0
    %434 = vmatprep.subr.mxu0 0.0
    %435 = vmatpush1.msra.mxu0 0.0
    %436 = vmatprep.subr.mxu0 0.0
    %437 = vmatpush1.msra.mxu0 0.0
    %438 = vmatprep.subr.mxu0 0.0
    %439 = vmatpush1.msra.mxu0 0.0
    %440 = vmatprep.subr.mxu0 0.0
    %441 = vmatpush1.msra.mxu0 0.0
    %442 = vmatprep.subr.mxu0 0.0
    %443 = vmatpush1.msra.mxu0 0.0
    %444 = vmatprep.subr.mxu0 0.0
    %445 = vmatpush1.msra.mxu0 0.0
    %446 = vmatprep.subr.mxu0 0.0
    %447 = vmatpush1.msra.mxu0 0.0
    %448 = vmatprep.subr.mxu0 0.0
    %449 = vmatpush1.msra.mxu0 %v413
    %450 = vmatprep.subr.mxu0 0.0
    %451 = vmatpush2.msra.mxu0 0.0
    %452 = vmatprep.subr.mxu0 0.0
    %453 = vmatpush2.msra.mxu0 0.0
    %454 = vmatprep.subr.mxu0 0.0
    %455 = vmatpush2.msra.mxu0 0.0
    %456 = vmatprep.subr.mxu0 0.0
    %457 = vmatpush2.msra.mxu0 0.0
    %458 = vmatprep.subr.mxu0 0.0
    %459 = vmatpush2.msra.mxu0 0.0
    %460 = vmatprep.subr.mxu0 0.0
    %461 = vmatpush2.msra.mxu0 0.0
    %462 = vmatprep.subr.mxu0 0.0
    %463 = vmatpush2.msra.mxu0 0.0
    %464 = vmatprep.subr.mxu0 0.0
    %465 = vmatpush2.msra.mxu0 0.0
    %466 = vmatprep.subr.mxu0 0.0
    %467 = vmatpush2.msra.mxu0 0.0
    %468 = vmatprep.subr.mxu0 0.0
    %469 = vmatpush2.msra.mxu0 0.0
    %470 = vmatprep.subr.mxu0 0.0
    %471 = vmatpush2.msra.mxu0 0.0
    %472 = vmatprep.subr.mxu0 0.0
    %473 = vmatpush2.msra.mxu0 0.0
    %474 = vmatprep.subr.mxu0 0.0
    %475 = vmatpush2.msra.mxu0 0.0
    %476 = vmatprep.subr.mxu0 0.0
    %477 = vmatpush2.msra.mxu0 0.0
    %478 = vmatprep.subr.mxu0 0.0
    %479 = vmatpush2.msra.mxu0 0.0
    %480 = vmatprep.subr.mxu0 0.0
    %481 = vmatpush2.msra.mxu0 0.0
    %482 = vmatprep.mubr.f32.mxu0 0.0
    %483 = vmatmul.mubr.f32.gmra.mxu0 %v416
    %v484 = vpop.f32.mrf.mxu0
    %v485 = vadd.f32 0.0, %v484
    %v486 = vpop.f32.mrf.mxu0
    %487 = vdwg.mxu0
    %488 = vrot.lane.b32.xlu0 %v155, 120
    %v489 = vpop.permute.xlu0 %488
    %490 = vrot.lane.b32.xlu0 %v147, 88
    %v491 = vpop.permute.xlu0 %490
    %v492 = vsel %vm160, %v489, 0
    %v494 = vsel %vm160, %v491, 0
    %496 = vmatprep.subr.mxu0 0.0
    %497 = vmatpush1.xpose.msra.mxu0 0.0
    %498 = vmatprep.subr.mxu0 0.0
    %499 = vmatpush1.xpose.msra.mxu0 0.0
    %500 = vmatprep.subr.mxu0 0.0
    %501 = vmatpush1.xpose.msra.mxu0 0.0
    %502 = vmatprep.subr.mxu0 0.0
    %503 = vmatpush1.xpose.msra.mxu0 0.0
    %504 = vmatprep.subr.mxu0 0.0
    %505 = vmatpush1.xpose.msra.mxu0 0.0
    %506 = vmatprep.subr.mxu0 0.0
    %507 = vmatpush1.xpose.msra.mxu0 0.0
    %508 = vmatprep.subr.mxu0 0.0
    %509 = vmatpush1.xpose.msra.mxu0 0.0
    %510 = vmatprep.subr.mxu0 0.0
    %511 = vmatpush1.xpose.msra.mxu0 0.0
    %512 = vmatprep.subr.mxu0 0.0
    %513 = vmatpush1.xpose.msra.mxu0 0.0
    %514 = vmatprep.subr.mxu0 0.0
    %515 = vmatpush1.xpose.msra.mxu0 0.0
    %516 = vmatprep.subr.mxu0 0.0
    %517 = vmatpush1.xpose.msra.mxu0 0.0
    %518 = vmatprep.subr.mxu0 0.0
    %519 = vmatpush1.xpose.msra.mxu0 0.0
    %520 = vmatprep.subr.mxu0 0.0
    %521 = vmatpush1.xpose.msra.mxu0 0.0
    %522 = vmatprep.subr.mxu0 0.0
    %523 = vmatpush1.xpose.msra.mxu0 0.0
    %524 = vmatprep.subr.mxu0 0.0
    %525 = vmatpush1.xpose.msra.mxu0 0.0
    %526 = vmatprep.subr.mxu0 0.0
    %527 = vmatpush1.xpose.msra.mxu0 %v494
    %528 = vmatprep.subr.mxu0 0.0
    %529 = vmatpush2.xpose.msra.mxu0 0.0
    %530 = vmatprep.subr.mxu0 0.0
    %531 = vmatpush2.xpose.msra.mxu0 0.0
    %532 = vmatprep.subr.mxu0 0.0
    %533 = vmatpush2.xpose.msra.mxu0 0.0
    %534 = vmatprep.subr.mxu0 0.0
    %535 = vmatpush2.xpose.msra.mxu0 0.0
    %536 = vmatprep.subr.mxu0 0.0
    %537 = vmatpush2.xpose.msra.mxu0 0.0
    %538 = vmatprep.subr.mxu0 0.0
    %539 = vmatpush2.xpose.msra.mxu0 0.0
    %540 = vmatprep.subr.mxu0 0.0
    %541 = vmatpush2.xpose.msra.mxu0 0.0
    %542 = vmatprep.subr.mxu0 0.0
    %543 = vmatpush2.xpose.msra.mxu0 0.0
    %544 = vmatprep.subr.mxu0 0.0
    %545 = vmatpush2.xpose.msra.mxu0 0.0
    %546 = vmatprep.subr.mxu0 0.0
    %547 = vmatpush2.xpose.msra.mxu0 0.0
    %548 = vmatprep.subr.mxu0 0.0
    %549 = vmatpush2.xpose.msra.mxu0 0.0
    %550 = vmatprep.subr.mxu0 0.0
    %551 = vmatpush2.xpose.msra.mxu0 0.0
    %552 = vmatprep.subr.mxu0 0.0
    %553 = vmatpush2.xpose.msra.mxu0 0.0
    %554 = vmatprep.subr.mxu0 0.0
    %555 = vmatpush2.xpose.msra.mxu0 0.0
    %556 = vmatprep.subr.mxu0 0.0
    %557 = vmatpush2.xpose.msra.mxu0 0.0
    %558 = vmatprep.subr.mxu0 0.0
    %559 = vmatpush2.xpose.msra.mxu0 0.0
    %560 = vmatprep.mubr.f32.mxu0 0.0
    %561 = vmatmul.mubr.f32.gmra.mxu0 %v492
    %v562 = vpop.f32.mrf.mxu0
    %v563 = vadd.f32 0.0, %v562
    %v564 = vpop.f32.mrf.mxu0
    %565 = vdwg.mxu0
    %566 = vrot.lane.b32.xlu0 %v156, 120
    %v567 = vpop.permute.xlu0 %566
    %568 = vrot.lane.b32.xlu0 %v152, 88
    %v569 = vpop.permute.xlu0 %568
    %v570 = vsel %vm160, %v567, 0
    %v572 = vsel %vm160, %v569, 0
    %574 = vmatprep.subr.mxu0 0.0
    %575 = vmatpush1.xpose.msra.mxu0 0.0
    %576 = vmatprep.subr.mxu0 0.0
    %577 = vmatpush1.xpose.msra.mxu0 0.0
    %578 = vmatprep.subr.mxu0 0.0
    %579 = vmatpush1.xpose.msra.mxu0 0.0
    %580 = vmatprep.subr.mxu0 0.0
    %581 = vmatpush1.xpose.msra.mxu0 0.0
    %582 = vmatprep.subr.mxu0 0.0
    %583 = vmatpush1.xpose.msra.mxu0 0.0
    %584 = vmatprep.subr.mxu0 0.0
    %585 = vmatpush1.xpose.msra.mxu0 0.0
    %586 = vmatprep.subr.mxu0 0.0
    %587 = vmatpush1.xpose.msra.mxu0 0.0
    %588 = vmatprep.subr.mxu0 0.0
    %589 = vmatpush1.xpose.msra.mxu0 0.0
    %590 = vmatprep.subr.mxu0 0.0
    %591 = vmatpush1.xpose.msra.mxu0 0.0
    %592 = vmatprep.subr.mxu0 0.0
    %593 = vmatpush1.xpose.msra.mxu0 0.0
    %594 = vmatprep.subr.mxu0 0.0
    %595 = vmatpush1.xpose.msra.mxu0 0.0
    %596 = vmatprep.subr.mxu0 0.0
    %597 = vmatpush1.xpose.msra.mxu0 0.0
    %598 = vmatprep.subr.mxu0 0.0
    %599 = vmatpush1.xpose.msra.mxu0 0.0
    %600 = vmatprep.subr.mxu0 0.0
    %601 = vmatpush1.xpose.msra.mxu0 0.0
    %602 = vmatprep.subr.mxu0 0.0
    %603 = vmatpush1.xpose.msra.mxu0 0.0
    %604 = vmatprep.subr.mxu0 0.0
    %605 = vmatpush1.xpose.msra.mxu0 %v572
    %606 = vmatprep.subr.mxu0 0.0
    %607 = vmatpush2.xpose.msra.mxu0 0.0
    %608 = vmatprep.subr.mxu0 0.0
    %609 = vmatpush2.xpose.msra.mxu0 0.0
    %610 = vmatprep.subr.mxu0 0.0
    %611 = vmatpush2.xpose.msra.mxu0 0.0
    %612 = vmatprep.subr.mxu0 0.0
    %613 = vmatpush2.xpose.msra.mxu0 0.0
    %614 = vmatprep.subr.mxu0 0.0
    %615 = vmatpush2.xpose.msra.mxu0 0.0
    %616 = vmatprep.subr.mxu0 0.0
    %617 = vmatpush2.xpose.msra.mxu0 0.0
    %618 = vmatprep.subr.mxu0 0.0
    %619 = vmatpush2.xpose.msra.mxu0 0.0
    %620 = vmatprep.subr.mxu0 0.0
    %621 = vmatpush2.xpose.msra.mxu0 0.0
    %622 = vmatprep.subr.mxu0 0.0
    %623 = vmatpush2.xpose.msra.mxu0 0.0
    %624 = vmatprep.subr.mxu0 0.0
    %625 = vmatpush2.xpose.msra.mxu0 0.0
    %626 = vmatprep.subr.mxu0 0.0
    %627 = vmatpush2.xpose.msra.mxu0 0.0
    %628 = vmatprep.subr.mxu0 0.0
    %629 = vmatpush2.xpose.msra.mxu0 0.0
    %630 = vmatprep.subr.mxu0 0.0
    %631 = vmatpush2.xpose.msra.mxu0 0.0
    %632 = vmatprep.subr.mxu0 0.0
    %633 = vmatpush2.xpose.msra.mxu0 0.0
    %634 = vmatprep.subr.mxu0 0.0
    %635 = vmatpush2.xpose.msra.mxu0 0.0
    %636 = vmatprep.subr.mxu0 0.0
    %637 = vmatpush2.xpose.msra.mxu0 0.0
    %638 = vmatprep.mubr.f32.mxu0 0.0
    %639 = vmatmul.mubr.f32.gmra.mxu0 %v570
    %v640 = vpop.f32.mrf.mxu0
    %v641 = vadd.f32 0.0, %v640
    %v642 = vpop.f32.mrf.mxu0
    %643 = vdwg.mxu0
    %v644 = vsel %vm160, %v563, -inf
    %645 = vmax.xlane.f32.xlu0 %v644
    %v646 = vpop.xlane.xlu0 %645
    %v647 = vsel %vm160, %v641, -inf
    %648 = vmax.xlane.f32.xlu0 %v647
    %v649 = vpop.xlane.xlu0 %648
    %v650 = vsub.f32 %v563, %v646
    %v651 = vsub.f32 %v641, %v649
    %v652 = vmul.f32 %v650, 1.442695
    %v653 = vpow.pop %v652
    %v654 = vmul.f32 %v651, 1.442695
    %v655 = vpow.pop %v654
    %v656 = vsel %vm160, %v653, 0.0
    %657 = vadd.xlane.f32.xlu0 %v656
    %v658 = vpop.xlane.xlu0 %657
    %v659 = vsel %vm160, %v655, 0.0
    %660 = vadd.xlane.f32.xlu0 %v659
    %v661 = vpop.xlane.xlu0 %660
    %v662 = vrcp.pop %v658
    %v663 = vrcp.pop %v661
    %v664 = vmul.f32 %v653, %v662
    %v665 = vmul.f32 %v655, %v663
    %666 = vrot.lane.b32.xlu0 %v147, 56
    %v667 = vpop.permute.xlu0 %666
    %v670 = vsel %vm160, %v664, 0
    %672 = vmatprep.subr.mxu0 0.0
    %673 = vmatpush1.msra.mxu0 0.0
    %674 = vmatprep.subr.mxu0 0.0
    %675 = vmatpush1.msra.mxu0 0.0
    %676 = vmatprep.subr.mxu0 0.0
    %677 = vmatpush1.msra.mxu0 0.0
    %678 = vmatprep.subr.mxu0 0.0
    %679 = vmatpush1.msra.mxu0 0.0
    %680 = vmatprep.subr.mxu0 0.0
    %681 = vmatpush1.msra.mxu0 0.0
    %682 = vmatprep.subr.mxu0 0.0
    %683 = vmatpush1.msra.mxu0 0.0
    %684 = vmatprep.subr.mxu0 0.0
    %685 = vmatpush1.msra.mxu0 0.0
    %686 = vmatprep.subr.mxu0 0.0
    %687 = vmatpush1.msra.mxu0 0.0
    %688 = vmatprep.subr.mxu0 0.0
    %689 = vmatpush1.msra.mxu0 0.0
    %690 = vmatprep.subr.mxu0 0.0
    %691 = vmatpush1.msra.mxu0 0.0
    %692 = vmatprep.subr.mxu0 0.0
    %693 = vmatpush1.msra.mxu0 0.0
    %694 = vmatprep.subr.mxu0 0.0
    %695 = vmatpush1.msra.mxu0 0.0
    %696 = vmatprep.subr.mxu0 0.0
    %697 = vmatpush1.msra.mxu0 0.0
    %698 = vmatprep.subr.mxu0 0.0
    %699 = vmatpush1.msra.mxu0 0.0
    %700 = vmatprep.subr.mxu0 0.0
    %701 = vmatpush1.msra.mxu0 0.0
    %702 = vmatprep.subr.mxu0 0.0
    %703 = vmatpush1.msra.mxu0 %v667
    %704 = vmatprep.subr.mxu0 0.0
    %705 = vmatpush2.msra.mxu0 0.0
    %706 = vmatprep.subr.mxu0 0.0
    %707 = vmatpush2.msra.mxu0 0.0
    %708 = vmatprep.subr.mxu0 0.0
    %709 = vmatpush2.msra.mxu0 0.0
    %710 = vmatprep.subr.mxu0 0.0
    %711 = vmatpush2.msra.mxu0 0.0
    %712 = vmatprep.subr.mxu0 0.0
    %713 = vmatpush2.msra.mxu0 0.0
    %714 = vmatprep.subr.mxu0 0.0
    %715 = vmatpush2.msra.mxu0 0.0
    %716 = vmatprep.subr.mxu0 0.0
    %717 = vmatpush2.msra.mxu0 0.0
    %718 = vmatprep.subr.mxu0 0.0
    %719 = vmatpush2.msra.mxu0 0.0
    %720 = vmatprep.subr.mxu0 0.0
    %721 = vmatpush2.msra.mxu0 0.0
    %722 = vmatprep.subr.mxu0 0.0
    %723 = vmatpush2.msra.mxu0 0.0
    %724 = vmatprep.subr.mxu0 0.0
    %725 = vmatpush2.msra.mxu0 0.0
    %726 = vmatprep.subr.mxu0 0.0
    %727 = vmatpush2.msra.mxu0 0.0
    %728 = vmatprep.subr.mxu0 0.0
    %729 = vmatpush2.msra.mxu0 0.0
    %730 = vmatprep.subr.mxu0 0.0
    %731 = vmatpush2.msra.mxu0 0.0
    %732 = vmatprep.subr.mxu0 0.0
    %733 = vmatpush2.msra.mxu0 0.0
    %734 = vmatprep.subr.mxu0 0.0
    %735 = vmatpush2.msra.mxu0 0.0
    %736 = vmatprep.mubr.f32.mxu0 0.0
    %737 = vmatmul.mubr.f32.gmra.mxu0 %v670
    %v738 = vpop.f32.mrf.mxu0
    %v739 = vadd.f32 0.0, %v738
    %v740 = vpop.f32.mrf.mxu0
    %741 = vdwg.mxu0
    %742 = vrot.lane.b32.xlu0 %v152, 56
    %v743 = vpop.permute.xlu0 %742
    %v746 = vsel %vm160, %v665, 0
    %748 = vmatprep.subr.mxu0 0.0
    %749 = vmatpush1.msra.mxu0 0.0
    %750 = vmatprep.subr.mxu0 0.0
    %751 = vmatpush1.msra.mxu0 0.0
    %752 = vmatprep.subr.mxu0 0.0
    %753 = vmatpush1.msra.mxu0 0.0
    %754 = vmatprep.subr.mxu0 0.0
    %755 = vmatpush1.msra.mxu0 0.0
    %756 = vmatprep.subr.mxu0 0.0
    %757 = vmatpush1.msra.mxu0 0.0
    %758 = vmatprep.subr.mxu0 0.0
    %759 = vmatpush1.msra.mxu0 0.0
    %760 = vmatprep.subr.mxu0 0.0
    %761 = vmatpush1.msra.mxu0 0.0
    %762 = vmatprep.subr.mxu0 0.0
    %763 = vmatpush1.msra.mxu0 0.0
    %764 = vmatprep.subr.mxu0 0.0
    %765 = vmatpush1.msra.mxu0 0.0
    %766 = vmatprep.subr.mxu0 0.0
    %767 = vmatpush1.msra.mxu0 0.0
    %768 = vmatprep.subr.mxu0 0.0
    %769 = vmatpush1.msra.mxu0 0.0
    %770 = vmatprep.subr.mxu0 0.0
    %771 = vmatpush1.msra.mxu0 0.0
    %772 = vmatprep.subr.mxu0 0.0
    %773 = vmatpush1.msra.mxu0 0.0
    %774 = vmatprep.subr.mxu0 0.0
    %775 = vmatpush1.msra.mxu0 0.0
    %776 = vmatprep.subr.mxu0 0.0
    %777 = vmatpush1.msra.mxu0 0.0
    %778 = vmatprep.subr.mxu0 0.0
    %779 = vmatpush1.msra.mxu0 %v743
    %780 = vmatprep.subr.mxu0 0.0
    %781 = vmatpush2.msra.mxu0 0.0
    %782 = vmatprep.subr.mxu0 0.0
    %783 = vmatpush2.msra.mxu0 0.0
    %784 = vmatprep.subr.mxu0 0.0
    %785 = vmatpush2.msra.mxu0 0.0
    %786 = vmatprep.subr.mxu0 0.0
    %787 = vmatpush2.msra.mxu0 0.0
    %788 = vmatprep.subr.mxu0 0.0
    %789 = vmatpush2.msra.mxu0 0.0
    %790 = vmatprep.subr.mxu0 0.0
    %791 = vmatpush2.msra.mxu0 0.0
    %792 = vmatprep.subr.mxu0 0.0
    %793 = vmatpush2.msra.mxu0 0.0
    %794 = vmatprep.subr.mxu0 0.0
    %795 = vmatpush2.msra.mxu0 0.0
    %796 = vmatprep.subr.mxu0 0.0
    %797 = vmatpush2.msra.mxu0 0.0
    %798 = vmatprep.subr.mxu0 0.0
    %799 = vmatpush2.msra.mxu0 0.0
    %800 = vmatprep.subr.mxu0 0.0
    %801 = vmatpush2.msra.mxu0 0.0
    %802 = vmatprep.subr.mxu0 0.0
    %803 = vmatpush2.msra.mxu0 0.0
    %804 = vmatprep.subr.mxu0 0.0
    %805 = vmatpush2.msra.mxu0 0.0
    %806 = vmatprep.subr.mxu0 0.0
    %807 = vmatpush2.msra.mxu0 0.0
    %808 = vmatprep.subr.mxu0 0.0
    %809 = vmatpush2.msra.mxu0 0.0
    %810 = vmatprep.subr.mxu0 0.0
    %811 = vmatpush2.msra.mxu0 0.0
    %812 = vmatprep.mubr.f32.mxu0 0.0
    %813 = vmatmul.mubr.f32.gmra.mxu0 %v746
    %v814 = vpop.f32.mrf.mxu0
    %v815 = vadd.f32 0.0, %v814
    %v816 = vpop.f32.mrf.mxu0
    %817 = vdwg.mxu0
    %818 = vrot.lane.b32.xlu0 %v155, 112
    %v819 = vpop.permute.xlu0 %818
    %820 = vrot.lane.b32.xlu0 %v147, 80
    %v821 = vpop.permute.xlu0 %820
    %v822 = vsel %vm160, %v819, 0
    %v824 = vsel %vm160, %v821, 0
    %826 = vmatprep.subr.mxu0 0.0
    %827 = vmatpush1.xpose.msra.mxu0 0.0
    %828 = vmatprep.subr.mxu0 0.0
    %829 = vmatpush1.xpose.msra.mxu0 0.0
    %830 = vmatprep.subr.mxu0 0.0
    %831 = vmatpush1.xpose.msra.mxu0 0.0
    %832 = vmatprep.subr.mxu0 0.0
    %833 = vmatpush1.xpose.msra.mxu0 0.0
    %834 = vmatprep.subr.mxu0 0.0
    %835 = vmatpush1.xpose.msra.mxu0 0.0
    %836 = vmatprep.subr.mxu0 0.0
    %837 = vmatpush1.xpose.msra.mxu0 0.0
    %838 = vmatprep.subr.mxu0 0.0
    %839 = vmatpush1.xpose.msra.mxu0 0.0
    %840 = vmatprep.subr.mxu0 0.0
    %841 = vmatpush1.xpose.msra.mxu0 0.0
    %842 = vmatprep.subr.mxu0 0.0
    %843 = vmatpush1.xpose.msra.mxu0 0.0
    %844 = vmatprep.subr.mxu0 0.0
    %845 = vmatpush1.xpose.msra.mxu0 0.0
    %846 = vmatprep.subr.mxu0 0.0
    %847 = vmatpush1.xpose.msra.mxu0 0.0
    %848 = vmatprep.subr.mxu0 0.0
    %849 = vmatpush1.xpose.msra.mxu0 0.0
    %850 = vmatprep.subr.mxu0 0.0
    %851 = vmatpush1.xpose.msra.mxu0 0.0
    %852 = vmatprep.subr.mxu0 0.0
    %853 = vmatpush1.xpose.msra.mxu0 0.0
    %854 = vmatprep.subr.mxu0 0.0
    %855 = vmatpush1.xpose.msra.mxu0 0.0
    %856 = vmatprep.subr.mxu0 0.0
    %857 = vmatpush1.xpose.msra.mxu0 %v824
    %858 = vmatprep.subr.mxu0 0.0
    %859 = vmatpush2.xpose.msra.mxu0 0.0
    %860 = vmatprep.subr.mxu0 0.0
    %861 = vmatpush2.xpose.msra.mxu0 0.0
    %862 = vmatprep.subr.mxu0 0.0
    %863 = vmatpush2.xpose.msra.mxu0 0.0
    %864 = vmatprep.subr.mxu0 0.0
    %865 = vmatpush2.xpose.msra.mxu0 0.0
    %866 = vmatprep.subr.mxu0 0.0
    %867 = vmatpush2.xpose.msra.mxu0 0.0
    %868 = vmatprep.subr.mxu0 0.0
    %869 = vmatpush2.xpose.msra.mxu0 0.0
    %870 = vmatprep.subr.mxu0 0.0
    %871 = vmatpush2.xpose.msra.mxu0 0.0
    %872 = vmatprep.subr.mxu0 0.0
    %873 = vmatpush2.xpose.msra.mxu0 0.0
    %874 = vmatprep.subr.mxu0 0.0
    %875 = vmatpush2.xpose.msra.mxu0 0.0
    %876 = vmatprep.subr.mxu0 0.0
    %877 = vmatpush2.xpose.msra.mxu0 0.0
    %878 = vmatprep.subr.mxu0 0.0
    %879 = vmatpush2.xpose.msra.mxu0 0.0
    %880 = vmatprep.subr.mxu0 0.0
    %881 = vmatpush2.xpose.msra.mxu0 0.0
    %882 = vmatprep.subr.mxu0 0.0
    %883 = vmatpush2.xpose.msra.mxu0 0.0
    %884 = vmatprep.subr.mxu0 0.0
    %885 = vmatpush2.xpose.msra.mxu0 0.0
    %886 = vmatprep.subr.mxu0 0.0
    %887 = vmatpush2.xpose.msra.mxu0 0.0
    %888 = vmatprep.subr.mxu0 0.0
    %889 = vmatpush2.xpose.msra.mxu0 0.0
    %890 = vmatprep.mubr.f32.mxu0 0.0
    %891 = vmatmul.mubr.f32.gmra.mxu0 %v822
    %v892 = vpop.f32.mrf.mxu0
    %v893 = vadd.f32 0.0, %v892
    %v894 = vpop.f32.mrf.mxu0
    %895 = vdwg.mxu0
    %896 = vrot.lane.b32.xlu0 %v156, 112
    %v897 = vpop.permute.xlu0 %896
    %898 = vrot.lane.b32.xlu0 %v152, 80
    %v899 = vpop.permute.xlu0 %898
    %v900 = vsel %vm160, %v897, 0
    %v902 = vsel %vm160, %v899, 0
    %904 = vmatprep.subr.mxu0 0.0
    %905 = vmatpush1.xpose.msra.mxu0 0.0
    %906 = vmatprep.subr.mxu0 0.0
    %907 = vmatpush1.xpose.msra.mxu0 0.0
    %908 = vmatprep.subr.mxu0 0.0
    %909 = vmatpush1.xpose.msra.mxu0 0.0
    %910 = vmatprep.subr.mxu0 0.0
    %911 = vmatpush1.xpose.msra.mxu0 0.0
    %912 = vmatprep.subr.mxu0 0.0
    %913 = vmatpush1.xpose.msra.mxu0 0.0
    %914 = vmatprep.subr.mxu0 0.0
    %915 = vmatpush1.xpose.msra.mxu0 0.0
    %916 = vmatprep.subr.mxu0 0.0
    %917 = vmatpush1.xpose.msra.mxu0 0.0
    %918 = vmatprep.subr.mxu0 0.0
    %919 = vmatpush1.xpose.msra.mxu0 0.0
    %920 = vmatprep.subr.mxu0 0.0
    %921 = vmatpush1.xpose.msra.mxu0 0.0
    %922 = vmatprep.subr.mxu0 0.0
    %923 = vmatpush1.xpose.msra.mxu0 0.0
    %924 = vmatprep.subr.mxu0 0.0
    %925 = vmatpush1.xpose.msra.mxu0 0.0
    %926 = vmatprep.subr.mxu0 0.0
    %927 = vmatpush1.xpose.msra.mxu0 0.0
    %928 = vmatprep.subr.mxu0 0.0
    %929 = vmatpush1.xpose.msra.mxu0 0.0
    %930 = vmatprep.subr.mxu0 0.0
    %931 = vmatpush1.xpose.msra.mxu0 0.0
    %932 = vmatprep.subr.mxu0 0.0
    %933 = vmatpush1.xpose.msra.mxu0 0.0
    %934 = vmatprep.subr.mxu0 0.0
    %935 = vmatpush1.xpose.msra.mxu0 %v902
    %936 = vmatprep.subr.mxu0 0.0
    %937 = vmatpush2.xpose.msra.mxu0 0.0
    %938 = vmatprep.subr.mxu0 0.0
    %939 = vmatpush2.xpose.msra.mxu0 0.0
    %940 = vmatprep.subr.mxu0 0.0
    %941 = vmatpush2.xpose.msra.mxu0 0.0
    %942 = vmatprep.subr.mxu0 0.0
    %943 = vmatpush2.xpose.msra.mxu0 0.0
    %944 = vmatprep.subr.mxu0 0.0
    %945 = vmatpush2.xpose.msra.mxu0 0.0
    %946 = vmatprep.subr.mxu0 0.0
    %947 = vmatpush2.xpose.msra.mxu0 0.0
    %948 = vmatprep.subr.mxu0 0.0
    %949 = vmatpush2.xpose.msra.mxu0 0.0
    %950 = vmatprep.subr.mxu0 0.0
    %951 = vmatpush2.xpose.msra.mxu0 0.0
    %952 = vmatprep.subr.mxu0 0.0
    %953 = vmatpush2.xpose.msra.mxu0 0.0
    %954 = vmatprep.subr.mxu0 0.0
    %955 = vmatpush2.xpose.msra.mxu0 0.0
    %956 = vmatprep.subr.mxu0 0.0
    %957 = vmatpush2.xpose.msra.mxu0 0.0
    %958 = vmatprep.subr.mxu0 0.0
    %959 = vmatpush2.xpose.msra.mxu0 0.0
    %960 = vmatprep.subr.mxu0 0.0
    %961 = vmatpush2.xpose.msra.mxu0 0.0
    %962 = vmatprep.subr.mxu0 0.0
    %963 = vmatpush2.xpose.msra.mxu0 0.0
    %964 = vmatprep.subr.mxu0 0.0
    %965 = vmatpush2.xpose.msra.mxu0 0.0
    %966 = vmatprep.subr.mxu0 0.0
    %967 = vmatpush2.xpose.msra.mxu0 0.0
    %968 = vmatprep.mubr.f32.mxu0 0.0
    %969 = vmatmul.mubr.f32.gmra.mxu0 %v900
    %v970 = vpop.f32.mrf.mxu0
    %v971 = vadd.f32 0.0, %v970
    %v972 = vpop.f32.mrf.mxu0
    %973 = vdwg.mxu0
    %v974 = vsel %vm160, %v893, -inf
    %975 = vmax.xlane.f32.xlu0 %v974
    %v976 = vpop.xlane.xlu0 %975
    %v977 = vsel %vm160, %v971, -inf
    %978 = vmax.xlane.f32.xlu0 %v977
    %v979 = vpop.xlane.xlu0 %978
    %v980 = vsub.f32 %v893, %v976
    %v981 = vsub.f32 %v971, %v979
    %v982 = vmul.f32 %v980, 1.442695
    %v983 = vpow.pop %v982
    %v984 = vmul.f32 %v981, 1.442695
    %v985 = vpow.pop %v984
    %v986 = vsel %vm160, %v983, 0.0
    %987 = vadd.xlane.f32.xlu0 %v986
    %v988 = vpop.xlane.xlu0 %987
    %v989 = vsel %vm160, %v985, 0.0
    %990 = vadd.xlane.f32.xlu0 %v989
    %v991 = vpop.xlane.xlu0 %990
    %v992 = vrcp.pop %v988
    %v993 = vrcp.pop %v991
    %v994 = vmul.f32 %v983, %v992
    %v995 = vmul.f32 %v985, %v993
    %996 = vrot.lane.b32.xlu0 %v147, 48
    %v997 = vpop.permute.xlu0 %996
    %v1000 = vsel %vm160, %v994, 0
    %1002 = vmatprep.subr.mxu0 0.0
    %1003 = vmatpush1.msra.mxu0 0.0
    %1004 = vmatprep.subr.mxu0 0.0
    %1005 = vmatpush1.msra.mxu0 0.0
    %1006 = vmatprep.subr.mxu0 0.0
    %1007 = vmatpush1.msra.mxu0 0.0
    %1008 = vmatprep.subr.mxu0 0.0
    %1009 = vmatpush1.msra.mxu0 0.0
    %1010 = vmatprep.subr.mxu0 0.0
    %1011 = vmatpush1.msra.mxu0 0.0
    %1012 = vmatprep.subr.mxu0 0.0
    %1013 = vmatpush1.msra.mxu0 0.0
    %1014 = vmatprep.subr.mxu0 0.0
    %1015 = vmatpush1.msra.mxu0 0.0
    %1016 = vmatprep.subr.mxu0 0.0
    %1017 = vmatpush1.msra.mxu0 0.0
    %1018 = vmatprep.subr.mxu0 0.0
    %1019 = vmatpush1.msra.mxu0 0.0
    %1020 = vmatprep.subr.mxu0 0.0
    %1021 = vmatpush1.msra.mxu0 0.0
    %1022 = vmatprep.subr.mxu0 0.0
    %1023 = vmatpush1.msra.mxu0 0.0
    %1024 = vmatprep.subr.mxu0 0.0
    %1025 = vmatpush1.msra.mxu0 0.0
    %1026 = vmatprep.subr.mxu0 0.0
    %1027 = vmatpush1.msra.mxu0 0.0
    %1028 = vmatprep.subr.mxu0 0.0
    %1029 = vmatpush1.msra.mxu0 0.0
    %1030 = vmatprep.subr.mxu0 0.0
    %1031 = vmatpush1.msra.mxu0 0.0
    %1032 = vmatprep.subr.mxu0 0.0
    %1033 = vmatpush1.msra.mxu0 %v997
    %1034 = vmatprep.subr.mxu0 0.0
    %1035 = vmatpush2.msra.mxu0 0.0
    %1036 = vmatprep.subr.mxu0 0.0
    %1037 = vmatpush2.msra.mxu0 0.0
    %1038 = vmatprep.subr.mxu0 0.0
    %1039 = vmatpush2.msra.mxu0 0.0
    %1040 = vmatprep.subr.mxu0 0.0
    %1041 = vmatpush2.msra.mxu0 0.0
    %1042 = vmatprep.subr.mxu0 0.0
    %1043 = vmatpush2.msra.mxu0 0.0
    %1044 = vmatprep.subr.mxu0 0.0
    %1045 = vmatpush2.msra.mxu0 0.0
    %1046 = vmatprep.subr.mxu0 0.0
    %1047 = vmatpush2.msra.mxu0 0.0
    %1048 = vmatprep.subr.mxu0 0.0
    %1049 = vmatpush2.msra.mxu0 0.0
    %1050 = vmatprep.subr.mxu0 0.0
    %1051 = vmatpush2.msra.mxu0 0.0
    %1052 = vmatprep.subr.mxu0 0.0
    %1053 = vmatpush2.msra.mxu0 0.0
    %1054 = vmatprep.subr.mxu0 0.0
    %1055 = vmatpush2.msra.mxu0 0.0
    %1056 = vmatprep.subr.mxu0 0.0
    %1057 = vmatpush2.msra.mxu0 0.0
    %1058 = vmatprep.subr.mxu0 0.0
    %1059 = vmatpush2.msra.mxu0 0.0
    %1060 = vmatprep.subr.mxu0 0.0
    %1061 = vmatpush2.msra.mxu0 0.0
    %1062 = vmatprep.subr.mxu0 0.0
    %1063 = vmatpush2.msra.mxu0 0.0
    %1064 = vmatprep.subr.mxu0 0.0
    %1065 = vmatpush2.msra.mxu0 0.0
    %1066 = vmatprep.mubr.f32.mxu0 0.0
    %1067 = vmatmul.mubr.f32.gmra.mxu0 %v1000
    %v1068 = vpop.f32.mrf.mxu0
    %v1069 = vadd.f32 0.0, %v1068
    %v1070 = vpop.f32.mrf.mxu0
    %1071 = vdwg.mxu0
    %1072 = vrot.lane.b32.xlu0 %v152, 48
    %v1073 = vpop.permute.xlu0 %1072
    %v1076 = vsel %vm160, %v995, 0
    %1078 = vmatprep.subr.mxu0 0.0
    %1079 = vmatpush1.msra.mxu0 0.0
    %1080 = vmatprep.subr.mxu0 0.0
    %1081 = vmatpush1.msra.mxu0 0.0
    %1082 = vmatprep.subr.mxu0 0.0
    %1083 = vmatpush1.msra.mxu0 0.0
    %1084 = vmatprep.subr.mxu0 0.0
    %1085 = vmatpush1.msra.mxu0 0.0
    %1086 = vmatprep.subr.mxu0 0.0
    %1087 = vmatpush1.msra.mxu0 0.0
    %1088 = vmatprep.subr.mxu0 0.0
    %1089 = vmatpush1.msra.mxu0 0.0
    %1090 = vmatprep.subr.mxu0 0.0
    %1091 = vmatpush1.msra.mxu0 0.0
    %1092 = vmatprep.subr.mxu0 0.0
    %1093 = vmatpush1.msra.mxu0 0.0
    %1094 = vmatprep.subr.mxu0 0.0
    %1095 = vmatpush1.msra.mxu0 0.0
    %1096 = vmatprep.subr.mxu0 0.0
    %1097 = vmatpush1.msra.mxu0 0.0
    %1098 = vmatprep.subr.mxu0 0.0
    %1099 = vmatpush1.msra.mxu0 0.0
    %1100 = vmatprep.subr.mxu0 0.0
    %1101 = vmatpush1.msra.mxu0 0.0
    %1102 = vmatprep.subr.mxu0 0.0
    %1103 = vmatpush1.msra.mxu0 0.0
    %1104 = vmatprep.subr.mxu0 0.0
    %1105 = vmatpush1.msra.mxu0 0.0
    %1106 = vmatprep.subr.mxu0 0.0
    %1107 = vmatpush1.msra.mxu0 0.0
    %1108 = vmatprep.subr.mxu0 0.0
    %1109 = vmatpush1.msra.mxu0 %v1073
    %1110 = vmatprep.subr.mxu0 0.0
    %1111 = vmatpush2.msra.mxu0 0.0
    %1112 = vmatprep.subr.mxu0 0.0
    %1113 = vmatpush2.msra.mxu0 0.0
    %1114 = vmatprep.subr.mxu0 0.0
    %1115 = vmatpush2.msra.mxu0 0.0
    %1116 = vmatprep.subr.mxu0 0.0
    %1117 = vmatpush2.msra.mxu0 0.0
    %1118 = vmatprep.subr.mxu0 0.0
    %1119 = vmatpush2.msra.mxu0 0.0
    %1120 = vmatprep.subr.mxu0 0.0
    %1121 = vmatpush2.msra.mxu0 0.0
    %1122 = vmatprep.subr.mxu0 0.0
    %1123 = vmatpush2.msra.mxu0 0.0
    %1124 = vmatprep.subr.mxu0 0.0
    %1125 = vmatpush2.msra.mxu0 0.0
    %1126 = vmatprep.subr.mxu0 0.0
    %1127 = vmatpush2.msra.mxu0 0.0
    %1128 = vmatprep.subr.mxu0 0.0
    %1129 = vmatpush2.msra.mxu0 0.0
    %1130 = vmatprep.subr.mxu0 0.0
    %1131 = vmatpush2.msra.mxu0 0.0
    %1132 = vmatprep.subr.mxu0 0.0
    %1133 = vmatpush2.msra.mxu0 0.0
    %1134 = vmatprep.subr.mxu0 0.0
    %1135 = vmatpush2.msra.mxu0 0.0
    %1136 = vmatprep.subr.mxu0 0.0
    %1137 = vmatpush2.msra.mxu0 0.0
    %1138 = vmatprep.subr.mxu0 0.0
    %1139 = vmatpush2.msra.mxu0 0.0
    %1140 = vmatprep.subr.mxu0 0.0
    %1141 = vmatpush2.msra.mxu0 0.0
    %1142 = vmatprep.mubr.f32.mxu0 0.0
    %1143 = vmatmul.mubr.f32.gmra.mxu0 %v1076
    %v1144 = vpop.f32.mrf.mxu0
    %v1145 = vadd.f32 0.0, %v1144
    %v1146 = vpop.f32.mrf.mxu0
    %1147 = vdwg.mxu0
    %1148 = vrot.lane.b32.xlu0 %v155, 104
    %v1149 = vpop.permute.xlu0 %1148
    %1150 = vrot.lane.b32.xlu0 %v147, 72
    %v1151 = vpop.permute.xlu0 %1150
    %v1152 = vsel %vm160, %v1149, 0
    %v1154 = vsel %vm160, %v1151, 0
    %1156 = vmatprep.subr.mxu0 0.0
    %1157 = vmatpush1.xpose.msra.mxu0 0.0
    %1158 = vmatprep.subr.mxu0 0.0
    %1159 = vmatpush1.xpose.msra.mxu0 0.0
    %1160 = vmatprep.subr.mxu0 0.0
    %1161 = vmatpush1.xpose.msra.mxu0 0.0
    %1162 = vmatprep.subr.mxu0 0.0
    %1163 = vmatpush1.xpose.msra.mxu0 0.0
    %1164 = vmatprep.subr.mxu0 0.0
    %1165 = vmatpush1.xpose.msra.mxu0 0.0
    %1166 = vmatprep.subr.mxu0 0.0
    %1167 = vmatpush1.xpose.msra.mxu0 0.0
    %1168 = vmatprep.subr.mxu0 0.0
    %1169 = vmatpush1.xpose.msra.mxu0 0.0
    %1170 = vmatprep.subr.mxu0 0.0
    %1171 = vmatpush1.xpose.msra.mxu0 0.0
    %1172 = vmatprep.subr.mxu0 0.0
    %1173 = vmatpush1.xpose.msra.mxu0 0.0
    %1174 = vmatprep.subr.mxu0 0.0
    %1175 = vmatpush1.xpose.msra.mxu0 0.0
    %1176 = vmatprep.subr.mxu0 0.0
    %1177 = vmatpush1.xpose.msra.mxu0 0.0
    %1178 = vmatprep.subr.mxu0 0.0
    %1179 = vmatpush1.xpose.msra.mxu0 0.0
    %1180 = vmatprep.subr.mxu0 0.0
    %1181 = vmatpush1.xpose.msra.mxu0 0.0
    %1182 = vmatprep.subr.mxu0 0.0
    %1183 = vmatpush1.xpose.msra.mxu0 0.0
    %1184 = vmatprep.subr.mxu0 0.0
    %1185 = vmatpush1.xpose.msra.mxu0 0.0
    %1186 = vmatprep.subr.mxu0 0.0
    %1187 = vmatpush1.xpose.msra.mxu0 %v1154
    %1188 = vmatprep.subr.mxu0 0.0
    %1189 = vmatpush2.xpose.msra.mxu0 0.0
    %1190 = vmatprep.subr.mxu0 0.0
    %1191 = vmatpush2.xpose.msra.mxu0 0.0
    %1192 = vmatprep.subr.mxu0 0.0
    %1193 = vmatpush2.xpose.msra.mxu0 0.0
    %1194 = vmatprep.subr.mxu0 0.0
    %1195 = vmatpush2.xpose.msra.mxu0 0.0
    %1196 = vmatprep.subr.mxu0 0.0
    %1197 = vmatpush2.xpose.msra.mxu0 0.0
    %1198 = vmatprep.subr.mxu0 0.0
    %1199 = vmatpush2.xpose.msra.mxu0 0.0
    %1200 = vmatprep.subr.mxu0 0.0
    %1201 = vmatpush2.xpose.msra.mxu0 0.0
    %1202 = vmatprep.subr.mxu0 0.0
    %1203 = vmatpush2.xpose.msra.mxu0 0.0
    %1204 = vmatprep.subr.mxu0 0.0
    %1205 = vmatpush2.xpose.msra.mxu0 0.0
    %1206 = vmatprep.subr.mxu0 0.0
    %1207 = vmatpush2.xpose.msra.mxu0 0.0
    %1208 = vmatprep.subr.mxu0 0.0
    %1209 = vmatpush2.xpose.msra.mxu0 0.0
    %1210 = vmatprep.subr.mxu0 0.0
    %1211 = vmatpush2.xpose.msra.mxu0 0.0
    %1212 = vmatprep.subr.mxu0 0.0
    %1213 = vmatpush2.xpose.msra.mxu0 0.0
    %1214 = vmatprep.subr.mxu0 0.0
    %1215 = vmatpush2.xpose.msra.mxu0 0.0
    %1216 = vmatprep.subr.mxu0 0.0
    %1217 = vmatpush2.xpose.msra.mxu0 0.0
    %1218 = vmatprep.subr.mxu0 0.0
    %1219 = vmatpush2.xpose.msra.mxu0 0.0
    %1220 = vmatprep.mubr.f32.mxu0 0.0
    %1221 = vmatmul.mubr.f32.gmra.mxu0 %v1152
    %v1222 = vpop.f32.mrf.mxu0
    %v1223 = vadd.f32 0.0, %v1222
    %v1224 = vpop.f32.mrf.mxu0
    %1225 = vdwg.mxu0
    %1226 = vrot.lane.b32.xlu0 %v156, 104
    %v1227 = vpop.permute.xlu0 %1226
    %1228 = vrot.lane.b32.xlu0 %v152, 72
    %v1229 = vpop.permute.xlu0 %1228
    %v1230 = vsel %vm160, %v1227, 0
    %v1232 = vsel %vm160, %v1229, 0
    %1234 = vmatprep.subr.mxu0 0.0
    %1235 = vmatpush1.xpose.msra.mxu0 0.0
    %1236 = vmatprep.subr.mxu0 0.0
    %1237 = vmatpush1.xpose.msra.mxu0 0.0
    %1238 = vmatprep.subr.mxu0 0.0
    %1239 = vmatpush1.xpose.msra.mxu0 0.0
    %1240 = vmatprep.subr.mxu0 0.0
    %1241 = vmatpush1.xpose.msra.mxu0 0.0
    %1242 = vmatprep.subr.mxu0 0.0
    %1243 = vmatpush1.xpose.msra.mxu0 0.0
    %1244 = vmatprep.subr.mxu0 0.0
    %1245 = vmatpush1.xpose.msra.mxu0 0.0
    %1246 = vmatprep.subr.mxu0 0.0
    %1247 = vmatpush1.xpose.msra.mxu0 0.0
    %1248 = vmatprep.subr.mxu0 0.0
    %1249 = vmatpush1.xpose.msra.mxu0 0.0
    %1250 = vmatprep.subr.mxu0 0.0
    %1251 = vmatpush1.xpose.msra.mxu0 0.0
    %1252 = vmatprep.subr.mxu0 0.0
    %1253 = vmatpush1.xpose.msra.mxu0 0.0
    %1254 = vmatprep.subr.mxu0 0.0
    %1255 = vmatpush1.xpose.msra.mxu0 0.0
    %1256 = vmatprep.subr.mxu0 0.0
    %1257 = vmatpush1.xpose.msra.mxu0 0.0
    %1258 = vmatprep.subr.mxu0 0.0
    %1259 = vmatpush1.xpose.msra.mxu0 0.0
    %1260 = vmatprep.subr.mxu0 0.0
    %1261 = vmatpush1.xpose.msra.mxu0 0.0
    %1262 = vmatprep.subr.mxu0 0.0
    %1263 = vmatpush1.xpose.msra.mxu0 0.0
    %1264 = vmatprep.subr.mxu0 0.0
    %1265 = vmatpush1.xpose.msra.mxu0 %v1232
    %1266 = vmatprep.subr.mxu0 0.0
    %1267 = vmatpush2.xpose.msra.mxu0 0.0
    %1268 = vmatprep.subr.mxu0 0.0
    %1269 = vmatpush2.xpose.msra.mxu0 0.0
    %1270 = vmatprep.subr.mxu0 0.0
    %1271 = vmatpush2.xpose.msra.mxu0 0.0
    %1272 = vmatprep.subr.mxu0 0.0
    %1273 = vmatpush2.xpose.msra.mxu0 0.0
    %1274 = vmatprep.subr.mxu0 0.0
    %1275 = vmatpush2.xpose.msra.mxu0 0.0
    %1276 = vmatprep.subr.mxu0 0.0
    %1277 = vmatpush2.xpose.msra.mxu0 0.0
    %1278 = vmatprep.subr.mxu0 0.0
    %1279 = vmatpush2.xpose.msra.mxu0 0.0
    %1280 = vmatprep.subr.mxu0 0.0
    %1281 = vmatpush2.xpose.msra.mxu0 0.0
    %1282 = vmatprep.subr.mxu0 0.0
    %1283 = vmatpush2.xpose.msra.mxu0 0.0
    %1284 = vmatprep.subr.mxu0 0.0
    %1285 = vmatpush2.xpose.msra.mxu0 0.0
    %1286 = vmatprep.subr.mxu0 0.0
    %1287 = vmatpush2.xpose.msra.mxu0 0.0
    %1288 = vmatprep.subr.mxu0 0.0
    %1289 = vmatpush2.xpose.msra.mxu0 0.0
    %1290 = vmatprep.subr.mxu0 0.0
    %1291 = vmatpush2.xpose.msra.mxu0 0.0
    %1292 = vmatprep.subr.mxu0 0.0
    %1293 = vmatpush2.xpose.msra.mxu0 0.0
    %1294 = vmatprep.subr.mxu0 0.0
    %1295 = vmatpush2.xpose.msra.mxu0 0.0
    %1296 = vmatprep.subr.mxu0 0.0
    %1297 = vmatpush2.xpose.msra.mxu0 0.0
    %1298 = vmatprep.mubr.f32.mxu0 0.0
    %1299 = vmatmul.mubr.f32.gmra.mxu0 %v1230
    %v1300 = vpop.f32.mrf.mxu0
    %v1301 = vadd.f32 0.0, %v1300
    %v1302 = vpop.f32.mrf.mxu0
    %1303 = vdwg.mxu0
    %v1304 = vsel %vm160, %v1223, -inf
    %1305 = vmax.xlane.f32.xlu0 %v1304
    %v1306 = vpop.xlane.xlu0 %1305
    %v1307 = vsel %vm160, %v1301, -inf
    %1308 = vmax.xlane.f32.xlu0 %v1307
    %v1309 = vpop.xlane.xlu0 %1308
    %v1310 = vsub.f32 %v1223, %v1306
    %v1311 = vsub.f32 %v1301, %v1309
    %v1312 = vmul.f32 %v1310, 1.442695
    %v1313 = vpow.pop %v1312
    %v1314 = vmul.f32 %v1311, 1.442695
    %v1315 = vpow.pop %v1314
    %v1316 = vsel %vm160, %v1313, 0.0
    %1317 = vadd.xlane.f32.xlu0 %v1316
    %v1318 = vpop.xlane.xlu0 %1317
    %v1319 = vsel %vm160, %v1315, 0.0
    %1320 = vadd.xlane.f32.xlu0 %v1319
    %v1321 = vpop.xlane.xlu0 %1320
    %v1322 = vrcp.pop %v1318
    %v1323 = vrcp.pop %v1321
    %v1324 = vmul.f32 %v1313, %v1322
    %v1325 = vmul.f32 %v1315, %v1323
    %1326 = vrot.lane.b32.xlu0 %v147, 40
    %v1327 = vpop.permute.xlu0 %1326
    %v1330 = vsel %vm160, %v1324, 0
    %1332 = vmatprep.subr.mxu0 0.0
    %1333 = vmatpush1.msra.mxu0 0.0
    %1334 = vmatprep.subr.mxu0 0.0
    %1335 = vmatpush1.msra.mxu0 0.0
    %1336 = vmatprep.subr.mxu0 0.0
    %1337 = vmatpush1.msra.mxu0 0.0
    %1338 = vmatprep.subr.mxu0 0.0
    %1339 = vmatpush1.msra.mxu0 0.0
    %1340 = vmatprep.subr.mxu0 0.0
    %1341 = vmatpush1.msra.mxu0 0.0
    %1342 = vmatprep.subr.mxu0 0.0
    %1343 = vmatpush1.msra.mxu0 0.0
    %1344 = vmatprep.subr.mxu0 0.0
    %1345 = vmatpush1.msra.mxu0 0.0
    %1346 = vmatprep.subr.mxu0 0.0
    %1347 = vmatpush1.msra.mxu0 0.0
    %1348 = vmatprep.subr.mxu0 0.0
    %1349 = vmatpush1.msra.mxu0 0.0
    %1350 = vmatprep.subr.mxu0 0.0
    %1351 = vmatpush1.msra.mxu0 0.0
    %1352 = vmatprep.subr.mxu0 0.0
    %1353 = vmatpush1.msra.mxu0 0.0
    %1354 = vmatprep.subr.mxu0 0.0
    %1355 = vmatpush1.msra.mxu0 0.0
    %1356 = vmatprep.subr.mxu0 0.0
    %1357 = vmatpush1.msra.mxu0 0.0
    %1358 = vmatprep.subr.mxu0 0.0
    %1359 = vmatpush1.msra.mxu0 0.0
    %1360 = vmatprep.subr.mxu0 0.0
    %1361 = vmatpush1.msra.mxu0 0.0
    %1362 = vmatprep.subr.mxu0 0.0
    %1363 = vmatpush1.msra.mxu0 %v1327
    %1364 = vmatprep.subr.mxu0 0.0
    %1365 = vmatpush2.msra.mxu0 0.0
    %1366 = vmatprep.subr.mxu0 0.0
    %1367 = vmatpush2.msra.mxu0 0.0
    %1368 = vmatprep.subr.mxu0 0.0
    %1369 = vmatpush2.msra.mxu0 0.0
    %1370 = vmatprep.subr.mxu0 0.0
    %1371 = vmatpush2.msra.mxu0 0.0
    %1372 = vmatprep.subr.mxu0 0.0
    %1373 = vmatpush2.msra.mxu0 0.0
    %1374 = vmatprep.subr.mxu0 0.0
    %1375 = vmatpush2.msra.mxu0 0.0
    %1376 = vmatprep.subr.mxu0 0.0
    %1377 = vmatpush2.msra.mxu0 0.0
    %1378 = vmatprep.subr.mxu0 0.0
    %1379 = vmatpush2.msra.mxu0 0.0
    %1380 = vmatprep.subr.mxu0 0.0
    %1381 = vmatpush2.msra.mxu0 0.0
    %1382 = vmatprep.subr.mxu0 0.0
    %1383 = vmatpush2.msra.mxu0 0.0
    %1384 = vmatprep.subr.mxu0 0.0
    %1385 = vmatpush2.msra.mxu0 0.0
    %1386 = vmatprep.subr.mxu0 0.0
    %1387 = vmatpush2.msra.mxu0 0.0
    %1388 = vmatprep.subr.mxu0 0.0
    %1389 = vmatpush2.msra.mxu0 0.0
    %1390 = vmatprep.subr.mxu0 0.0
    %1391 = vmatpush2.msra.mxu0 0.0
    %1392 = vmatprep.subr.mxu0 0.0
    %1393 = vmatpush2.msra.mxu0 0.0
    %1394 = vmatprep.subr.mxu0 0.0
    %1395 = vmatpush2.msra.mxu0 0.0
    %1396 = vmatprep.mubr.f32.mxu0 0.0
    %1397 = vmatmul.mubr.f32.gmra.mxu0 %v1330
    %v1398 = vpop.f32.mrf.mxu0
    %v1399 = vadd.f32 0.0, %v1398
    %v1400 = vpop.f32.mrf.mxu0
    %1401 = vdwg.mxu0
    %1402 = vrot.lane.b32.xlu0 %v152, 40
    %v1403 = vpop.permute.xlu0 %1402
    %v1406 = vsel %vm160, %v1325, 0
    %1408 = vmatprep.subr.mxu0 0.0
    %1409 = vmatpush1.msra.mxu0 0.0
    %1410 = vmatprep.subr.mxu0 0.0
    %1411 = vmatpush1.msra.mxu0 0.0
    %1412 = vmatprep.subr.mxu0 0.0
    %1413 = vmatpush1.msra.mxu0 0.0
    %1414 = vmatprep.subr.mxu0 0.0
    %1415 = vmatpush1.msra.mxu0 0.0
    %1416 = vmatprep.subr.mxu0 0.0
    %1417 = vmatpush1.msra.mxu0 0.0
    %1418 = vmatprep.subr.mxu0 0.0
    %1419 = vmatpush1.msra.mxu0 0.0
    %1420 = vmatprep.subr.mxu0 0.0
    %1421 = vmatpush1.msra.mxu0 0.0
    %1422 = vmatprep.subr.mxu0 0.0
    %1423 = vmatpush1.msra.mxu0 0.0
    %1424 = vmatprep.subr.mxu0 0.0
    %1425 = vmatpush1.msra.mxu0 0.0
    %1426 = vmatprep.subr.mxu0 0.0
    %1427 = vmatpush1.msra.mxu0 0.0
    %1428 = vmatprep.subr.mxu0 0.0
    %1429 = vmatpush1.msra.mxu0 0.0
    %1430 = vmatprep.subr.mxu0 0.0
    %1431 = vmatpush1.msra.mxu0 0.0
    %1432 = vmatprep.subr.mxu0 0.0
    %1433 = vmatpush1.msra.mxu0 0.0
    %1434 = vmatprep.subr.mxu0 0.0
    %1435 = vmatpush1.msra.mxu0 0.0
    %1436 = vmatprep.subr.mxu0 0.0
    %1437 = vmatpush1.msra.mxu0 0.0
    %1438 = vmatprep.subr.mxu0 0.0
    %1439 = vmatpush1.msra.mxu0 %v1403
    %1440 = vmatprep.subr.mxu0 0.0
    %1441 = vmatpush2.msra.mxu0 0.0
    %1442 = vmatprep.subr.mxu0 0.0
    %1443 = vmatpush2.msra.mxu0 0.0
    %1444 = vmatprep.subr.mxu0 0.0
    %1445 = vmatpush2.msra.mxu0 0.0
    %1446 = vmatprep.subr.mxu0 0.0
    %1447 = vmatpush2.msra.mxu0 0.0
    %1448 = vmatprep.subr.mxu0 0.0
    %1449 = vmatpush2.msra.mxu0 0.0
    %1450 = vmatprep.subr.mxu0 0.0
    %1451 = vmatpush2.msra.mxu0 0.0
    %1452 = vmatprep.subr.mxu0 0.0
    %1453 = vmatpush2.msra.mxu0 0.0
    %1454 = vmatprep.subr.mxu0 0.0
    %1455 = vmatpush2.msra.mxu0 0.0
    %1456 = vmatprep.subr.mxu0 0.0
    %1457 = vmatpush2.msra.mxu0 0.0
    %1458 = vmatprep.subr.mxu0 0.0
    %1459 = vmatpush2.msra.mxu0 0.0
    %1460 = vmatprep.subr.mxu0 0.0
    %1461 = vmatpush2.msra.mxu0 0.0
    %1462 = vmatprep.subr.mxu0 0.0
    %1463 = vmatpush2.msra.mxu0 0.0
    %1464 = vmatprep.subr.mxu0 0.0
    %1465 = vmatpush2.msra.mxu0 0.0
    %1466 = vmatprep.subr.mxu0 0.0
    %1467 = vmatpush2.msra.mxu0 0.0
    %1468 = vmatprep.subr.mxu0 0.0
    %1469 = vmatpush2.msra.mxu0 0.0
    %1470 = vmatprep.subr.mxu0 0.0
    %1471 = vmatpush2.msra.mxu0 0.0
    %1472 = vmatprep.mubr.f32.mxu0 0.0
    %1473 = vmatmul.mubr.f32.gmra.mxu0 %v1406
    %v1474 = vpop.f32.mrf.mxu0
    %v1475 = vadd.f32 0.0, %v1474
    %v1476 = vpop.f32.mrf.mxu0
    %1477 = vdwg.mxu0
    %1480 = vrot.lane.b32.xlu0 %v739, 8
    %v1481 = vpop.permute.xlu0 %1480
    %1482 = vrot.lane.b32.xlu0 %v815, 8
    %v1483 = vpop.permute.xlu0 %1482
    %1488 = vrot.lane.b32.xlu0 %v1069, 16
    %v1489 = vpop.permute.xlu0 %1488
    %1490 = vrot.lane.b32.xlu0 %v1145, 16
    %v1491 = vpop.permute.xlu0 %1490
    %1496 = vrot.lane.b32.xlu0 %v1399, 24
    %v1497 = vpop.permute.xlu0 %1496
    %1498 = vrot.lane.b32.xlu0 %v1475, 24
    %v1499 = vpop.permute.xlu0 %1498
    %v1502 = vsel %vm160, %v409, %v1481
    %v1503 = vsel %vm160, %v485, %v1483
    %vm1504 = vcmask 130048
    %v1505 = vsel %vm1504, %v1502, %v1489
    %v1506 = vsel %vm1504, %v1503, %v1491
    %vm1507 = vcmask 195584
    %v1508 = vsel %vm1507, %v1505, %v1497
    %v1509 = vsel %vm1507, %v1506, %v1499
    %v1510 = vlaneseq
    %v1511 = vshrl.u32 %v1510, 7
    %v1512 = vsub.s32 1, %v1511
    %v1513 = vrot.slane %v55, %v1512
    %v1515 = vsel %vm66, %v1508, 0
    %v1518 = vsel %vm66, %v1509, 0
    %1520 = vmatprep.subr.mxu0 0.0
    %1521 = vmatpush1.msra.mxu0 0.0
    %1522 = vmatprep.subr.mxu0 0.0
    %1523 = vmatpush1.msra.mxu0 0.0
    %1524 = vmatprep.subr.mxu0 0.0
    %1525 = vmatpush1.msra.mxu0 0.0
    %1526 = vmatprep.subr.mxu0 0.0
    %1527 = vmatpush1.msra.mxu0 0.0
    %1528 = vmatprep.subr.mxu0 0.0
    %1529 = vmatpush1.msra.mxu0 0.0
    %1530 = vmatprep.subr.mxu0 0.0
    %1531 = vmatpush1.msra.mxu0 0.0
    %1532 = vmatprep.subr.mxu0 0.0
    %1533 = vmatpush1.msra.mxu0 0.0
    %1534 = vmatprep.subr.mxu0 0.0
    %1535 = vmatpush1.msra.mxu0 0.0
    %1536 = vmatprep.subr.mxu0 0.0
    %1537 = vmatpush1.msra.mxu0 0.0
    %1538 = vmatprep.subr.mxu0 0.0
    %1539 = vmatpush1.msra.mxu0 0.0
    %1540 = vmatprep.subr.mxu0 0.0
    %1541 = vmatpush1.msra.mxu0 0.0
    %1542 = vmatprep.subr.mxu0 0.0
    %1543 = vmatpush1.msra.mxu0 0.0
    %1544 = vmatprep.subr.mxu0 0.0
    %1545 = vmatpush1.msra.mxu0 %v42
    %1546 = vmatprep.subr.mxu0 0.0
    %1547 = vmatpush1.msra.mxu0 %v41
    %1548 = vmatprep.subr.mxu0 0.0
    %1549 = vmatpush1.msra.mxu0 %v40
    %1550 = vmatprep.subr.mxu0 0.0
    %1551 = vmatpush1.msra.mxu0 %v39
    %1552 = vmatprep.subr.mxu0 0.0
    %1553 = vmatpush2.msra.mxu0 0.0
    %1554 = vmatprep.subr.mxu0 0.0
    %1555 = vmatpush2.msra.mxu0 0.0
    %1556 = vmatprep.subr.mxu0 0.0
    %1557 = vmatpush2.msra.mxu0 0.0
    %1558 = vmatprep.subr.mxu0 0.0
    %1559 = vmatpush2.msra.mxu0 0.0
    %1560 = vmatprep.subr.mxu0 0.0
    %1561 = vmatpush2.msra.mxu0 0.0
    %1562 = vmatprep.subr.mxu0 0.0
    %1563 = vmatpush2.msra.mxu0 0.0
    %1564 = vmatprep.subr.mxu0 0.0
    %1565 = vmatpush2.msra.mxu0 0.0
    %1566 = vmatprep.subr.mxu0 0.0
    %1567 = vmatpush2.msra.mxu0 0.0
    %1568 = vmatprep.subr.mxu0 0.0
    %1569 = vmatpush2.msra.mxu0 0.0
    %1570 = vmatprep.subr.mxu0 0.0
    %1571 = vmatpush2.msra.mxu0 0.0
    %1572 = vmatprep.subr.mxu0 0.0
    %1573 = vmatpush2.msra.mxu0 0.0
    %1574 = vmatprep.subr.mxu0 0.0
    %1575 = vmatpush2.msra.mxu0 0.0
    %1576 = vmatprep.subr.mxu0 0.0
    %1577 = vmatpush2.msra.mxu0 0.0
    %1578 = vmatprep.subr.mxu0 0.0
    %1579 = vmatpush2.msra.mxu0 0.0
    %1580 = vmatprep.subr.mxu0 0.0
    %1581 = vmatpush2.msra.mxu0 0.0
    %1582 = vmatprep.subr.mxu0 0.0
    %1583 = vmatpush2.msra.mxu0 0.0
    %1584 = vmatprep.mubr.f32.mxu0 0.0
    %1585 = vmatmul.mubr.f32.gmra.mxu0 %v1515
    %v1586 = vpop.f32.mrf.mxu0
    %v1587 = vadd.f32 %v1513, %v1586
    %v1588 = vpop.f32.mrf.mxu0
    %1589 = vmatprep.mubr.f32.mxu0 0.0
    %1590 = vmatmul.mubr.f32.gmra.mxu0 %v1518
    %v1591 = vpop.f32.mrf.mxu0
    %v1592 = vadd.f32 %v1513, %v1591
    %v1593 = vpop.f32.mrf.mxu0
    %1594 = vdwg.mxu0
    %v1595 = vadd.f32 %v28, %v1587
    %v1596 = vadd.f32 %v29, %v1592
    %v1597 = vsel %vm66, %v1595, 0.0
    %1598 = vadd.xlane.f32.xlu0 %v1597
    %v1599 = vpop.xlane.xlu0 %1598
    %v1600 = vsel %vm66, %v1596, 0.0
    %1601 = vadd.xlane.f32.xlu0 %v1600
    %v1602 = vpop.xlane.xlu0 %1601
    %v1603 = vrcp.pop 32.0
    %v1604 = vmul.f32 %v1599, %v1603
    %v1605 = vmul.f32 %v1602, %v1603
    %v1606 = vsub.f32 %v1595, %v1604
    %v1607 = vsub.f32 %v1596, %v1605
    %v1608 = vmul.f32 %v1606, %v1606
    %v1609 = vmul.f32 %v1607, %v1607
    %v1610 = vsel %vm66, %v1608, 0.0
    %1611 = vadd.xlane.f32.xlu0 %v1610
    %v1612 = vpop.xlane.xlu0 %1611
    %v1613 = vsel %vm66, %v1609, 0.0
    %1614 = vadd.xlane.f32.xlu0 %v1613
    %v1615 = vpop.xlane.xlu0 %1614
    %v1616 = vmul.f32 %v1612, %v1603
    %v1617 = vmul.f32 %v1615, %v1603
    %v1618 = vadd.f32 %v1616, 1e-05
    %v1619 = vadd.f32 %v1617, 1e-05
    %v1620 = vrsqrt.pop %v1618
    %v1621 = vrsqrt.pop %v1619
    %v1622 = vmul.f32 %v1606, %v1620
    %v1623 = vmul.f32 %v1607, %v1621
    %v1624 = vlaneseq
    %v1625 = vshrl.u32 %v1624, 7
    %v1626 = vsub.s32 2, %v1625
    %v1627 = vrot.slane %v55, %v1626
    %v1628 = vmul.f32 %v1622, %v1627
    %v1629 = vmul.f32 %v1623, %v1627
    %v1630 = vlaneseq
    %v1631 = vshrl.u32 %v1630, 7
    %v1632 = vsub.s32 3, %v1631
    %v1633 = vrot.slane %v55, %v1632
    %v1634 = vadd.f32 %v1628, %v1633
    %v1635 = vadd.f32 %v1629, %v1633
    %v1636 = vlaneseq
    %v1637 = vshrl.u32 %v1636, 7
    %v1638 = vsub.s32 4, %v1637
    %v1639 = vrot.slane %v55, %v1638
    %v1641 = vsel %vm66, %v1634, 0
    %v1644 = vsel %vm66, %v1635, 0
    %1646 = vmatprep.subr.mxu0 0.0
    %1647 = vmatpush1.msra.mxu0 0.0
    %1648 = vmatprep.subr.mxu0 0.0
    %1649 = vmatpush1.msra.mxu0 0.0
    %1650 = vmatprep.subr.mxu0 0.0
    %1651 = vmatpush1.msra.mxu0 0.0
    %1652 = vmatprep.subr.mxu0 0.0
    %1653 = vmatpush1.msra.mxu0 0.0
    %1654 = vmatprep.subr.mxu0 0.0
    %1655 = vmatpush1.msra.mxu0 0.0
    %1656 = vmatprep.subr.mxu0 0.0
    %1657 = vmatpush1.msra.mxu0 0.0
    %1658 = vmatprep.subr.mxu0 0.0
    %1659 = vmatpush1.msra.mxu0 0.0
    %1660 = vmatprep.subr.mxu0 0.0
    %1661 = vmatpush1.msra.mxu0 0.0
    %1662 = vmatprep.subr.mxu0 0.0
    %1663 = vmatpush1.msra.mxu0 0.0
    %1664 = vmatprep.subr.mxu0 0.0
    %1665 = vmatpush1.msra.mxu0 0.0
    %1666 = vmatprep.subr.mxu0 0.0
    %1667 = vmatpush1.msra.mxu0 0.0
    %1668 = vmatprep.subr.mxu0 0.0
    %1669 = vmatpush1.msra.mxu0 0.0
    %1670 = vmatprep.subr.mxu0 0.0
    %1671 = vmatpush1.msra.mxu0 %v46
    %1672 = vmatprep.subr.mxu0 0.0
    %1673 = vmatpush1.msra.mxu0 %v45
    %1674 = vmatprep.subr.mxu0 0.0
    %1675 = vmatpush1.msra.mxu0 %v44
    %1676 = vmatprep.subr.mxu0 0.0
    %1677 = vmatpush1.msra.mxu0 %v43
    %1678 = vmatprep.subr.mxu0 0.0
    %1679 = vmatpush2.msra.mxu0 0.0
    %1680 = vmatprep.subr.mxu0 0.0
    %1681 = vmatpush2.msra.mxu0 0.0
    %1682 = vmatprep.subr.mxu0 0.0
    %1683 = vmatpush2.msra.mxu0 0.0
    %1684 = vmatprep.subr.mxu0 0.0
    %1685 = vmatpush2.msra.mxu0 0.0
    %1686 = vmatprep.subr.mxu0 0.0
    %1687 = vmatpush2.msra.mxu0 0.0
    %1688 = vmatprep.subr.mxu0 0.0
    %1689 = vmatpush2.msra.mxu0 0.0
    %1690 = vmatprep.subr.mxu0 0.0
    %1691 = vmatpush2.msra.mxu0 0.0
    %1692 = vmatprep.subr.mxu0 0.0
    %1693 = vmatpush2.msra.mxu0 0.0
    %1694 = vmatprep.subr.mxu0 0.0
    %1695 = vmatpush2.msra.mxu0 0.0
    %1696 = vmatprep.subr.mxu0 0.0
    %1697 = vmatpush2.msra.mxu0 0.0
    %1698 = vmatprep.subr.mxu0 0.0
    %1699 = vmatpush2.msra.mxu0 0.0
    %1700 = vmatprep.subr.mxu0 0.0
    %1701 = vmatpush2.msra.mxu0 0.0
    %1702 = vmatprep.subr.mxu0 0.0
    %1703 = vmatpush2.msra.mxu0 0.0
    %1704 = vmatprep.subr.mxu0 0.0
    %1705 = vmatpush2.msra.mxu0 0.0
    %1706 = vmatprep.subr.mxu0 0.0
    %1707 = vmatpush2.msra.mxu0 0.0
    %1708 = vmatprep.subr.mxu0 0.0
    %1709 = vmatpush2.msra.mxu0 0.0
    %1710 = vmatprep.mubr.f32.mxu0 0.0
    %1711 = vmatmul.mubr.f32.gmra.mxu0 %v1641
    %v1712 = vpop.f32.mrf.mxu0
    %v1713 = vadd.f32 %v1639, %v1712
    %v1714 = vpop.f32.mrf.mxu0
    %1715 = vmatprep.mubr.f32.mxu0 0.0
    %1716 = vmatmul.mubr.f32.gmra.mxu0 %v1644
    %v1717 = vpop.f32.mrf.mxu0
    %v1718 = vadd.f32 %v1639, %v1717
    %v1719 = vpop.f32.mrf.mxu0
    %1720 = vdwg.mxu0
    %v1721 = vmax.f32 %v1713, 0.0
    %v1722 = vmax.f32 %v1718, 0.0
    %v1723 = vlaneseq
    %v1724 = vshrl.u32 %v1723, 7
    %v1725 = vsub.s32 5, %v1724
    %v1726 = vrot.slane %v55, %v1725
    %v1728 = vsel %vm73, %v1721, 0
    %v1731 = vsel %vm73, %v1722, 0
    %1733 = vmatprep.subr.mxu0 0.0
    %1734 = vmatpush1.msra.mxu0 0.0
    %1735 = vmatprep.subr.mxu0 0.0
    %1736 = vmatpush1.msra.mxu0 0.0
    %1737 = vmatprep.subr.mxu0 0.0
    %1738 = vmatpush1.msra.mxu0 0.0
    %1739 = vmatprep.subr.mxu0 0.0
    %1740 = vmatpush1.msra.mxu0 0.0
    %1741 = vmatprep.subr.mxu0 0.0
    %1742 = vmatpush1.msra.mxu0 0.0
    %1743 = vmatprep.subr.mxu0 0.0
    %1744 = vmatpush1.msra.mxu0 0.0
    %1745 = vmatprep.subr.mxu0 0.0
    %1746 = vmatpush1.msra.mxu0 0.0
    %1747 = vmatprep.subr.mxu0 0.0
    %1748 = vmatpush1.msra.mxu0 0.0
    %1749 = vmatprep.subr.mxu0 0.0
    %1750 = vmatpush1.msra.mxu0 %v54
    %1751 = vmatprep.subr.mxu0 0.0
    %1752 = vmatpush1.msra.mxu0 %v53
    %1753 = vmatprep.subr.mxu0 0.0
    %1754 = vmatpush1.msra.mxu0 %v52
    %1755 = vmatprep.subr.mxu0 0.0
    %1756 = vmatpush1.msra.mxu0 %v51
    %1757 = vmatprep.subr.mxu0 0.0
    %1758 = vmatpush1.msra.mxu0 %v50
    %1759 = vmatprep.subr.mxu0 0.0
    %1760 = vmatpush1.msra.mxu0 %v49
    %1761 = vmatprep.subr.mxu0 0.0
    %1762 = vmatpush1.msra.mxu0 %v48
    %1763 = vmatprep.subr.mxu0 0.0
    %1764 = vmatpush1.msra.mxu0 %v47
    %1765 = vmatprep.subr.mxu0 0.0
    %1766 = vmatpush2.msra.mxu0 0.0
    %1767 = vmatprep.subr.mxu0 0.0
    %1768 = vmatpush2.msra.mxu0 0.0
    %1769 = vmatprep.subr.mxu0 0.0
    %1770 = vmatpush2.msra.mxu0 0.0
    %1771 = vmatprep.subr.mxu0 0.0
    %1772 = vmatpush2.msra.mxu0 0.0
    %1773 = vmatprep.subr.mxu0 0.0
    %1774 = vmatpush2.msra.mxu0 0.0
    %1775 = vmatprep.subr.mxu0 0.0
    %1776 = vmatpush2.msra.mxu0 0.0
    %1777 = vmatprep.subr.mxu0 0.0
    %1778 = vmatpush2.msra.mxu0 0.0
    %1779 = vmatprep.subr.mxu0 0.0
    %1780 = vmatpush2.msra.mxu0 0.0
    %1781 = vmatprep.subr.mxu0 0.0
    %1782 = vmatpush2.msra.mxu0 0.0
    %1783 = vmatprep.subr.mxu0 0.0
    %1784 = vmatpush2.msra.mxu0 0.0
    %1785 = vmatprep.subr.mxu0 0.0
    %1786 = vmatpush2.msra.mxu0 0.0
    %1787 = vmatprep.subr.mxu0 0.0
    %1788 = vmatpush2.msra.mxu0 0.0
    %1789 = vmatprep.subr.mxu0 0.0
    %1790 = vmatpush2.msra.mxu0 0.0
    %1791 = vmatprep.subr.mxu0 0.0
    %1792 = vmatpush2.msra.mxu0 0.0
    %1793 = vmatprep.subr.mxu0 0.0
    %1794 = vmatpush2.msra.mxu0 0.0
    %1795 = vmatprep.subr.mxu0 0.0
    %1796 = vmatpush2.msra.mxu0 0.0
    %1797 = vmatprep.mubr.f32.mxu0 0.0
    %1798 = vmatmul.mubr.f32.gmra.mxu0 %v1728
    %v1799 = vpop.f32.mrf.mxu0
    %v1800 = vadd.f32 %v1726, %v1799
    %v1801 = vpop.f32.mrf.mxu0
    %1802 = vmatprep.mubr.f32.mxu0 0.0
    %1803 = vmatmul.mubr.f32.gmra.mxu0 %v1731
    %v1804 = vpop.f32.mrf.mxu0
    %v1805 = vadd.f32 %v1726, %v1804
    %v1806 = vpop.f32.mrf.mxu0
    %1807 = vdwg.mxu0
    %v1808 = vadd.f32 %v1634, %v1800
    %v1809 = vadd.f32 %v1635, %v1805
    %v1810 = vsel %vm66, %v1808, 0.0
    %1811 = vadd.xlane.f32.xlu0 %v1810
    %v1812 = vpop.xlane.xlu0 %1811
    %v1813 = vsel %vm66, %v1809, 0.0
    %1814 = vadd.xlane.f32.xlu0 %v1813
    %v1815 = vpop.xlane.xlu0 %1814
    %v1816 = vmul.f32 %v1812, %v1603
    %v1817 = vmul.f32 %v1815, %v1603
    %v1818 = vsub.f32 %v1808, %v1816
    %v1819 = vsub.f32 %v1809, %v1817
    %v1820 = vmul.f32 %v1818, %v1818
    %v1821 = vmul.f32 %v1819, %v1819
    %v1822 = vsel %vm66, %v1820, 0.0
    %1823 = vadd.xlane.f32.xlu0 %v1822
    %v1824 = vpop.xlane.xlu0 %1823
    %v1825 = vsel %vm66, %v1821, 0.0
    %1826 = vadd.xlane.f32.xlu0 %v1825
    %v1827 = vpop.xlane.xlu0 %1826
    %v1828 = vmul.f32 %v1824, %v1603
    %v1829 = vmul.f32 %v1827, %v1603
    %v1830 = vadd.f32 %v1828, 1e-05
    %v1831 = vadd.f32 %v1829, 1e-05
    %v1832 = vrsqrt.pop %v1830
    %v1833 = vrsqrt.pop %v1831
    %v1834 = vmul.f32 %v1818, %v1832
    %v1835 = vmul.f32 %v1819, %v1833
    %v1836 = vlaneseq
    %v1837 = vshrl.u32 %v1836, 7
    %v1838 = vsub.s32 6, %v1837
    %v1839 = vrot.slane %v55, %v1838
    %v1840 = vmul.f32 %v1834, %v1839
    %v1841 = vmul.f32 %v1835, %v1839
    %v1842 = vlaneseq
    %v1843 = vshrl.u32 %v1842, 7
    %v1844 = vsub.s32 7, %v1843
    %v1845 = vrot.slane %v55, %v1844
    %v1846 = vadd.f32 %v1840, %v1845
    %v1847 = vadd.f32 %v1841, %v1845
    %v1848 = vld [vmem:[#allocation2 + $0xc8] sm:$0xff]
    %v1849 = vld [vmem:[#allocation2 + $0xd0] sm:$0xff]
    %v1850 = vld [vmem:[#allocation2 + $0xd8] sm:$0xff]
    %v1851 = vld [vmem:[#allocation2 + $0xe0] sm:$0xff]
    %v1852 = vld [vmem:[#allocation2 + $0xe8] sm:$0xff]
    %v1853 = vld [vmem:[#allocation2 + $0xf0] sm:$0xff]
    %v1854 = vld [vmem:[#allocation2 + $0xf8] sm:$0xff]
    %v1855 = vld [vmem:[#allocation2 + $0x100] sm:$0xff]
    %v1856 = vld [vmem:[#allocation2 + $0x108] sm:$0xff]
    %v1857 = vld [vmem:[#allocation2 + $0x110] sm:$0xff]
    %v1858 = vld [vmem:[#allocation2 + $0x118] sm:$0xff]
    %v1859 = vld [vmem:[#allocation2 + $0x120] sm:$0xff]
    %v1860 = vld [vmem:[#allocation2 + $0x128] sm:$0xff]
    %v1861 = vld [vmem:[#allocation2 + $0x130] sm:$0xff]
    %v1862 = vld [vmem:[#allocation2 + $0x138] sm:$0xff]
    %v1863 = vld [vmem:[#allocation2 + $0x140] sm:$0xff]
    %v1864 = vld [vmem:[#allocation2 + $0x148] sm:$0xff]
    %v1865 = vld [vmem:[#allocation2 + $0x150] sm:$0xff]
    %v1866 = vld [vmem:[#allocation2 + $0x158] sm:$0xff]
    %v1867 = vld [vmem:[#allocation2 + $0x160] sm:$0xff]
    %v1868 = vld [vmem:[#allocation2 + $0x168] sm:$0xff]
    %v1869 = vld [vmem:[#allocation2 + $0x170] sm:$0xff]
    %v1870 = vld [vmem:[#allocation2 + $0x178] sm:$0xff]
    %v1871 = vld [vmem:[#allocation2 + $0x180] sm:$0xff]
    %v1872 = vld [vmem:[#allocation2 + $0x188] sm:$0xff]
    %v1873 = vadd.f32 %v1846, %v30
    %v1874 = vadd.f32 %v1847, %v30
    %1877 = vrot.lane.b32.xlu0 %v1846, 32
    %v1878 = vpop.permute.xlu0 %1877
    %1879 = vrot.lane.b32.xlu0 %v1847, 32
    %v1880 = vpop.permute.xlu0 %1879
    %v1883 = vsel %vm66, %v1873, %v1878
    %v1884 = vsel %vm66, %v1874, %v1880
    %v1885 = vlaneseq
    %v1886 = vshrl.u32 %v1885, 7
    %v1887 = vsub.s32 0, %v1886
    %v1888 = vrot.slane %v1872, %v1887
    %v1890 = vsel %vm73, %v1883, 0
    %v1893 = vsel %vm73, %v1884, 0
    %1895 = vmatprep.subr.mxu0 0.0
    %1896 = vmatpush1.msra.mxu0 0.0
    %1897 = vmatprep.subr.mxu0 0.0
    %1898 = vmatpush1.msra.mxu0 0.0
    %1899 = vmatprep.subr.mxu0 0.0
    %1900 = vmatpush1.msra.mxu0 0.0
    %1901 = vmatprep.subr.mxu0 0.0
    %1902 = vmatpush1.msra.mxu0 0.0
    %1903 = vmatprep.subr.mxu0 0.0
    %1904 = vmatpush1.msra.mxu0 0.0
    %1905 = vmatprep.subr.mxu0 0.0
    %1906 = vmatpush1.msra.mxu0 0.0
    %1907 = vmatprep.subr.mxu0 0.0
    %1908 = vmatpush1.msra.mxu0 0.0
    %1909 = vmatprep.subr.mxu0 0.0
    %1910 = vmatpush1.msra.mxu0 0.0
    %1911 = vmatprep.subr.mxu0 0.0
    %1912 = vmatpush1.msra.mxu0 %v1855
    %1913 = vmatprep.subr.mxu0 0.0
    %1914 = vmatpush1.msra.mxu0 %v1854
    %1915 = vmatprep.subr.mxu0 0.0
    %1916 = vmatpush1.msra.mxu0 %v1853
    %1917 = vmatprep.subr.mxu0 0.0
    %1918 = vmatpush1.msra.mxu0 %v1852
    %1919 = vmatprep.subr.mxu0 0.0
    %1920 = vmatpush1.msra.mxu0 %v1851
    %1921 = vmatprep.subr.mxu0 0.0
    %1922 = vmatpush1.msra.mxu0 %v1850
    %1923 = vmatprep.subr.mxu0 0.0
    %1924 = vmatpush1.msra.mxu0 %v1849
    %1925 = vmatprep.subr.mxu0 0.0
    %1926 = vmatpush1.msra.mxu0 %v1848
    %1927 = vmatprep.subr.mxu0 0.0
    %1928 = vmatpush2.msra.mxu0 0.0
    %1929 = vmatprep.subr.mxu0 0.0
    %1930 = vmatpush2.msra.mxu0 0.0
    %1931 = vmatprep.subr.mxu0 0.0
    %1932 = vmatpush2.msra.mxu0 0.0
    %1933 = vmatprep.subr.mxu0 0.0
    %1934 = vmatpush2.msra.mxu0 0.0
    %1935 = vmatprep.subr.mxu0 0.0
    %1936 = vmatpush2.msra.mxu0 0.0
    %1937 = vmatprep.subr.mxu0 0.0
    %1938 = vmatpush2.msra.mxu0 0.0
    %1939 = vmatprep.subr.mxu0 0.0
    %1940 = vmatpush2.msra.mxu0 0.0
    %1941 = vmatprep.subr.mxu0 0.0
    %1942 = vmatpush2.msra.mxu0 0.0
    %1943 = vmatprep.subr.mxu0 0.0
    %1944 = vmatpush2.msra.mxu0 0.0
    %1945 = vmatprep.subr.mxu0 0.0
    %1946 = vmatpush2.msra.mxu0 0.0
    %1947 = vmatprep.subr.mxu0 0.0
    %1948 = vmatpush2.msra.mxu0 0.0
    %1949 = vmatprep.subr.mxu0 0.0
    %1950 = vmatpush2.msra.mxu0 0.0
    %1951 = vmatprep.subr.mxu0 0.0
    %1952 = vmatpush2.msra.mxu0 0.0
    %1953 = vmatprep.subr.mxu0 0.0
    %1954 = vmatpush2.msra.mxu0 0.0
    %1955 = vmatprep.subr.mxu0 0.0
    %1956 = vmatpush2.msra.mxu0 0.0
    %1957 = vmatprep.subr.mxu0 0.0
    %1958 = vmatpush2.msra.mxu0 0.0
    %1959 = vmatprep.mubr.f32.mxu0 0.0
    %1960 = vmatmul.mubr.f32.gmra.mxu0 %v1890
    %v1961 = vpop.f32.mrf.mxu0
    %v1962 = vadd.f32 %v1888, %v1961
    %v1963 = vpop.f32.mrf.mxu0
    %1964 = vmatprep.mubr.f32.mxu0 0.0
    %1965 = vmatmul.mubr.f32.gmra.mxu0 %v1893
    %v1966 = vpop.f32.mrf.mxu0
    %v1967 = vadd.f32 %v1888, %v1966
    %v1968 = vpop.f32.mrf.mxu0
    %1969 = vdwg.mxu0
    %v1970 = vmul.f32 %v1962, 0.35355338
    %v1971 = vmul.f32 %v1967, 0.35355338
    %1973 = vrot.lane.b32.xlu0 %v1962, 96
    %v1974 = vpop.permute.xlu0 %1973
    %v1976 = vsel %vm160, %v1970, 0
    %v1978 = vsel %vm160, %v1974, 0
    %1980 = vmatprep.subr.mxu0 0.0
    %1981 = vmatpush1.xpose.msra.mxu0 0.0
    %1982 = vmatprep.subr.mxu0 0.0
    %1983 = vmatpush1.xpose.msra.mxu0 0.0
    %1984 = vmatprep.subr.mxu0 0.0
    %1985 = vmatpush1.xpose.msra.mxu0 0.0
    %1986 = vmatprep.subr.mxu0 0.0
    %1987 = vmatpush1.xpose.msra.mxu0 0.0
    %1988 = vmatprep.subr.mxu0 0.0
    %1989 = vmatpush1.xpose.msra.mxu0 0.0
    %1990 = vmatprep.subr.mxu0 0.0
    %1991 = vmatpush1.xpose.msra.mxu0 0.0
    %1992 = vmatprep.subr.mxu0 0.0
    %1993 = vmatpush1.xpose.msra.mxu0 0.0
    %1994 = vmatprep.subr.mxu0 0.0
    %1995 = vmatpush1.xpose.msra.mxu0 0.0
    %1996 = vmatprep.subr.mxu0 0.0
    %1997 = vmatpush1.xpose.msra.mxu0 0.0
    %1998 = vmatprep.subr.mxu0 0.0
    %1999 = vmatpush1.xpose.msra.mxu0 0.0
    %2000 = vmatprep.subr.mxu0 0.0
    %2001 = vmatpush1.xpose.msra.mxu0 0.0
    %2002 = vmatprep.subr.mxu0 0.0
    %2003 = vmatpush1.xpose.msra.mxu0 0.0
    %2004 = vmatprep.subr.mxu0 0.0
    %2005 = vmatpush1.xpose.msra.mxu0 0.0
    %2006 = vmatprep.subr.mxu0 0.0
    %2007 = vmatpush1.xpose.msra.mxu0 0.0
    %2008 = vmatprep.subr.mxu0 0.0
    %2009 = vmatpush1.xpose.msra.mxu0 0.0
    %2010 = vmatprep.subr.mxu0 0.0
    %2011 = vmatpush1.xpose.msra.mxu0 %v1978
    %2012 = vmatprep.subr.mxu0 0.0
    %2013 = vmatpush2.xpose.msra.mxu0 0.0
    %2014 = vmatprep.subr.mxu0 0.0
    %2015 = vmatpush2.xpose.msra.mxu0 0.0
    %2016 = vmatprep.subr.mxu0 0.0
    %2017 = vmatpush2.xpose.msra.mxu0 0.0
    %2018 = vmatprep.subr.mxu0 0.0
    %2019 = vmatpush2.xpose.msra.mxu0 0.0
    %2020 = vmatprep.subr.mxu0 0.0
    %2021 = vmatpush2.xpose.msra.mxu0 0.0
    %2022 = vmatprep.subr.mxu0 0.0
    %2023 = vmatpush2.xpose.msra.mxu0 0.0
    %2024 = vmatprep.subr.mxu0 0.0
    %2025 = vmatpush2.xpose.msra.mxu0 0.0
    %2026 = vmatprep.subr.mxu0 0.0
    %2027 = vmatpush2.xpose.msra.mxu0 0.0
    %2028 = vmatprep.subr.mxu0 0.0
    %2029 = vmatpush2.xpose.msra.mxu0 0.0
    %2030 = vmatprep.subr.mxu0 0.0
    %2031 = vmatpush2.xpose.msra.mxu0 0.0
    %2032 = vmatprep.subr.mxu0 0.0
    %2033 = vmatpush2.xpose.msra.mxu0 0.0
    %2034 = vmatprep.subr.mxu0 0.0
    %2035 = vmatpush2.xpose.msra.mxu0 0.0
    %2036 = vmatprep.subr.mxu0 0.0
    %2037 = vmatpush2.xpose.msra.mxu0 0.0
    %2038 = vmatprep.subr.mxu0 0.0
    %2039 = vmatpush2.xpose.msra.mxu0 0.0
    %2040 = vmatprep.subr.mxu0 0.0
    %2041 = vmatpush2.xpose.msra.mxu0 0.0
    %2042 = vmatprep.subr.mxu0 0.0
    %2043 = vmatpush2.xpose.msra.mxu0 0.0
    %2044 = vmatprep.mubr.f32.mxu0 0.0
    %2045 = vmatmul.mubr.f32.gmra.mxu0 %v1976
    %v2046 = vpop.f32.mrf.mxu0
    %v2047 = vadd.f32 0.0, %v2046
    %v2048 = vpop.f32.mrf.mxu0
    %2049 = vdwg.mxu0
    %2051 = vrot.lane.b32.xlu0 %v1967, 96
    %v2052 = vpop.permute.xlu0 %2051
    %v2054 = vsel %vm160, %v1971, 0
    %v2056 = vsel %vm160, %v2052, 0
    %2058 = vmatprep.subr.mxu0 0.0
    %2059 = vmatpush1.xpose.msra.mxu0 0.0
    %2060 = vmatprep.subr.mxu0 0.0
    %2061 = vmatpush1.xpose.msra.mxu0 0.0
    %2062 = vmatprep.subr.mxu0 0.0
    %2063 = vmatpush1.xpose.msra.mxu0 0.0
    %2064 = vmatprep.subr.mxu0 0.0
    %2065 = vmatpush1.xpose.msra.mxu0 0.0
    %2066 = vmatprep.subr.mxu0 0.0
    %2067 = vmatpush1.xpose.msra.mxu0 0.0
    %2068 = vmatprep.subr.mxu0 0.0
    %2069 = vmatpush1.xpose.msra.mxu0 0.0
    %2070 = vmatprep.subr.mxu0 0.0
    %2071 = vmatpush1.xpose.msra.mxu0 0.0
    %2072 = vmatprep.subr.mxu0 0.0
    %2073 = vmatpush1.xpose.msra.mxu0 0.0
    %2074 = vmatprep.subr.mxu0 0.0
    %2075 = vmatpush1.xpose.msra.mxu0 0.0
    %2076 = vmatprep.subr.mxu0 0.0
    %2077 = vmatpush1.xpose.msra.mxu0 0.0
    %2078 = vmatprep.subr.mxu0 0.0
    %2079 = vmatpush1.xpose.msra.mxu0 0.0
    %2080 = vmatprep.subr.mxu0 0.0
    %2081 = vmatpush1.xpose.msra.mxu0 0.0
    %2082 = vmatprep.subr.mxu0 0.0
    %2083 = vmatpush1.xpose.msra.mxu0 0.0
    %2084 = vmatprep.subr.mxu0 0.0
    %2085 = vmatpush1.xpose.msra.mxu0 0.0
    %2086 = vmatprep.subr.mxu0 0.0
    %2087 = vmatpush1.xpose.msra.mxu0 0.0
    %2088 = vmatprep.subr.mxu0 0.0
    %2089 = vmatpush1.xpose.msra.mxu0 %v2056
    %2090 = vmatprep.subr.mxu0 0.0
    %2091 = vmatpush2.xpose.msra.mxu0 0.0
    %2092 = vmatprep.subr.mxu0 0.0
    %2093 = vmatpush2.xpose.msra.mxu0 0.0
    %2094 = vmatprep.subr.mxu0 0.0
    %2095 = vmatpush2.xpose.msra.mxu0 0.0
    %2096 = vmatprep.subr.mxu0 0.0
    %2097 = vmatpush2.xpose.msra.mxu0 0.0
    %2098 = vmatprep.subr.mxu0 0.0
    %2099 = vmatpush2.xpose.msra.mxu0 0.0
    %2100 = vmatprep.subr.mxu0 0.0
    %2101 = vmatpush2.xpose.msra.mxu0 0.0
    %2102 = vmatprep.subr.mxu0 0.0
    %2103 = vmatpush2.xpose.msra.mxu0 0.0
    %2104 = vmatprep.subr.mxu0 0.0
    %2105 = vmatpush2.xpose.msra.mxu0 0.0
    %2106 = vmatprep.subr.mxu0 0.0
    %2107 = vmatpush2.xpose.msra.mxu0 0.0
    %2108 = vmatprep.subr.mxu0 0.0
    %2109 = vmatpush2.xpose.msra.mxu0 0.0
    %2110 = vmatprep.subr.mxu0 0.0
    %2111 = vmatpush2.xpose.msra.mxu0 0.0
    %2112 = vmatprep.subr.mxu0 0.0
    %2113 = vmatpush2.xpose.msra.mxu0 0.0
    %2114 = vmatprep.subr.mxu0 0.0
    %2115 = vmatpush2.xpose.msra.mxu0 0.0
    %2116 = vmatprep.subr.mxu0 0.0
    %2117 = vmatpush2.xpose.msra.mxu0 0.0
    %2118 = vmatprep.subr.mxu0 0.0
    %2119 = vmatpush2.xpose.msra.mxu0 0.0
    %2120 = vmatprep.subr.mxu0 0.0
    %2121 = vmatpush2.xpose.msra.mxu0 0.0
    %2122 = vmatprep.mubr.f32.mxu0 0.0
    %2123 = vmatmul.mubr.f32.gmra.mxu0 %v2054
    %v2124 = vpop.f32.mrf.mxu0
    %v2125 = vadd.f32 0.0, %v2124
    %v2126 = vpop.f32.mrf.mxu0
    %2127 = vdwg.mxu0
    %v2128 = vsel %vm160, %v2047, -inf
    %2129 = vmax.xlane.f32.xlu0 %v2128
    %v2130 = vpop.xlane.xlu0 %2129
    %v2131 = vsel %vm160, %v2125, -inf
    %2132 = vmax.xlane.f32.xlu0 %v2131
    %v2133 = vpop.xlane.xlu0 %2132
    %v2134 = vsub.f32 %v2047, %v2130
    %v2135 = vsub.f32 %v2125, %v2133
    %v2136 = vmul.f32 %v2134, 1.442695
    %v2137 = vpow.pop %v2136
    %v2138 = vmul.f32 %v2135, 1.442695
    %v2139 = vpow.pop %v2138
    %v2140 = vsel %vm160, %v2137, 0.0
    %2141 = vadd.xlane.f32.xlu0 %v2140
    %v2142 = vpop.xlane.xlu0 %2141
    %v2143 = vsel %vm160, %v2139, 0.0
    %2144 = vadd.xlane.f32.xlu0 %v2143
    %v2145 = vpop.xlane.xlu0 %2144
    %v2146 = vrcp.pop %v2142
    %v2147 = vrcp.pop %v2145
    %v2148 = vmul.f32 %v2137, %v2146
    %v2149 = vmul.f32 %v2139, %v2147
    %2150 = vrot.lane.b32.xlu0 %v1962, 64
    %v2151 = vpop.permute.xlu0 %2150
    %v2154 = vsel %vm160, %v2148, 0
    %2156 = vmatprep.subr.mxu0 0.0
    %2157 = vmatpush1.msra.mxu0 0.0
    %2158 = vmatprep.subr.mxu0 0.0
    %2159 = vmatpush1.msra.mxu0 0.0
    %2160 = vmatprep.subr.mxu0 0.0
    %2161 = vmatpush1.msra.mxu0 0.0
    %2162 = vmatprep.subr.mxu0 0.0
    %2163 = vmatpush1.msra.mxu0 0.0
    %2164 = vmatprep.subr.mxu0 0.0
    %2165 = vmatpush1.msra.mxu0 0.0
    %2166 = vmatprep.subr.mxu0 0.0
    %2167 = vmatpush1.msra.mxu0 0.0
    %2168 = vmatprep.subr.mxu0 0.0
    %2169 = vmatpush1.msra.mxu0 0.0
    %2170 = vmatprep.subr.mxu0 0.0
    %2171 = vmatpush1.msra.mxu0 0.0
    %2172 = vmatprep.subr.mxu0 0.0
    %2173 = vmatpush1.msra.mxu0 0.0
    %2174 = vmatprep.subr.mxu0 0.0
    %2175 = vmatpush1.msra.mxu0 0.0
    %2176 = vmatprep.subr.mxu0 0.0
    %2177 = vmatpush1.msra.mxu0 0.0
    %2178 = vmatprep.subr.mxu0 0.0
    %2179 = vmatpush1.msra.mxu0 0.0
    %2180 = vmatprep.subr.mxu0 0.0
    %2181 = vmatpush1.msra.mxu0 0.0
    %2182 = vmatprep.subr.mxu0 0.0
    %2183 = vmatpush1.msra.mxu0 0.0
    %2184 = vmatprep.subr.mxu0 0.0
    %2185 = vmatpush1.msra.mxu0 0.0
    %2186 = vmatprep.subr.mxu0 0.0
    %2187 = vmatpush1.msra.mxu0 %v2151
    %2188 = vmatprep.subr.mxu0 0.0
    %2189 = vmatpush2.msra.mxu0 0.0
    %2190 = vmatprep.subr.mxu0 0.0
    %2191 = vmatpush2.msra.mxu0 0.0
    %2192 = vmatprep.subr.mxu0 0.0
    %2193 = vmatpush2.msra.mxu0 0.0
    %2194 = vmatprep.subr.mxu0 0.0
    %2195 = vmatpush2.msra.mxu0 0.0
    %2196 = vmatprep.subr.mxu0 0.0
    %2197 = vmatpush2.msra.mxu0 0.0
    %2198 = vmatprep.subr.mxu0 0.0
    %2199 = vmatpush2.msra.mxu0 0.0
    %2200 = vmatprep.subr.mxu0 0.0
    %2201 = vmatpush2.msra.mxu0 0.0
    %2202 = vmatprep.subr.mxu0 0.0
    %2203 = vmatpush2.msra.mxu0 0.0
    %2204 = vmatprep.subr.mxu0 0.0
    %2205 = vmatpush2.msra.mxu0 0.0
    %2206 = vmatprep.subr.mxu0 0.0
    %2207 = vmatpush2.msra.mxu0 0.0
    %2208 = vmatprep.subr.mxu0 0.0
    %2209 = vmatpush2.msra.mxu0 0.0
    %2210 = vmatprep.subr.mxu0 0.0
    %2211 = vmatpush2.msra.mxu0 0.0
    %2212 = vmatprep.subr.mxu0 0.0
    %2213 = vmatpush2.msra.mxu0 0.0
    %2214 = vmatprep.subr.mxu0 0.0
    %2215 = vmatpush2.msra.mxu0 0.0
    %2216 = vmatprep.subr.mxu0 0.0
    %2217 = vmatpush2.msra.mxu0 0.0
    %2218 = vmatprep.subr.mxu0 0.0
    %2219 = vmatpush2.msra.mxu0 0.0
    %2220 = vmatprep.mubr.f32.mxu0 0.0
    %2221 = vmatmul.mubr.f32.gmra.mxu0 %v2154
    %v2222 = vpop.f32.mrf.mxu0
    %v2223 = vadd.f32 0.0, %v2222
    %v2224 = vpop.f32.mrf.mxu0
    %2225 = vdwg.mxu0
    %2226 = vrot.lane.b32.xlu0 %v1967, 64
    %v2227 = vpop.permute.xlu0 %2226
    %v2230 = vsel %vm160, %v2149, 0
    %2232 = vmatprep.subr.mxu0 0.0
    %2233 = vmatpush1.msra.mxu0 0.0
    %2234 = vmatprep.subr.mxu0 0.0
    %2235 = vmatpush1.msra.mxu0 0.0
    %2236 = vmatprep.subr.mxu0 0.0
    %2237 = vmatpush1.msra.mxu0 0.0
    %2238 = vmatprep.subr.mxu0 0.0
    %2239 = vmatpush1.msra.mxu0 0.0
    %2240 = vmatprep.subr.mxu0 0.0
    %2241 = vmatpush1.msra.mxu0 0.0
    %2242 = vmatprep.subr.mxu0 0.0
    %2243 = vmatpush1.msra.mxu0 0.0
    %2244 = vmatprep.subr.mxu0 0.0
    %2245 = vmatpush1.msra.mxu0 0.0
    %2246 = vmatprep.subr.mxu0 0.0
    %2247 = vmatpush1.msra.mxu0 0.0
    %2248 = vmatprep.subr.mxu0 0.0
    %2249 = vmatpush1.msra.mxu0 0.0
    %2250 = vmatprep.subr.mxu0 0.0
    %2251 = vmatpush1.msra.mxu0 0.0
    %2252 = vmatprep.subr.mxu0 0.0
    %2253 = vmatpush1.msra.mxu0 0.0
    %2254 = vmatprep.subr.mxu0 0.0
    %2255 = vmatpush1.msra.mxu0 0.0
    %2256 = vmatprep.subr.mxu0 0.0
    %2257 = vmatpush1.msra.mxu0 0.0
    %2258 = vmatprep.subr.mxu0 0.0
    %2259 = vmatpush1.msra.mxu0 0.0
    %2260 = vmatprep.subr.mxu0 0.0
    %2261 = vmatpush1.msra.mxu0 0.0
    %2262 = vmatprep.subr.mxu0 0.0
    %2263 = vmatpush1.msra.mxu0 %v2227
    %2264 = vmatprep.subr.mxu0 0.0
    %2265 = vmatpush2.msra.mxu0 0.0
    %2266 = vmatprep.subr.mxu0 0.0
    %2267 = vmatpush2.msra.mxu0 0.0
    %2268 = vmatprep.subr.mxu0 0.0
    %2269 = vmatpush2.msra.mxu0 0.0
    %2270 = vmatprep.subr.mxu0 0.0
    %2271 = vmatpush2.msra.mxu0 0.0
    %2272 = vmatprep.subr.mxu0 0.0
    %2273 = vmatpush2.msra.mxu0 0.0
    %2274 = vmatprep.subr.mxu0 0.0
    %2275 = vmatpush2.msra.mxu0 0.0
    %2276 = vmatprep.subr.mxu0 0.0
    %2277 = vmatpush2.msra.mxu0 0.0
    %2278 = vmatprep.subr.mxu0 0.0
    %2279 = vmatpush2.msra.mxu0 0.0
    %2280 = vmatprep.subr.mxu0 0.0
    %2281 = vmatpush2.msra.mxu0 0.0
    %2282 = vmatprep.subr.mxu0 0.0
    %2283 = vmatpush2.msra.mxu0 0.0
    %2284 = vmatprep.subr.mxu0 0.0
    %2285 = vmatpush2.msra.mxu0 0.0
    %2286 = vmatprep.subr.mxu0 0.0
    %2287 = vmatpush2.msra.mxu0 0.0
    %2288 = vmatprep.subr.mxu0 0.0
    %2289 = vmatpush2.msra.mxu0 0.0
    %2290 = vmatprep.subr.mxu0 0.0
    %2291 = vmatpush2.msra.mxu0 0.0
    %2292 = vmatprep.subr.mxu0 0.0
    %2293 = vmatpush2.msra.mxu0 0.0
    %2294 = vmatprep.subr.mxu0 0.0
    %2295 = vmatpush2.msra.mxu0 0.0
    %2296 = vmatprep.mubr.f32.mxu0 0.0
    %2297 = vmatmul.mubr.f32.gmra.mxu0 %v2230
    %v2298 = vpop.f32.mrf.mxu0
    %v2299 = vadd.f32 0.0, %v2298
    %v2300 = vpop.f32.mrf.mxu0
    %2301 = vdwg.mxu0
    %2302 = vrot.lane.b32.xlu0 %v1970, 120
    %v2303 = vpop.permute.xlu0 %2302
    %2304 = vrot.lane.b32.xlu0 %v1962, 88
    %v2305 = vpop.permute.xlu0 %2304
    %v2306 = vsel %vm160, %v2303, 0
    %v2308 = vsel %vm160, %v2305, 0
    %2310 = vmatprep.subr.mxu0 0.0
    %2311 = vmatpush1.xpose.msra.mxu0 0.0
    %2312 = vmatprep.subr.mxu0 0.0
    %2313 = vmatpush1.xpose.msra.mxu0 0.0
    %2314 = vmatprep.subr.mxu0 0.0
    %2315 = vmatpush1.xpose.msra.mxu0 0.0
    %2316 = vmatprep.subr.mxu0 0.0
    %2317 = vmatpush1.xpose.msra.mxu0 0.0
    %2318 = vmatprep.subr.mxu0 0.0
    %2319 = vmatpush1.xpose.msra.mxu0 0.0
    %2320 = vmatprep.subr.mxu0 0.0
    %2321 = vmatpush1.xpose.msra.mxu0 0.0
    %2322 = vmatprep.subr.mxu0 0.0
    %2323 = vmatpush1.xpose.msra.mxu0 0.0
    %2324 = vmatprep.subr.mxu0 0.0
    %2325 = vmatpush1.xpose.msra.mxu0 0.0
    %2326 = vmatprep.subr.mxu0 0.0
    %2327 = vmatpush1.xpose.msra.mxu0 0.0
    %2328 = vmatprep.subr.mxu0 0.0
    %2329 = vmatpush1.xpose.msra.mxu0 0.0
    %2330 = vmatprep.subr.mxu0 0.0
    %2331 = vmatpush1.xpose.msra.mxu0 0.0
    %2332 = vmatprep.subr.mxu0 0.0
    %2333 = vmatpush1.xpose.msra.mxu0 0.0
    %2334 = vmatprep.subr.mxu0 0.0
    %2335 = vmatpush1.xpose.msra.mxu0 0.0
    %2336 = vmatprep.subr.mxu0 0.0
    %2337 = vmatpush1.xpose.msra.mxu0 0.0
    %2338 = vmatprep.subr.mxu0 0.0
    %2339 = vmatpush1.xpose.msra.mxu0 0.0
    %2340 = vmatprep.subr.mxu0 0.0
    %2341 = vmatpush1.xpose.msra.mxu0 %v2308
    %2342 = vmatprep.subr.mxu0 0.0
    %2343 = vmatpush2.xpose.msra.mxu0 0.0
    %2344 = vmatprep.subr.mxu0 0.0
    %2345 = vmatpush2.xpose.msra.mxu0 0.0
    %2346 = vmatprep.subr.mxu0 0.0
    %2347 = vmatpush2.xpose.msra.mxu0 0.0
    %2348 = vmatprep.subr.mxu0 0.0
    %2349 = vmatpush2.xpose.msra.mxu0 0.0
    %2350 = vmatprep.subr.mxu0 0.0
    %2351 = vmatpush2.xpose.msra.mxu0 0.0
    %2352 = vmatprep.subr.mxu0 0.0
    %2353 = vmatpush2.xpose.msra.mxu0 0.0
    %2354 = vmatprep.subr.mxu0 0.0
    %2355 = vmatpush2.xpose.msra.mxu0 0.0
    %2356 = vmatprep.subr.mxu0 0.0
    %2357 = vmatpush2.xpose.msra.mxu0 0.0
    %2358 = vmatprep.subr.mxu0 0.0
    %2359 = vmatpush2.xpose.msra.mxu0 0.0
    %2360 = vmatprep.subr.mxu0 0.0
    %2361 = vmatpush2.xpose.msra.mxu0 0.0
    %2362 = vmatprep.subr.mxu0 0.0
    %2363 = vmatpush2.xpose.msra.mxu0 0.0
    %2364 = vmatprep.subr.mxu0 0.0
    %2365 = vmatpush2.xpose.msra.mxu0 0.0
    %2366 = vmatprep.subr.mxu0 0.0
    %2367 = vmatpush2.xpose.msra.mxu0 0.0
    %2368 = vmatprep.subr.mxu0 0.0
    %2369 = vmatpush2.xpose.msra.mxu0 0.0
    %2370 = vmatprep.subr.mxu0 0.0
    %2371 = vmatpush2.xpose.msra.mxu0 0.0
    %2372 = vmatprep.subr.mxu0 0.0
    %2373 = vmatpush2.xpose.msra.mxu0 0.0
    %2374 = vmatprep.mubr.f32.mxu0 0.0
    %2375 = vmatmul.mubr.f32.gmra.mxu0 %v2306
    %v2376 = vpop.f32.mrf.mxu0
    %v2377 = vadd.f32 0.0, %v2376
    %v2378 = vpop.f32.mrf.mxu0
    %2379 = vdwg.mxu0
    %2380 = vrot.lane.b32.xlu0 %v1971, 120
    %v2381 = vpop.permute.xlu0 %2380
    %2382 = vrot.lane.b32.xlu0 %v1967, 88
    %v2383 = vpop.permute.xlu0 %2382
    %v2384 = vsel %vm160, %v2381, 0
    %v2386 = vsel %vm160, %v2383, 0
    %2388 = vmatprep.subr.mxu0 0.0
    %2389 = vmatpush1.xpose.msra.mxu0 0.0
    %2390 = vmatprep.subr.mxu0 0.0
    %2391 = vmatpush1.xpose.msra.mxu0 0.0
    %2392 = vmatprep.subr.mxu0 0.0
    %2393 = vmatpush1.xpose.msra.mxu0 0.0
    %2394 = vmatprep.subr.mxu0 0.0
    %2395 = vmatpush1.xpose.msra.mxu0 0.0
    %2396 = vmatprep.subr.mxu0 0.0
    %2397 = vmatpush1.xpose.msra.mxu0 0.0
    %2398 = vmatprep.subr.mxu0 0.0
    %2399 = vmatpush1.xpose.msra.mxu0 0.0
    %2400 = vmatprep.subr.mxu0 0.0
    %2401 = vmatpush1.xpose.msra.mxu0 0.0
    %2402 = vmatprep.subr.mxu0 0.0
    %2403 = vmatpush1.xpose.msra.mxu0 0.0
    %2404 = vmatprep.subr.mxu0 0.0
    %2405 = vmatpush1.xpose.msra.mxu0 0.0
    %2406 = vmatprep.subr.mxu0 0.0
    %2407 = vmatpush1.xpose.msra.mxu0 0.0
    %2408 = vmatprep.subr.mxu0 0.0
    %2409 = vmatpush1.xpose.msra.mxu0 0.0
    %2410 = vmatprep.subr.mxu0 0.0
    %2411 = vmatpush1.xpose.msra.mxu0 0.0
    %2412 = vmatprep.subr.mxu0 0.0
    %2413 = vmatpush1.xpose.msra.mxu0 0.0
    %2414 = vmatprep.subr.mxu0 0.0
    %2415 = vmatpush1.xpose.msra.mxu0 0.0
    %2416 = vmatprep.subr.mxu0 0.0
    %2417 = vmatpush1.xpose.msra.mxu0 0.0
    %2418 = vmatprep.subr.mxu0 0.0
    %2419 = vmatpush1.xpose.msra.mxu0 %v2386
    %2420 = vmatprep.subr.mxu0 0.0
    %2421 = vmatpush2.xpose.msra.mxu0 0.0
    %2422 = vmatprep.subr.mxu0 0.0
    %2423 = vmatpush2.xpose.msra.mxu0 0.0
    %2424 = vmatprep.subr.mxu0 0.0
    %2425 = vmatpush2.xpose.msra.mxu0 0.0
    %2426 = vmatprep.subr.mxu0 0.0
    %2427 = vmatpush2.xpose.msra.mxu0 0.0
    %2428 = vmatprep.subr.mxu0 0.0
    %2429 = vmatpush2.xpose.msra.mxu0 0.0
    %2430 = vmatprep.subr.mxu0 0.0
    %2431 = vmatpush2.xpose.msra.mxu0 0.0
    %2432 = vmatprep.subr.mxu0 0.0
    %2433 = vmatpush2.xpose.msra.mxu0 0.0
    %2434 = vmatprep.subr.mxu0 0.0
    %2435 = vmatpush2.xpose.msra.mxu0 0.0
    %2436 = vmatprep.subr.mxu0 0.0
    %2437 = vmatpush2.xpose.msra.mxu0 0.0
    %2438 = vmatprep.subr.mxu0 0.0
    %2439 = vmatpush2.xpose.msra.mxu0 0.0
    %2440 = vmatprep.subr.mxu0 0.0
    %2441 = vmatpush2.xpose.msra.mxu0 0.0
    %2442 = vmatprep.subr.mxu0 0.0
    %2443 = vmatpush2.xpose.msra.mxu0 0.0
    %2444 = vmatprep.subr.mxu0 0.0
    %2445 = vmatpush2.xpose.msra.mxu0 0.0
    %2446 = vmatprep.subr.mxu0 0.0
    %2447 = vmatpush2.xpose.msra.mxu0 0.0
    %2448 = vmatprep.subr.mxu0 0.0
    %2449 = vmatpush2.xpose.msra.mxu0 0.0
    %2450 = vmatprep.subr.mxu0 0.0
    %2451 = vmatpush2.xpose.msra.mxu0 0.0
    %2452 = vmatprep.mubr.f32.mxu0 0.0
    %2453 = vmatmul.mubr.f32.gmra.mxu0 %v2384
    %v2454 = vpop.f32.mrf.mxu0
    %v2455 = vadd.f32 0.0, %v2454
    %v2456 = vpop.f32.mrf.mxu0
    %2457 = vdwg.mxu0
    %v2458 = vsel %vm160, %v2377, -inf
    %2459 = vmax.xlane.f32.xlu0 %v2458
    %v2460 = vpop.xlane.xlu0 %2459
    %v2461 = vsel %vm160, %v2455, -inf
    %2462 = vmax.xlane.f32.xlu0 %v2461
    %v2463 = vpop.xlane.xlu0 %2462
    %v2464 = vsub.f32 %v2377, %v2460
    %v2465 = vsub.f32 %v2455, %v2463
    %v2466 = vmul.f32 %v2464, 1.442695
    %v2467 = vpow.pop %v2466
    %v2468 = vmul.f32 %v2465, 1.442695
    %v2469 = vpow.pop %v2468
    %v2470 = vsel %vm160, %v2467, 0.0
    %2471 = vadd.xlane.f32.xlu0 %v2470
    %v2472 = vpop.xlane.xlu0 %2471
    %v2473 = vsel %vm160, %v2469, 0.0
    %2474 = vadd.xlane.f32.xlu0 %v2473
    %v2475 = vpop.xlane.xlu0 %2474
    %v2476 = vrcp.pop %v2472
    %v2477 = vrcp.pop %v2475
    %v2478 = vmul.f32 %v2467, %v2476
    %v2479 = vmul.f32 %v2469, %v2477
    %2480 = vrot.lane.b32.xlu0 %v1962, 56
    %v2481 = vpop.permute.xlu0 %2480
    %v2484 = vsel %vm160, %v2478, 0
    %2486 = vmatprep.subr.mxu0 0.0
    %2487 = vmatpush1.msra.mxu0 0.0
    %2488 = vmatprep.subr.mxu0 0.0
    %2489 = vmatpush1.msra.mxu0 0.0
    %2490 = vmatprep.subr.mxu0 0.0
    %2491 = vmatpush1.msra.mxu0 0.0
    %2492 = vmatprep.subr.mxu0 0.0
    %2493 = vmatpush1.msra.mxu0 0.0
    %2494 = vmatprep.subr.mxu0 0.0
    %2495 = vmatpush1.msra.mxu0 0.0
    %2496 = vmatprep.subr.mxu0 0.0
    %2497 = vmatpush1.msra.mxu0 0.0
    %2498 = vmatprep.subr.mxu0 0.0
    %2499 = vmatpush1.msra.mxu0 0.0
    %2500 = vmatprep.subr.mxu0 0.0
    %2501 = vmatpush1.msra.mxu0 0.0
    %2502 = vmatprep.subr.mxu0 0.0
    %2503 = vmatpush1.msra.mxu0 0.0
    %2504 = vmatprep.subr.mxu0 0.0
    %2505 = vmatpush1.msra.mxu0 0.0
    %2506 = vmatprep.subr.mxu0 0.0
    %2507 = vmatpush1.msra.mxu0 0.0
    %2508 = vmatprep.subr.mxu0 0.0
    %2509 = vmatpush1.msra.mxu0 0.0
    %2510 = vmatprep.subr.mxu0 0.0
    %2511 = vmatpush1.msra.mxu0 0.0
    %2512 = vmatprep.subr.mxu0 0.0
    %2513 = vmatpush1.msra.mxu0 0.0
    %2514 = vmatprep.subr.mxu0 0.0
    %2515 = vmatpush1.msra.mxu0 0.0
    %2516 = vmatprep.subr.mxu0 0.0
    %2517 = vmatpush1.msra.mxu0 %v2481
    %2518 = vmatprep.subr.mxu0 0.0
    %2519 = vmatpush2.msra.mxu0 0.0
    %2520 = vmatprep.subr.mxu0 0.0
    %2521 = vmatpush2.msra.mxu0 0.0
    %2522 = vmatprep.subr.mxu0 0.0
    %2523 = vmatpush2.msra.mxu0 0.0
    %2524 = vmatprep.subr.mxu0 0.0
    %2525 = vmatpush2.msra.mxu0 0.0
    %2526 = vmatprep.subr.mxu0 0.0
    %2527 = vmatpush2.msra.mxu0 0.0
    %2528 = vmatprep.subr.mxu0 0.0
    %2529 = vmatpush2.msra.mxu0 0.0
    %2530 = vmatprep.subr.mxu0 0.0
    %2531 = vmatpush2.msra.mxu0 0.0
    %2532 = vmatprep.subr.mxu0 0.0
    %2533 = vmatpush2.msra.mxu0 0.0
    %2534 = vmatprep.subr.mxu0 0.0
    %2535 = vmatpush2.msra.mxu0 0.0
    %2536 = vmatprep.subr.mxu0 0.0
    %2537 = vmatpush2.msra.mxu0 0.0
    %2538 = vmatprep.subr.mxu0 0.0
    %2539 = vmatpush2.msra.mxu0 0.0
    %2540 = vmatprep.subr.mxu0 0.0
    %2541 = vmatpush2.msra.mxu0 0.0
    %2542 = vmatprep.subr.mxu0 0.0
    %2543 = vmatpush2.msra.mxu0 0.0
    %2544 = vmatprep.subr.mxu0 0.0
    %2545 = vmatpush2.msra.mxu0 0.0
    %2546 = vmatprep.subr.mxu0 0.0
    %2547 = vmatpush2.msra.mxu0 0.0
    %2548 = vmatprep.subr.mxu0 0.0
    %2549 = vmatpush2.msra.mxu0 0.0
    %2550 = vmatprep.mubr.f32.mxu0 0.0
    %2551 = vmatmul.mubr.f32.gmra.mxu0 %v2484
    %v2552 = vpop.f32.mrf.mxu0
    %v2553 = vadd.f32 0.0, %v2552
    %v2554 = vpop.f32.mrf.mxu0
    %2555 = vdwg.mxu0
    %2556 = vrot.lane.b32.xlu0 %v1967, 56
    %v2557 = vpop.permute.xlu0 %2556
    %v2560 = vsel %vm160, %v2479, 0
    %2562 = vmatprep.subr.mxu0 0.0
    %2563 = vmatpush1.msra.mxu0 0.0
    %2564 = vmatprep.subr.mxu0 0.0
    %2565 = vmatpush1.msra.mxu0 0.0
    %2566 = vmatprep.subr.mxu0 0.0
    %2567 = vmatpush1.msra.mxu0 0.0
    %2568 = vmatprep.subr.mxu0 0.0
    %2569 = vmatpush1.msra.mxu0 0.0
    %2570 = vmatprep.subr.mxu0 0.0
    %2571 = vmatpush1.msra.mxu0 0.0
    %2572 = vmatprep.subr.mxu0 0.0
    %2573 = vmatpush1.msra.mxu0 0.0
    %2574 = vmatprep.subr.mxu0 0.0
    %2575 = vmatpush1.msra.mxu0 0.0
    %2576 = vmatprep.subr.mxu0 0.0
    %2577 = vmatpush1.msra.mxu0 0.0
    %2578 = vmatprep.subr.mxu0 0.0
    %2579 = vmatpush1.msra.mxu0 0.0
    %2580 = vmatprep.subr.mxu0 0.0
    %2581 = vmatpush1.msra.mxu0 0.0
    %2582 = vmatprep.subr.mxu0 0.0
    %2583 = vmatpush1.msra.mxu0 0.0
    %2584 = vmatprep.subr.mxu0 0.0
    %2585 = vmatpush1.msra.mxu0 0.0
    %2586 = vmatprep.subr.mxu0 0.0
    %2587 = vmatpush1.msra.mxu0 0.0
    %2588 = vmatprep.subr.mxu0 0.0
    %2589 = vmatpush1.msra.mxu0 0.0
    %2590 = vmatprep.subr.mxu0 0.0
    %2591 = vmatpush1.msra.mxu0 0.0
    %2592 = vmatprep.subr.mxu0 0.0
    %2593 = vmatpush1.msra.mxu0 %v2557
    %2594 = vmatprep.subr.mxu0 0.0
    %2595 = vmatpush2.msra.mxu0 0.0
    %2596 = vmatprep.subr.mxu0 0.0
    %2597 = vmatpush2.msra.mxu0 0.0
    %2598 = vmatprep.subr.mxu0 0.0
    %2599 = vmatpush2.msra.mxu0 0.0
    %2600 = vmatprep.subr.mxu0 0.0
    %2601 = vmatpush2.msra.mxu0 0.0
    %2602 = vmatprep.subr.mxu0 0.0
    %2603 = vmatpush2.msra.mxu0 0.0
    %2604 = vmatprep.subr.mxu0 0.0
    %2605 = vmatpush2.msra.mxu0 0.0
    %2606 = vmatprep.subr.mxu0 0.0
    %2607 = vmatpush2.msra.mxu0 0.0
    %2608 = vmatprep.subr.mxu0 0.0
    %2609 = vmatpush2.msra.mxu0 0.0
    %2610 = vmatprep.subr.mxu0 0.0
    %2611 = vmatpush2.msra.mxu0 0.0
    %2612 = vmatprep.subr.mxu0 0.0
    %2613 = vmatpush2.msra.mxu0 0.0
    %2614 = vmatprep.subr.mxu0 0.0
    %2615 = vmatpush2.msra.mxu0 0.0
    %2616 = vmatprep.subr.mxu0 0.0
    %2617 = vmatpush2.msra.mxu0 0.0
    %2618 = vmatprep.subr.mxu0 0.0
    %2619 = vmatpush2.msra.mxu0 0.0
    %2620 = vmatprep.subr.mxu0 0.0
    %2621 = vmatpush2.msra.mxu0 0.0
    %2622 = vmatprep.subr.mxu0 0.0
    %2623 = vmatpush2.msra.mxu0 0.0
    %2624 = vmatprep.subr.mxu0 0.0
    %2625 = vmatpush2.msra.mxu0 0.0
    %2626 = vmatprep.mubr.f32.mxu0 0.0
    %2627 = vmatmul.mubr.f32.gmra.mxu0 %v2560
    %v2628 = vpop.f32.mrf.mxu0
    %v2629 = vadd.f32 0.0, %v2628
    %v2630 = vpop.f32.mrf.mxu0
    %2631 = vdwg.mxu0
    %2632 = vrot.lane.b32.xlu0 %v1970, 112
    %v2633 = vpop.permute.xlu0 %2632
    %2634 = vrot.lane.b32.xlu0 %v1962, 80
    %v2635 = vpop.permute.xlu0 %2634
    %v2636 = vsel %vm160, %v2633, 0
    %v2638 = vsel %vm160, %v2635, 0
    %2640 = vmatprep.subr.mxu0 0.0
    %2641 = vmatpush1.xpose.msra.mxu0 0.0
    %2642 = vmatprep.subr.mxu0 0.0
    %2643 = vmatpush1.xpose.msra.mxu0 0.0
    %2644 = vmatprep.subr.mxu0 0.0
    %2645 = vmatpush1.xpose.msra.mxu0 0.0
    %2646 = vmatprep.subr.mxu0 0.0
    %2647 = vmatpush1.xpose.msra.mxu0 0.0
    %2648 = vmatprep.subr.mxu0 0.0
    %2649 = vmatpush1.xpose.msra.mxu0 0.0
    %2650 = vmatprep.subr.mxu0 0.0
    %2651 = vmatpush1.xpose.msra.mxu0 0.0
    %2652 = vmatprep.subr.mxu0 0.0
    %2653 = vmatpush1.xpose.msra.mxu0 0.0
    %2654 = vmatprep.subr.mxu0 0.0
    %2655 = vmatpush1.xpose.msra.mxu0 0.0
    %2656 = vmatprep.subr.mxu0 0.0
    %2657 = vmatpush1.xpose.msra.mxu0 0.0
    %2658 = vmatprep.subr.mxu0 0.0
    %2659 = vmatpush1.xpose.msra.mxu0 0.0
    %2660 = vmatprep.subr.mxu0 0.0
    %2661 = vmatpush1.xpose.msra.mxu0 0.0
    %2662 = vmatprep.subr.mxu0 0.0
    %2663 = vmatpush1.xpose.msra.mxu0 0.0
    %2664 = vmatprep.subr.mxu0 0.0
    %2665 = vmatpush1.xpose.msra.mxu0 0.0
    %2666 = vmatprep.subr.mxu0 0.0
    %2667 = vmatpush1.xpose.msra.mxu0 0.0
    %2668 = vmatprep.subr.mxu0 0.0
    %2669 = vmatpush1.xpose.msra.mxu0 0.0
    %2670 = vmatprep.subr.mxu0 0.0
    %2671 = vmatpush1.xpose.msra.mxu0 %v2638
    %2672 = vmatprep.subr.mxu0 0.0
    %2673 = vmatpush2.xpose.msra.mxu0 0.0
    %2674 = vmatprep.subr.mxu0 0.0
    %2675 = vmatpush2.xpose.msra.mxu0 0.0
    %2676 = vmatprep.subr.mxu0 0.0
    %2677 = vmatpush2.xpose.msra.mxu0 0.0
    %2678 = vmatprep.subr.mxu0 0.0
    %2679 = vmatpush2.xpose.msra.mxu0 0.0
    %2680 = vmatprep.subr.mxu0 0.0
    %2681 = vmatpush2.xpose.msra.mxu0 0.0
    %2682 = vmatprep.subr.mxu0 0.0
    %2683 = vmatpush2.xpose.msra.mxu0 0.0
    %2684 = vmatprep.subr.mxu0 0.0
    %2685 = vmatpush2.xpose.msra.mxu0 0.0
    %2686 = vmatprep.subr.mxu0 0.0
    %2687 = vmatpush2.xpose.msra.mxu0 0.0
    %2688 = vmatprep.subr.mxu0 0.0
    %2689 = vmatpush2.xpose.msra.mxu0 0.0
    %2690 = vmatprep.subr.mxu0 0.0
    %2691 = vmatpush2.xpose.msra.mxu0 0.0
    %2692 = vmatprep.subr.mxu0 0.0
    %2693 = vmatpush2.xpose.msra.mxu0 0.0
    %2694 = vmatprep.subr.mxu0 0.0
    %2695 = vmatpush2.xpose.msra.mxu0 0.0
    %2696 = vmatprep.subr.mxu0 0.0
    %2697 = vmatpush2.xpose.msra.mxu0 0.0
    %2698 = vmatprep.subr.mxu0 0.0
    %2699 = vmatpush2.xpose.msra.mxu0 0.0
    %2700 = vmatprep.subr.mxu0 0.0
    %2701 = vmatpush2.xpose.msra.mxu0 0.0
    %2702 = vmatprep.subr.mxu0 0.0
    %2703 = vmatpush2.xpose.msra.mxu0 0.0
    %2704 = vmatprep.mubr.f32.mxu0 0.0
    %2705 = vmatmul.mubr.f32.gmra.mxu0 %v2636
    %v2706 = vpop.f32.mrf.mxu0
    %v2707 = vadd.f32 0.0, %v2706
    %v2708 = vpop.f32.mrf.mxu0
    %2709 = vdwg.mxu0
    %2710 = vrot.lane.b32.xlu0 %v1971, 112
    %v2711 = vpop.permute.xlu0 %2710
    %2712 = vrot.lane.b32.xlu0 %v1967, 80
    %v2713 = vpop.permute.xlu0 %2712
    %v2714 = vsel %vm160, %v2711, 0
    %v2716 = vsel %vm160, %v2713, 0
    %2718 = vmatprep.subr.mxu0 0.0
    %2719 = vmatpush1.xpose.msra.mxu0 0.0
    %2720 = vmatprep.subr.mxu0 0.0
    %2721 = vmatpush1.xpose.msra.mxu0 0.0
    %2722 = vmatprep.subr.mxu0 0.0
    %2723 = vmatpush1.xpose.msra.mxu0 0.0
    %2724 = vmatprep.subr.mxu0 0.0
    %2725 = vmatpush1.xpose.msra.mxu0 0.0
    %2726 = vmatprep.subr.mxu0 0.0
    %2727 = vmatpush1.xpose.msra.mxu0 0.0
    %2728 = vmatprep.subr.mxu0 0.0
    %2729 = vmatpush1.xpose.msra.mxu0 0.0
    %2730 = vmatprep.subr.mxu0 0.0
    %2731 = vmatpush1.xpose.msra.mxu0 0.0
    %2732 = vmatprep.subr.mxu0 0.0
    %2733 = vmatpush1.xpose.msra.mxu0 0.0
    %2734 = vmatprep.subr.mxu0 0.0
    %2735 = vmatpush1.xpose.msra.mxu0 0.0
    %2736 = vmatprep.subr.mxu0 0.0
    %2737 = vmatpush1.xpose.msra.mxu0 0.0
    %2738 = vmatprep.subr.mxu0 0.0
    %2739 = vmatpush1.xpose.msra.mxu0 0.0
    %2740 = vmatprep.subr.mxu0 0.0
    %2741 = vmatpush1.xpose.msra.mxu0 0.0
    %2742 = vmatprep.subr.mxu0 0.0
    %2743 = vmatpush1.xpose.msra.mxu0 0.0
    %2744 = vmatprep.subr.mxu0 0.0
    %2745 = vmatpush1.xpose.msra.mxu0 0.0
    %2746 = vmatprep.subr.mxu0 0.0
    %2747 = vmatpush1.xpose.msra.mxu0 0.0
    %2748 = vmatprep.subr.mxu0 0.0
    %2749 = vmatpush1.xpose.msra.mxu0 %v2716
    %2750 = vmatprep.subr.mxu0 0.0
    %2751 = vmatpush2.xpose.msra.mxu0 0.0
    %2752 = vmatprep.subr.mxu0 0.0
    %2753 = vmatpush2.xpose.msra.mxu0 0.0
    %2754 = vmatprep.subr.mxu0 0.0
    %2755 = vmatpush2.xpose.msra.mxu0 0.0
    %2756 = vmatprep.subr.mxu0 0.0
    %2757 = vmatpush2.xpose.msra.mxu0 0.0
    %2758 = vmatprep.subr.mxu0 0.0
    %2759 = vmatpush2.xpose.msra.mxu0 0.0
    %2760 = vmatprep.subr.mxu0 0.0
    %2761 = vmatpush2.xpose.msra.mxu0 0.0
    %2762 = vmatprep.subr.mxu0 0.0
    %2763 = vmatpush2.xpose.msra.mxu0 0.0
    %2764 = vmatprep.subr.mxu0 0.0
    %2765 = vmatpush2.xpose.msra.mxu0 0.0
    %2766 = vmatprep.subr.mxu0 0.0
    %2767 = vmatpush2.xpose.msra.mxu0 0.0
    %2768 = vmatprep.subr.mxu0 0.0
    %2769 = vmatpush2.xpose.msra.mxu0 0.0
    %2770 = vmatprep.subr.mxu0 0.0
    %2771 = vmatpush2.xpose.msra.mxu0 0.0
    %2772 = vmatprep.subr.mxu0 0.0
    %2773 = vmatpush2.xpose.msra.mxu0 0.0
    %2774 = vmatprep.subr.mxu0 0.0
    %2775 = vmatpush2.xpose.msra.mxu0 0.0
    %2776 = vmatprep.subr.mxu0 0.0
    %2777 = vmatpush2.xpose.msra.mxu0 0.0
    %2778 = vmatprep.subr.mxu0 0.0
    %2779 = vmatpush2.xpose.msra.mxu0 0.0
    %2780 = vmatprep.subr.mxu0 0.0
    %2781 = vmatpush2.xpose.msra.mxu0 0.0
    %2782 = vmatprep.mubr.f32.mxu0 0.0
    %2783 = vmatmul.mubr.f32.gmra.mxu0 %v2714
    %v2784 = vpop.f32.mrf.mxu0
    %v2785 = vadd.f32 0.0, %v2784
    %v2786 = vpop.f32.mrf.mxu0
    %2787 = vdwg.mxu0
    %v2788 = vsel %vm160, %v2707, -inf
    %2789 = vmax.xlane.f32.xlu0 %v2788
    %v2790 = vpop.xlane.xlu0 %2789
    %v2791 = vsel %vm160, %v2785, -inf
    %2792 = vmax.xlane.f32.xlu0 %v2791
    %v2793 = vpop.xlane.xlu0 %2792
    %v2794 = vsub.f32 %v2707, %v2790
    %v2795 = vsub.f32 %v2785, %v2793
    %v2796 = vmul.f32 %v2794, 1.442695
    %v2797 = vpow.pop %v2796
    %v2798 = vmul.f32 %v2795, 1.442695
    %v2799 = vpow.pop %v2798
    %v2800 = vsel %vm160, %v2797, 0.0
    %2801 = vadd.xlane.f32.xlu0 %v2800
    %v2802 = vpop.xlane.xlu0 %2801
    %v2803 = vsel %vm160, %v2799, 0.0
    %2804 = vadd.xlane.f32.xlu0 %v2803
    %v2805 = vpop.xlane.xlu0 %2804
    %v2806 = vrcp.pop %v2802
    %v2807 = vrcp.pop %v2805
    %v2808 = vmul.f32 %v2797, %v2806
    %v2809 = vmul.f32 %v2799, %v2807
    %2810 = vrot.lane.b32.xlu0 %v1962, 48
    %v2811 = vpop.permute.xlu0 %2810
    %v2814 = vsel %vm160, %v2808, 0
    %2816 = vmatprep.subr.mxu0 0.0
    %2817 = vmatpush1.msra.mxu0 0.0
    %2818 = vmatprep.subr.mxu0 0.0
    %2819 = vmatpush1.msra.mxu0 0.0
    %2820 = vmatprep.subr.mxu0 0.0
    %2821 = vmatpush1.msra.mxu0 0.0
    %2822 = vmatprep.subr.mxu0 0.0
    %2823 = vmatpush1.msra.mxu0 0.0
    %2824 = vmatprep.subr.mxu0 0.0
    %2825 = vmatpush1.msra.mxu0 0.0
    %2826 = vmatprep.subr.mxu0 0.0
    %2827 = vmatpush1.msra.mxu0 0.0
    %2828 = vmatprep.subr.mxu0 0.0
    %2829 = vmatpush1.msra.mxu0 0.0
    %2830 = vmatprep.subr.mxu0 0.0
    %2831 = vmatpush1.msra.mxu0 0.0
    %2832 = vmatprep.subr.mxu0 0.0
    %2833 = vmatpush1.msra.mxu0 0.0
    %2834 = vmatprep.subr.mxu0 0.0
    %2835 = vmatpush1.msra.mxu0 0.0
    %2836 = vmatprep.subr.mxu0 0.0
    %2837 = vmatpush1.msra.mxu0 0.0
    %2838 = vmatprep.subr.mxu0 0.0
    %2839 = vmatpush1.msra.mxu0 0.0
    %2840 = vmatprep.subr.mxu0 0.0
    %2841 = vmatpush1.msra.mxu0 0.0
    %2842 = vmatprep.subr.mxu0 0.0
    %2843 = vmatpush1.msra.mxu0 0.0
    %2844 = vmatprep.subr.mxu0 0.0
    %2845 = vmatpush1.msra.mxu0 0.0
    %2846 = vmatprep.subr.mxu0 0.0
    %2847 = vmatpush1.msra.mxu0 %v2811
    %2848 = vmatprep.subr.mxu0 0.0
    %2849 = vmatpush2.msra.mxu0 0.0
    %2850 = vmatprep.subr.mxu0 0.0
    %2851 = vmatpush2.msra.mxu0 0.0
    %2852 = vmatprep.subr.mxu0 0.0
    %2853 = vmatpush2.msra.mxu0 0.0
    %2854 = vmatprep.subr.mxu0 0.0
    %2855 = vmatpush2.msra.mxu0 0.0
    %2856 = vmatprep.subr.mxu0 0.0
    %2857 = vmatpush2.msra.mxu0 0.0
    %2858 = vmatprep.subr.mxu0 0.0
    %2859 = vmatpush2.msra.mxu0 0.0
    %2860 = vmatprep.subr.mxu0 0.0
    %2861 = vmatpush2.msra.mxu0 0.0
    %2862 = vmatprep.subr.mxu0 0.0
    %2863 = vmatpush2.msra.mxu0 0.0
    %2864 = vmatprep.subr.mxu0 0.0
    %2865 = vmatpush2.msra.mxu0 0.0
    %2866 = vmatprep.subr.mxu0 0.0
    %2867 = vmatpush2.msra.mxu0 0.0
    %2868 = vmatprep.subr.mxu0 0.0
    %2869 = vmatpush2.msra.mxu0 0.0
    %2870 = vmatprep.subr.mxu0 0.0
    %2871 = vmatpush2.msra.mxu0 0.0
    %2872 = vmatprep.subr.mxu0 0.0
    %2873 = vmatpush2.msra.mxu0 0.0
    %2874 = vmatprep.subr.mxu0 0.0
    %2875 = vmatpush2.msra.mxu0 0.0
    %2876 = vmatprep.subr.mxu0 0.0
    %2877 = vmatpush2.msra.mxu0 0.0
    %2878 = vmatprep.subr.mxu0 0.0
    %2879 = vmatpush2.msra.mxu0 0.0
    %2880 = vmatprep.mubr.f32.mxu0 0.0
    %2881 = vmatmul.mubr.f32.gmra.mxu0 %v2814
    %v2882 = vpop.f32.mrf.mxu0
    %v2883 = vadd.f32 0.0, %v2882
    %v2884 = vpop.f32.mrf.mxu0
    %2885 = vdwg.mxu0
    %2886 = vrot.lane.b32.xlu0 %v1967, 48
    %v2887 = vpop.permute.xlu0 %2886
    %v2890 = vsel %vm160, %v2809, 0
    %2892 = vmatprep.subr.mxu0 0.0
    %2893 = vmatpush1.msra.mxu0 0.0
    %2894 = vmatprep.subr.mxu0 0.0
    %2895 = vmatpush1.msra.mxu0 0.0
    %2896 = vmatprep.subr.mxu0 0.0
    %2897 = vmatpush1.msra.mxu0 0.0
    %2898 = vmatprep.subr.mxu0 0.0
    %2899 = vmatpush1.msra.mxu0 0.0
    %2900 = vmatprep.subr.mxu0 0.0
    %2901 = vmatpush1.msra.mxu0 0.0
    %2902 = vmatprep.subr.mxu0 0.0
    %2903 = vmatpush1.msra.mxu0 0.0
    %2904 = vmatprep.subr.mxu0 0.0
    %2905 = vmatpush1.msra.mxu0 0.0
    %2906 = vmatprep.subr.mxu0 0.0
    %2907 = vmatpush1.msra.mxu0 0.0
    %2908 = vmatprep.subr.mxu0 0.0
    %2909 = vmatpush1.msra.mxu0 0.0
    %2910 = vmatprep.subr.mxu0 0.0
    %2911 = vmatpush1.msra.mxu0 0.0
    %2912 = vmatprep.subr.mxu0 0.0
    %2913 = vmatpush1.msra.mxu0 0.0
    %2914 = vmatprep.subr.mxu0 0.0
    %2915 = vmatpush1.msra.mxu0 0.0
    %2916 = vmatprep.subr.mxu0 0.0
    %2917 = vmatpush1.msra.mxu0 0.0
    %2918 = vmatprep.subr.mxu0 0.0
    %2919 = vmatpush1.msra.mxu0 0.0
    %2920 = vmatprep.subr.mxu0 0.0
    %2921 = vmatpush1.msra.mxu0 0.0
    %2922 = vmatprep.subr.mxu0 0.0
    %2923 = vmatpush1.msra.mxu0 %v2887
    %2924 = vmatprep.subr.mxu0 0.0
    %2925 = vmatpush2.msra.mxu0 0.0
    %2926 = vmatprep.subr.mxu0 0.0
    %2927 = vmatpush2.msra.mxu0 0.0
    %2928 = vmatprep.subr.mxu0 0.0
    %2929 = vmatpush2.msra.mxu0 0.0
    %2930 = vmatprep.subr.mxu0 0.0
    %2931 = vmatpush2.msra.mxu0 0.0
    %2932 = vmatprep.subr.mxu0 0.0
    %2933 = vmatpush2.msra.mxu0 0.0
    %2934 = vmatprep.subr.mxu0 0.0
    %2935 = vmatpush2.msra.mxu0 0.0
    %2936 = vmatprep.subr.mxu0 0.0
    %2937 = vmatpush2.msra.mxu0 0.0
    %2938 = vmatprep.subr.mxu0 0.0
    %2939 = vmatpush2.msra.mxu0 0.0
    %2940 = vmatprep.subr.mxu0 0.0
    %2941 = vmatpush2.msra.mxu0 0.0
    %2942 = vmatprep.subr.mxu0 0.0
    %2943 = vmatpush2.msra.mxu0 0.0
    %2944 = vmatprep.subr.mxu0 0.0
    %2945 = vmatpush2.msra.mxu0 0.0
    %2946 = vmatprep.subr.mxu0 0.0
    %2947 = vmatpush2.msra.mxu0 0.0
    %2948 = vmatprep.subr.mxu0 0.0
    %2949 = vmatpush2.msra.mxu0 0.0
    %2950 = vmatprep.subr.mxu0 0.0
    %2951 = vmatpush2.msra.mxu0 0.0
    %2952 = vmatprep.subr.mxu0 0.0
    %2953 = vmatpush2.msra.mxu0 0.0
    %2954 = vmatprep.subr.mxu0 0.0
    %2955 = vmatpush2.msra.mxu0 0.0
    %2956 = vmatprep.mubr.f32.mxu0 0.0
    %2957 = vmatmul.mubr.f32.gmra.mxu0 %v2890
    %v2958 = vpop.f32.mrf.mxu0
    %v2959 = vadd.f32 0.0, %v2958
    %v2960 = vpop.f32.mrf.mxu0
    %2961 = vdwg.mxu0
    %2962 = vrot.lane.b32.xlu0 %v1970, 104
    %v2963 = vpop.permute.xlu0 %2962
    %2964 = vrot.lane.b32.xlu0 %v1962, 72
    %v2965 = vpop.permute.xlu0 %2964
    %v2966 = vsel %vm160, %v2963, 0
    %v2968 = vsel %vm160, %v2965, 0
    %2970 = vmatprep.subr.mxu0 0.0
    %2971 = vmatpush1.xpose.msra.mxu0 0.0
    %2972 = vmatprep.subr.mxu0 0.0
    %2973 = vmatpush1.xpose.msra.mxu0 0.0
    %2974 = vmatprep.subr.mxu0 0.0
    %2975 = vmatpush1.xpose.msra.mxu0 0.0
    %2976 = vmatprep.subr.mxu0 0.0
    %2977 = vmatpush1.xpose.msra.mxu0 0.0
    %2978 = vmatprep.subr.mxu0 0.0
    %2979 = vmatpush1.xpose.msra.mxu0 0.0
    %2980 = vmatprep.subr.mxu0 0.0
    %2981 = vmatpush1.xpose.msra.mxu0 0.0
    %2982 = vmatprep.subr.mxu0 0.0
    %2983 = vmatpush1.xpose.msra.mxu0 0.0
    %2984 = vmatprep.subr.mxu0 0.0
    %2985 = vmatpush1.xpose.msra.mxu0 0.0
    %2986 = vmatprep.subr.mxu0 0.0
    %2987 = vmatpush1.xpose.msra.mxu0 0.0
    %2988 = vmatprep.subr.mxu0 0.0
    %2989 = vmatpush1.xpose.msra.mxu0 0.0
    %2990 = vmatprep.subr.mxu0 0.0
    %2991 = vmatpush1.xpose.msra.mxu0 0.0
    %2992 = vmatprep.subr.mxu0 0.0
    %2993 = vmatpush1.xpose.msra.mxu0 0.0
    %2994 = vmatprep.subr.mxu0 0.0
    %2995 = vmatpush1.xpose.msra.mxu0 0.0
    %2996 = vmatprep.subr.mxu0 0.0
    %2997 = vmatpush1.xpose.msra.mxu0 0.0
    %2998 = vmatprep.subr.mxu0 0.0
    %2999 = vmatpush1.xpose.msra.mxu0 0.0
    %3000 = vmatprep.subr.mxu0 0.0
    %3001 = vmatpush1.xpose.msra.mxu0 %v2968
    %3002 = vmatprep.subr.mxu0 0.0
    %3003 = vmatpush2.xpose.msra.mxu0 0.0
    %3004 = vmatprep.subr.mxu0 0.0
    %3005 = vmatpush2.xpose.msra.mxu0 0.0
    %3006 = vmatprep.subr.mxu0 0.0
    %3007 = vmatpush2.xpose.msra.mxu0 0.0
    %3008 = vmatprep.subr.mxu0 0.0
    %3009 = vmatpush2.xpose.msra.mxu0 0.0
    %3010 = vmatprep.subr.mxu0 0.0
    %3011 = vmatpush2.xpose.msra.mxu0 0.0
    %3012 = vmatprep.subr.mxu0 0.0
    %3013 = vmatpush2.xpose.msra.mxu0 0.0
    %3014 = vmatprep.subr.mxu0 0.0
    %3015 = vmatpush2.xpose.msra.mxu0 0.0
    %3016 = vmatprep.subr.mxu0 0.0
    %3017 = vmatpush2.xpose.msra.mxu0 0.0
    %3018 = vmatprep.subr.mxu0 0.0
    %3019 = vmatpush2.xpose.msra.mxu0 0.0
    %3020 = vmatprep.subr.mxu0 0.0
    %3021 = vmatpush2.xpose.msra.mxu0 0.0
    %3022 = vmatprep.subr.mxu0 0.0
    %3023 = vmatpush2.xpose.msra.mxu0 0.0
    %3024 = vmatprep.subr.mxu0 0.0
    %3025 = vmatpush2.xpose.msra.mxu0 0.0
    %3026 = vmatprep.subr.mxu0 0.0
    %3027 = vmatpush2.xpose.msra.mxu0 0.0
    %3028 = vmatprep.subr.mxu0 0.0
    %3029 = vmatpush2.xpose.msra.mxu0 0.0
    %3030 = vmatprep.subr.mxu0 0.0
    %3031 = vmatpush2.xpose.msra.mxu0 0.0
    %3032 = vmatprep.subr.mxu0 0.0
    %3033 = vmatpush2.xpose.msra.mxu0 0.0
    %3034 = vmatprep.mubr.f32.mxu0 0.0
    %3035 = vmatmul.mubr.f32.gmra.mxu0 %v2966
    %v3036 = vpop.f32.mrf.mxu0
    %v3037 = vadd.f32 0.0, %v3036
    %v3038 = vpop.f32.mrf.mxu0
    %3039 = vdwg.mxu0
    %3040 = vrot.lane.b32.xlu0 %v1971, 104
    %v3041 = vpop.permute.xlu0 %3040
    %3042 = vrot.lane.b32.xlu0 %v1967, 72
    %v3043 = vpop.permute.xlu0 %3042
    %v3044 = vsel %vm160, %v3041, 0
    %v3046 = vsel %vm160, %v3043, 0
    %3048 = vmatprep.subr.mxu0 0.0
    %3049 = vmatpush1.xpose.msra.mxu0 0.0
    %3050 = vmatprep.subr.mxu0 0.0
    %3051 = vmatpush1.xpose.msra.mxu0 0.0
    %3052 = vmatprep.subr.mxu0 0.0
    %3053 = vmatpush1.xpose.msra.mxu0 0.0
    %3054 = vmatprep.subr.mxu0 0.0
    %3055 = vmatpush1.xpose.msra.mxu0 0.0
    %3056 = vmatprep.subr.mxu0 0.0
    %3057 = vmatpush1.xpose.msra.mxu0 0.0
    %3058 = vmatprep.subr.mxu0 0.0
    %3059 = vmatpush1.xpose.msra.mxu0 0.0
    %3060 = vmatprep.subr.mxu0 0.0
    %3061 = vmatpush1.xpose.msra.mxu0 0.0
    %3062 = vmatprep.subr.mxu0 0.0
    %3063 = vmatpush1.xpose.msra.mxu0 0.0
    %3064 = vmatprep.subr.mxu0 0.0
    %3065 = vmatpush1.xpose.msra.mxu0 0.0
    %3066 = vmatprep.subr.mxu0 0.0
    %3067 = vmatpush1.xpose.msra.mxu0 0.0
    %3068 = vmatprep.subr.mxu0 0.0
    %3069 = vmatpush1.xpose.msra.mxu0 0.0
    %3070 = vmatprep.subr.mxu0 0.0
    %3071 = vmatpush1.xpose.msra.mxu0 0.0
    %3072 = vmatprep.subr.mxu0 0.0
    %3073 = vmatpush1.xpose.msra.mxu0 0.0
    %3074 = vmatprep.subr.mxu0 0.0
    %3075 = vmatpush1.xpose.msra.mxu0 0.0
    %3076 = vmatprep.subr.mxu0 0.0
    %3077 = vmatpush1.xpose.msra.mxu0 0.0
    %3078 = vmatprep.subr.mxu0 0.0
    %3079 = vmatpush1.xpose.msra.mxu0 %v3046
    %3080 = vmatprep.subr.mxu0 0.0
    %3081 = vmatpush2.xpose.msra.mxu0 0.0
    %3082 = vmatprep.subr.mxu0 0.0
    %3083 = vmatpush2.xpose.msra.mxu0 0.0
    %3084 = vmatprep.subr.mxu0 0.0
    %3085 = vmatpush2.xpose.msra.mxu0 0.0
    %3086 = vmatprep.subr.mxu0 0.0
    %3087 = vmatpush2.xpose.msra.mxu0 0.0
    %3088 = vmatprep.subr.mxu0 0.0
    %3089 = vmatpush2.xpose.msra.mxu0 0.0
    %3090 = vmatprep.subr.mxu0 0.0
    %3091 = vmatpush2.xpose.msra.mxu0 0.0
    %3092 = vmatprep.subr.mxu0 0.0
    %3093 = vmatpush2.xpose.msra.mxu0 0.0
    %3094 = vmatprep.subr.mxu0 0.0
    %3095 = vmatpush2.xpose.msra.mxu0 0.0
    %3096 = vmatprep.subr.mxu0 0.0
    %3097 = vmatpush2.xpose.msra.mxu0 0.0
    %3098 = vmatprep.subr.mxu0 0.0
    %3099 = vmatpush2.xpose.msra.mxu0 0.0
    %3100 = vmatprep.subr.mxu0 0.0
    %3101 = vmatpush2.xpose.msra.mxu0 0.0
    %3102 = vmatprep.subr.mxu0 0.0
    %3103 = vmatpush2.xpose.msra.mxu0 0.0
    %3104 = vmatprep.subr.mxu0 0.0
    %3105 = vmatpush2.xpose.msra.mxu0 0.0
    %3106 = vmatprep.subr.mxu0 0.0
    %3107 = vmatpush2.xpose.msra.mxu0 0.0
    %3108 = vmatprep.subr.mxu0 0.0
    %3109 = vmatpush2.xpose.msra.mxu0 0.0
    %3110 = vmatprep.subr.mxu0 0.0
    %3111 = vmatpush2.xpose.msra.mxu0 0.0
    %3112 = vmatprep.mubr.f32.mxu0 0.0
    %3113 = vmatmul.mubr.f32.gmra.mxu0 %v3044
    %v3114 = vpop.f32.mrf.mxu0
    %v3115 = vadd.f32 0.0, %v3114
    %v3116 = vpop.f32.mrf.mxu0
    %3117 = vdwg.mxu0
    %v3118 = vsel %vm160, %v3037, -inf
    %3119 = vmax.xlane.f32.xlu0 %v3118
    %v3120 = vpop.xlane.xlu0 %3119
    %v3121 = vsel %vm160, %v3115, -inf
    %3122 = vmax.xlane.f32.xlu0 %v3121
    %v3123 = vpop.xlane.xlu0 %3122
    %v3124 = vsub.f32 %v3037, %v3120
    %v3125 = vsub.f32 %v3115, %v3123
    %v3126 = vmul.f32 %v3124, 1.442695
    %v3127 = vpow.pop %v3126
    %v3128 = vmul.f32 %v3125, 1.442695
    %v3129 = vpow.pop %v3128
    %v3130 = vsel %vm160, %v3127, 0.0
    %3131 = vadd.xlane.f32.xlu0 %v3130
    %v3132 = vpop.xlane.xlu0 %3131
    %v3133 = vsel %vm160, %v3129, 0.0
    %3134 = vadd.xlane.f32.xlu0 %v3133
    %v3135 = vpop.xlane.xlu0 %3134
    %v3136 = vrcp.pop %v3132
    %v3137 = vrcp.pop %v3135
    %v3138 = vmul.f32 %v3127, %v3136
    %v3139 = vmul.f32 %v3129, %v3137
    %3140 = vrot.lane.b32.xlu0 %v1962, 40
    %v3141 = vpop.permute.xlu0 %3140
    %v3144 = vsel %vm160, %v3138, 0
    %3146 = vmatprep.subr.mxu0 0.0
    %3147 = vmatpush1.msra.mxu0 0.0
    %3148 = vmatprep.subr.mxu0 0.0
    %3149 = vmatpush1.msra.mxu0 0.0
    %3150 = vmatprep.subr.mxu0 0.0
    %3151 = vmatpush1.msra.mxu0 0.0
    %3152 = vmatprep.subr.mxu0 0.0
    %3153 = vmatpush1.msra.mxu0 0.0
    %3154 = vmatprep.subr.mxu0 0.0
    %3155 = vmatpush1.msra.mxu0 0.0
    %3156 = vmatprep.subr.mxu0 0.0
    %3157 = vmatpush1.msra.mxu0 0.0
    %3158 = vmatprep.subr.mxu0 0.0
    %3159 = vmatpush1.msra.mxu0 0.0
    %3160 = vmatprep.subr.mxu0 0.0
    %3161 = vmatpush1.msra.mxu0 0.0
    %3162 = vmatprep.subr.mxu0 0.0
    %3163 = vmatpush1.msra.mxu0 0.0
    %3164 = vmatprep.subr.mxu0 0.0
    %3165 = vmatpush1.msra.mxu0 0.0
    %3166 = vmatprep.subr.mxu0 0.0
    %3167 = vmatpush1.msra.mxu0 0.0
    %3168 = vmatprep.subr.mxu0 0.0
    %3169 = vmatpush1.msra.mxu0 0.0
    %3170 = vmatprep.subr.mxu0 0.0
    %3171 = vmatpush1.msra.mxu0 0.0
    %3172 = vmatprep.subr.mxu0 0.0
    %3173 = vmatpush1.msra.mxu0 0.0
    %3174 = vmatprep.subr.mxu0 0.0
    %3175 = vmatpush1.msra.mxu0 0.0
    %3176 = vmatprep.subr.mxu0 0.0
    %3177 = vmatpush1.msra.mxu0 %v3141
    %3178 = vmatprep.subr.mxu0 0.0
    %3179 = vmatpush2.msra.mxu0 0.0
    %3180 = vmatprep.subr.mxu0 0.0
    %3181 = vmatpush2.msra.mxu0 0.0
    %3182 = vmatprep.subr.mxu0 0.0
    %3183 = vmatpush2.msra.mxu0 0.0
    %3184 = vmatprep.subr.mxu0 0.0
    %3185 = vmatpush2.msra.mxu0 0.0
    %3186 = vmatprep.subr.mxu0 0.0
    %3187 = vmatpush2.msra.mxu0 0.0
    %3188 = vmatprep.subr.mxu0 0.0
    %3189 = vmatpush2.msra.mxu0 0.0
    %3190 = vmatprep.subr.mxu0 0.0
    %3191 = vmatpush2.msra.mxu0 0.0
    %3192 = vmatprep.subr.mxu0 0.0
    %3193 = vmatpush2.msra.mxu0 0.0
    %3194 = vmatprep.subr.mxu0 0.0
    %3195 = vmatpush2.msra.mxu0 0.0
    %3196 = vmatprep.subr.mxu0 0.0
    %3197 = vmatpush2.msra.mxu0 0.0
    %3198 = vmatprep.subr.mxu0 0.0
    %3199 = vmatpush2.msra.mxu0 0.0
    %3200 = vmatprep.subr.mxu0 0.0
    %3201 = vmatpush2.msra.mxu0 0.0
    %3202 = vmatprep.subr.mxu0 0.0
    %3203 = vmatpush2.msra.mxu0 0.0
    %3204 = vmatprep.subr.mxu0 0.0
    %3205 = vmatpush2.msra.mxu0 0.0
    %3206 = vmatprep.subr.mxu0 0.0
    %3207 = vmatpush2.msra.mxu0 0.0
    %3208 = vmatprep.subr.mxu0 0.0
    %3209 = vmatpush2.msra.mxu0 0.0
    %3210 = vmatprep.mubr.f32.mxu0 0.0
    %3211 = vmatmul.mubr.f32.gmra.mxu0 %v3144
    %v3212 = vpop.f32.mrf.mxu0
    %v3213 = vadd.f32 0.0, %v3212
    %v3214 = vpop.f32.mrf.mxu0
    %3215 = vdwg.mxu0
    %3216 = vrot.lane.b32.xlu0 %v1967, 40
    %v3217 = vpop.permute.xlu0 %3216
    %v3220 = vsel %vm160, %v3139, 0
    %3222 = vmatprep.subr.mxu0 0.0
    %3223 = vmatpush1.msra.mxu0 0.0
    %3224 = vmatprep.subr.mxu0 0.0
    %3225 = vmatpush1.msra.mxu0 0.0
    %3226 = vmatprep.subr.mxu0 0.0
    %3227 = vmatpush1.msra.mxu0 0.0
    %3228 = vmatprep.subr.mxu0 0.0
    %3229 = vmatpush1.msra.mxu0 0.0
    %3230 = vmatprep.subr.mxu0 0.0
    %3231 = vmatpush1.msra.mxu0 0.0
    %3232 = vmatprep.subr.mxu0 0.0
    %3233 = vmatpush1.msra.mxu0 0.0
    %3234 = vmatprep.subr.mxu0 0.0
    %3235 = vmatpush1.msra.mxu0 0.0
    %3236 = vmatprep.subr.mxu0 0.0
    %3237 = vmatpush1.msra.mxu0 0.0
    %3238 = vmatprep.subr.mxu0 0.0
    %3239 = vmatpush1.msra.mxu0 0.0
    %3240 = vmatprep.subr.mxu0 0.0
    %3241 = vmatpush1.msra.mxu0 0.0
    %3242 = vmatprep.subr.mxu0 0.0
    %3243 = vmatpush1.msra.mxu0 0.0
    %3244 = vmatprep.subr.mxu0 0.0
    %3245 = vmatpush1.msra.mxu0 0.0
    %3246 = vmatprep.subr.mxu0 0.0
    %3247 = vmatpush1.msra.mxu0 0.0
    %3248 = vmatprep.subr.mxu0 0.0
    %3249 = vmatpush1.msra.mxu0 0.0
    %3250 = vmatprep.subr.mxu0 0.0
    %3251 = vmatpush1.msra.mxu0 0.0
    %3252 = vmatprep.subr.mxu0 0.0
    %3253 = vmatpush1.msra.mxu0 %v3217
    %3254 = vmatprep.subr.mxu0 0.0
    %3255 = vmatpush2.msra.mxu0 0.0
    %3256 = vmatprep.subr.mxu0 0.0
    %3257 = vmatpush2.msra.mxu0 0.0
    %3258 = vmatprep.subr.mxu0 0.0
    %3259 = vmatpush2.msra.mxu0 0.0
    %3260 = vmatprep.subr.mxu0 0.0
    %3261 = vmatpush2.msra.mxu0 0.0
    %3262 = vmatprep.subr.mxu0 0.0
    %3263 = vmatpush2.msra.mxu0 0.0
    %3264 = vmatprep.subr.mxu0 0.0
    %3265 = vmatpush2.msra.mxu0 0.0
    %3266 = vmatprep.subr.mxu0 0.0
    %3267 = vmatpush2.msra.mxu0 0.0
    %3268 = vmatprep.subr.mxu0 0.0
    %3269 = vmatpush2.msra.mxu0 0.0
    %3270 = vmatprep.subr.mxu0 0.0
    %3271 = vmatpush2.msra.mxu0 0.0
    %3272 = vmatprep.subr.mxu0 0.0
    %3273 = vmatpush2.msra.mxu0 0.0
    %3274 = vmatprep.subr.mxu0 0.0
    %3275 = vmatpush2.msra.mxu0 0.0
    %3276 = vmatprep.subr.mxu0 0.0
    %3277 = vmatpush2.msra.mxu0 0.0
    %3278 = vmatprep.subr.mxu0 0.0
    %3279 = vmatpush2.msra.mxu0 0.0
    %3280 = vmatprep.subr.mxu0 0.0
    %3281 = vmatpush2.msra.mxu0 0.0
    %3282 = vmatprep.subr.mxu0 0.0
    %3283 = vmatpush2.msra.mxu0 0.0
    %3284 = vmatprep.subr.mxu0 0.0
    %3285 = vmatpush2.msra.mxu0 0.0
    %3286 = vmatprep.mubr.f32.mxu0 0.0
    %3287 = vmatmul.mubr.f32.gmra.mxu0 %v3220
    %v3288 = vpop.f32.mrf.mxu0
    %v3289 = vadd.f32 0.0, %v3288
    %v3290 = vpop.f32.mrf.mxu0
    %3291 = vdwg.mxu0
    %3294 = vrot.lane.b32.xlu0 %v2553, 8
    %v3295 = vpop.permute.xlu0 %3294
    %3296 = vrot.lane.b32.xlu0 %v2629, 8
    %v3297 = vpop.permute.xlu0 %3296
    %3302 = vrot.lane.b32.xlu0 %v2883, 16
    %v3303 = vpop.permute.xlu0 %3302
    %3304 = vrot.lane.b32.xlu0 %v2959, 16
    %v3305 = vpop.permute.xlu0 %3304
    %3310 = vrot.lane.b32.xlu0 %v3213, 24
    %v3311 = vpop.permute.xlu0 %3310
    %3312 = vrot.lane.b32.xlu0 %v3289, 24
    %v3313 = vpop.permute.xlu0 %3312
    %v3316 = vsel %vm160, %v2223, %v3295
    %v3317 = vsel %vm160, %v2299, %v3297
    %v3318 = vsel %vm1504, %v3316, %v3303
    %v3319 = vsel %vm1504, %v3317, %v3305
    %v3320 = vsel %vm1507, %v3318, %v3311
    %v3321 = vsel %vm1507, %v3319, %v3313
    %v3322 = vlaneseq
    %v3323 = vshrl.u32 %v3322, 7
    %v3324 = vsub.s32 1, %v3323
    %v3325 = vrot.slane %v1872, %v3324
    %v3327 = vsel %vm66, %v3320, 0
    %v3330 = vsel %vm66, %v3321, 0
    %3332 = vmatprep.subr.mxu0 0.0
    %3333 = vmatpush1.msra.mxu0 0.0
    %3334 = vmatprep.subr.mxu0 0.0
    %3335 = vmatpush1.msra.mxu0 0.0
    %3336 = vmatprep.subr.mxu0 0.0
    %3337 = vmatpush1.msra.mxu0 0.0
    %3338 = vmatprep.subr.mxu0 0.0
    %3339 = vmatpush1.msra.mxu0 0.0
    %3340 = vmatprep.subr.mxu0 0.0
    %3341 = vmatpush1.msra.mxu0 0.0
    %3342 = vmatprep.subr.mxu0 0.0
    %3343 = vmatpush1.msra.mxu0 0.0
    %3344 = vmatprep.subr.mxu0 0.0
    %3345 = vmatpush1.msra.mxu0 0.0
    %3346 = vmatprep.subr.mxu0 0.0
    %3347 = vmatpush1.msra.mxu0 0.0
    %3348 = vmatprep.subr.mxu0 0.0
    %3349 = vmatpush1.msra.mxu0 0.0
    %3350 = vmatprep.subr.mxu0 0.0
    %3351 = vmatpush1.msra.mxu0 0.0
    %3352 = vmatprep.subr.mxu0 0.0
    %3353 = vmatpush1.msra.mxu0 0.0
    %3354 = vmatprep.subr.mxu0 0.0
    %3355 = vmatpush1.msra.mxu0 0.0
    %3356 = vmatprep.subr.mxu0 0.0
    %3357 = vmatpush1.msra.mxu0 %v1859
    %3358 = vmatprep.subr.mxu0 0.0
    %3359 = vmatpush1.msra.mxu0 %v1858
    %3360 = vmatprep.subr.mxu0 0.0
    %3361 = vmatpush1.msra.mxu0 %v1857
    %3362 = vmatprep.subr.mxu0 0.0
    %3363 = vmatpush1.msra.mxu0 %v1856
    %3364 = vmatprep.subr.mxu0 0.0
    %3365 = vmatpush2.msra.mxu0 0.0
    %3366 = vmatprep.subr.mxu0 0.0
    %3367 = vmatpush2.msra.mxu0 0.0
    %3368 = vmatprep.subr.mxu0 0.0
    %3369 = vmatpush2.msra.mxu0 0.0
    %3370 = vmatprep.subr.mxu0 0.0
    %3371 = vmatpush2.msra.mxu0 0.0
    %3372 = vmatprep.subr.mxu0 0.0
    %3373 = vmatpush2.msra.mxu0 0.0
    %3374 = vmatprep.subr.mxu0 0.0
    %3375 = vmatpush2.msra.mxu0 0.0
    %3376 = vmatprep.subr.mxu0 0.0
    %3377 = vmatpush2.msra.mxu0 0.0
    %3378 = vmatprep.subr.mxu0 0.0
    %3379 = vmatpush2.msra.mxu0 0.0
    %3380 = vmatprep.subr.mxu0 0.0
    %3381 = vmatpush2.msra.mxu0 0.0
    %3382 = vmatprep.subr.mxu0 0.0
    %3383 = vmatpush2.msra.mxu0 0.0
    %3384 = vmatprep.subr.mxu0 0.0
    %3385 = vmatpush2.msra.mxu0 0.0
    %3386 = vmatprep.subr.mxu0 0.0
    %3387 = vmatpush2.msra.mxu0 0.0
    %3388 = vmatprep.subr.mxu0 0.0
    %3389 = vmatpush2.msra.mxu0 0.0
    %3390 = vmatprep.subr.mxu0 0.0
    %3391 = vmatpush2.msra.mxu0 0.0
    %3392 = vmatprep.subr.mxu0 0.0
    %3393 = vmatpush2.msra.mxu0 0.0
    %3394 = vmatprep.subr.mxu0 0.0
    %3395 = vmatpush2.msra.mxu0 0.0
    %3396 = vmatprep.mubr.f32.mxu0 0.0
    %3397 = vmatmul.mubr.f32.gmra.mxu0 %v3327
    %v3398 = vpop.f32.mrf.mxu0
    %v3399 = vadd.f32 %v3325, %v3398
    %v3400 = vpop.f32.mrf.mxu0
    %3401 = vmatprep.mubr.f32.mxu0 0.0
    %3402 = vmatmul.mubr.f32.gmra.mxu0 %v3330
    %v3403 = vpop.f32.mrf.mxu0
    %v3404 = vadd.f32 %v3325, %v3403
    %v3405 = vpop.f32.mrf.mxu0
    %3406 = vdwg.mxu0
    %v3407 = vadd.f32 %v1846, %v3399
    %v3408 = vadd.f32 %v1847, %v3404
    %v3409 = vsel %vm66, %v3407, 0.0
    %3410 = vadd.xlane.f32.xlu0 %v3409
    %v3411 = vpop.xlane.xlu0 %3410
    %v3412 = vsel %vm66, %v3408, 0.0
    %3413 = vadd.xlane.f32.xlu0 %v3412
    %v3414 = vpop.xlane.xlu0 %3413
    %v3415 = vmul.f32 %v3411, %v1603
    %v3416 = vmul.f32 %v3414, %v1603
    %v3417 = vsub.f32 %v3407, %v3415
    %v3418 = vsub.f32 %v3408, %v3416
    %v3419 = vmul.f32 %v3417, %v3417
    %v3420 = vmul.f32 %v3418, %v3418
    %v3421 = vsel %vm66, %v3419, 0.0
    %3422 = vadd.xlane.f32.xlu0 %v3421
    %v3423 = vpop.xlane.xlu0 %3422
    %v3424 = vsel %vm66, %v3420, 0.0
    %3425 = vadd.xlane.f32.xlu0 %v3424
    %v3426 = vpop.xlane.xlu0 %3425
    %v3427 = vmul.f32 %v3423, %v1603
    %v3428 = vmul.f32 %v3426, %v1603
    %v3429 = vadd.f32 %v3427, 1e-05
    %v3430 = vadd.f32 %v3428, 1e-05
    %v3431 = vrsqrt.pop %v3429
    %v3432 = vrsqrt.pop %v3430
    %v3433 = vmul.f32 %v3417, %v3431
    %v3434 = vmul.f32 %v3418, %v3432
    %v3435 = vlaneseq
    %v3436 = vshrl.u32 %v3435, 7
    %v3437 = vsub.s32 2, %v3436
    %v3438 = vrot.slane %v1872, %v3437
    %v3439 = vmul.f32 %v3433, %v3438
    %v3440 = vmul.f32 %v3434, %v3438
    %v3441 = vlaneseq
    %v3442 = vshrl.u32 %v3441, 7
    %v3443 = vsub.s32 3, %v3442
    %v3444 = vrot.slane %v1872, %v3443
    %v3445 = vadd.f32 %v3439, %v3444
    %v3446 = vadd.f32 %v3440, %v3444
    %v3447 = vlaneseq
    %v3448 = vshrl.u32 %v3447, 7
    %v3449 = vsub.s32 4, %v3448
    %v3450 = vrot.slane %v1872, %v3449
    %v3452 = vsel %vm66, %v3445, 0
    %v3455 = vsel %vm66, %v3446, 0
    %3457 = vmatprep.subr.mxu0 0.0
    %3458 = vmatpush1.msra.mxu0 0.0
    %3459 = vmatprep.subr.mxu0 0.0
    %3460 = vmatpush1.msra.mxu0 0.0
    %3461 = vmatprep.subr.mxu0 0.0
    %3462 = vmatpush1.msra.mxu0 0.0
    %3463 = vmatprep.subr.mxu0 0.0
    %3464 = vmatpush1.msra.mxu0 0.0
    %3465 = vmatprep.subr.mxu0 0.0
    %3466 = vmatpush1.msra.mxu0 0.0
    %3467 = vmatprep.subr.mxu0 0.0
    %3468 = vmatpush1.msra.mxu0 0.0
    %3469 = vmatprep.subr.mxu0 0.0
    %3470 = vmatpush1.msra.mxu0 0.0
    %3471 = vmatprep.subr.mxu0 0.0
    %3472 = vmatpush1.msra.mxu0 0.0
    %3473 = vmatprep.subr.mxu0 0.0
    %3474 = vmatpush1.msra.mxu0 0.0
    %3475 = vmatprep.subr.mxu0 0.0
    %3476 = vmatpush1.msra.mxu0 0.0
    %3477 = vmatprep.subr.mxu0 0.0
    %3478 = vmatpush1.msra.mxu0 0.0
    %3479 = vmatprep.subr.mxu0 0.0
    %3480 = vmatpush1.msra.mxu0 0.0
    %3481 = vmatprep.subr.mxu0 0.0
    %3482 = vmatpush1.msra.mxu0 %v1863
    %3483 = vmatprep.subr.mxu0 0.0
    %3484 = vmatpush1.msra.mxu0 %v1862
    %3485 = vmatprep.subr.mxu0 0.0
    %3486 = vmatpush1.msra.mxu0 %v1861
    %3487 = vmatprep.subr.mxu0 0.0
    %3488 = vmatpush1.msra.mxu0 %v1860
    %3489 = vmatprep.subr.mxu0 0.0
    %3490 = vmatpush2.msra.mxu0 0.0
    %3491 = vmatprep.subr.mxu0 0.0
    %3492 = vmatpush2.msra.mxu0 0.0
    %3493 = vmatprep.subr.mxu0 0.0
    %3494 = vmatpush2.msra.mxu0 0.0
    %3495 = vmatprep.subr.mxu0 0.0
    %3496 = vmatpush2.msra.mxu0 0.0
    %3497 = vmatprep.subr.mxu0 0.0
    %3498 = vmatpush2.msra.mxu0 0.0
    %3499 = vmatprep.subr.mxu0 0.0
    %3500 = vmatpush2.msra.mxu0 0.0
    %3501 = vmatprep.subr.mxu0 0.0
    %3502 = vmatpush2.msra.mxu0 0.0
    %3503 = vmatprep.subr.mxu0 0.0
    %3504 = vmatpush2.msra.mxu0 0.0
    %3505 = vmatprep.subr.mxu0 0.0
    %3506 = vmatpush2.msra.mxu0 0.0
    %3507 = vmatprep.subr.mxu0 0.0
    %3508 = vmatpush2.msra.mxu0 0.0
    %3509 = vmatprep.subr.mxu0 0.0
    %3510 = vmatpush2.msra.mxu0 0.0
    %3511 = vmatprep.subr.mxu0 0.0
    %3512 = vmatpush2.msra.mxu0 0.0
    %3513 = vmatprep.subr.mxu0 0.0
    %3514 = vmatpush2.msra.mxu0 0.0
    %3515 = vmatprep.subr.mxu0 0.0
    %3516 = vmatpush2.msra.mxu0 0.0
    %3517 = vmatprep.subr.mxu0 0.0
    %3518 = vmatpush2.msra.mxu0 0.0
    %3519 = vmatprep.subr.mxu0 0.0
    %3520 = vmatpush2.msra.mxu0 0.0
    %3521 = vmatprep.mubr.f32.mxu0 0.0
    %3522 = vmatmul.mubr.f32.gmra.mxu0 %v3452
    %v3523 = vpop.f32.mrf.mxu0
    %v3524 = vadd.f32 %v3450, %v3523
    %v3525 = vpop.f32.mrf.mxu0
    %3526 = vmatprep.mubr.f32.mxu0 0.0
    %3527 = vmatmul.mubr.f32.gmra.mxu0 %v3455
    %v3528 = vpop.f32.mrf.mxu0
    %v3529 = vadd.f32 %v3450, %v3528
    %v3530 = vpop.f32.mrf.mxu0
    %3531 = vdwg.mxu0
    %v3532 = vmax.f32 %v3524, 0.0
    %v3533 = vmax.f32 %v3529, 0.0
    %v3534 = vlaneseq
    %v3535 = vshrl.u32 %v3534, 7
    %v3536 = vsub.s32 5, %v3535
    %v3537 = vrot.slane %v1872, %v3536
    %v3539 = vsel %vm73, %v3532, 0
    %v3542 = vsel %vm73, %v3533, 0
    %3544 = vmatprep.subr.mxu0 0.0
    %3545 = vmatpush1.msra.mxu0 0.0
    %3546 = vmatprep.subr.mxu0 0.0
    %3547 = vmatpush1.msra.mxu0 0.0
    %3548 = vmatprep.subr.mxu0 0.0
    %3549 = vmatpush1.msra.mxu0 0.0
    %3550 = vmatprep.subr.mxu0 0.0
    %3551 = vmatpush1.msra.mxu0 0.0
    %3552 = vmatprep.subr.mxu0 0.0
    %3553 = vmatpush1.msra.mxu0 0.0
    %3554 = vmatprep.subr.mxu0 0.0
    %3555 = vmatpush1.msra.mxu0 0.0
    %3556 = vmatprep.subr.mxu0 0.0
    %3557 = vmatpush1.msra.mxu0 0.0
    %3558 = vmatprep.subr.mxu0 0.0
    %3559 = vmatpush1.msra.mxu0 0.0
    %3560 = vmatprep.subr.mxu0 0.0
    %3561 = vmatpush1.msra.mxu0 %v1871
    %3562 = vmatprep.subr.mxu0 0.0
    %3563 = vmatpush1.msra.mxu0 %v1870
    %3564 = vmatprep.subr.mxu0 0.0
    %3565 = vmatpush1.msra.mxu0 %v1869
    %3566 = vmatprep.subr.mxu0 0.0
    %3567 = vmatpush1.msra.mxu0 %v1868
    %3568 = vmatprep.subr.mxu0 0.0
    %3569 = vmatpush1.msra.mxu0 %v1867
    %3570 = vmatprep.subr.mxu0 0.0
    %3571 = vmatpush1.msra.mxu0 %v1866
    %3572 = vmatprep.subr.mxu0 0.0
    %3573 = vmatpush1.msra.mxu0 %v1865
    %3574 = vmatprep.subr.mxu0 0.0
    %3575 = vmatpush1.msra.mxu0 %v1864
    %3576 = vmatprep.subr.mxu0 0.0
    %3577 = vmatpush2.msra.mxu0 0.0
    %3578 = vmatprep.subr.mxu0 0.0
    %3579 = vmatpush2.msra.mxu0 0.0
    %3580 = vmatprep.subr.mxu0 0.0
    %3581 = vmatpush2.msra.mxu0 0.0
    %3582 = vmatprep.subr.mxu0 0.0
    %3583 = vmatpush2.msra.mxu0 0.0
    %3584 = vmatprep.subr.mxu0 0.0
    %3585 = vmatpush2.msra.mxu0 0.0
    %3586 = vmatprep.subr.mxu0 0.0
    %3587 = vmatpush2.msra.mxu0 0.0
    %3588 = vmatprep.subr.mxu0 0.0
    %3589 = vmatpush2.msra.mxu0 0.0
    %3590 = vmatprep.subr.mxu0 0.0
    %3591 = vmatpush2.msra.mxu0 0.0
    %3592 = vmatprep.subr.mxu0 0.0
    %3593 = vmatpush2.msra.mxu0 0.0
    %3594 = vmatprep.subr.mxu0 0.0
    %3595 = vmatpush2.msra.mxu0 0.0
    %3596 = vmatprep.subr.mxu0 0.0
    %3597 = vmatpush2.msra.mxu0 0.0
    %3598 = vmatprep.subr.mxu0 0.0
    %3599 = vmatpush2.msra.mxu0 0.0
    %3600 = vmatprep.subr.mxu0 0.0
    %3601 = vmatpush2.msra.mxu0 0.0
    %3602 = vmatprep.subr.mxu0 0.0
    %3603 = vmatpush2.msra.mxu0 0.0
    %3604 = vmatprep.subr.mxu0 0.0
    %3605 = vmatpush2.msra.mxu0 0.0
    %3606 = vmatprep.subr.mxu0 0.0
    %3607 = vmatpush2.msra.mxu0 0.0
    %3608 = vmatprep.mubr.f32.mxu0 0.0
    %3609 = vmatmul.mubr.f32.gmra.mxu0 %v3539
    %v3610 = vpop.f32.mrf.mxu0
    %v3611 = vadd.f32 %v3537, %v3610
    %v3612 = vpop.f32.mrf.mxu0
    %3613 = vmatprep.mubr.f32.mxu0 0.0
    %3614 = vmatmul.mubr.f32.gmra.mxu0 %v3542
    %v3615 = vpop.f32.mrf.mxu0
    %v3616 = vadd.f32 %v3537, %v3615
    %v3617 = vpop.f32.mrf.mxu0
    %3618 = vdwg.mxu0
    %v3619 = vadd.f32 %v3445, %v3611
    %v3620 = vadd.f32 %v3446, %v3616
    %v3621 = vsel %vm66, %v3619, 0.0
    %3622 = vadd.xlane.f32.xlu0 %v3621
    %v3623 = vpop.xlane.xlu0 %3622
    %v3624 = vsel %vm66, %v3620, 0.0
    %3625 = vadd.xlane.f32.xlu0 %v3624
    %v3626 = vpop.xlane.xlu0 %3625
    %v3627 = vmul.f32 %v3623, %v1603
    %v3628 = vmul.f32 %v3626, %v1603
    %v3629 = vsub.f32 %v3619, %v3627
    %v3630 = vsub.f32 %v3620, %v3628
    %v3631 = vmul.f32 %v3629, %v3629
    %v3632 = vmul.f32 %v3630, %v3630
    %v3633 = vsel %vm66, %v3631, 0.0
    %3634 = vadd.xlane.f32.xlu0 %v3633
    %v3635 = vpop.xlane.xlu0 %3634
    %v3636 = vsel %vm66, %v3632, 0.0
    %3637 = vadd.xlane.f32.xlu0 %v3636
    %v3638 = vpop.xlane.xlu0 %3637
    %v3639 = vmul.f32 %v3635, %v1603
    %v3640 = vmul.f32 %v3638, %v1603
    %v3641 = vadd.f32 %v3639, 1e-05
    %v3642 = vadd.f32 %v3640, 1e-05
    %v3643 = vrsqrt.pop %v3641
    %v3644 = vrsqrt.pop %v3642
    %v3645 = vmul.f32 %v3629, %v3643
    %v3646 = vmul.f32 %v3630, %v3644
    %v3647 = vlaneseq
    %v3648 = vshrl.u32 %v3647, 7
    %v3649 = vsub.s32 6, %v3648
    %v3650 = vrot.slane %v1872, %v3649
    %v3651 = vmul.f32 %v3645, %v3650
    %v3652 = vmul.f32 %v3646, %v3650
    %v3653 = vlaneseq
    %v3654 = vshrl.u32 %v3653, 7
    %v3655 = vsub.s32 7, %v3654
    %v3656 = vrot.slane %v1872, %v3655
    %v3657 = vadd.f32 %v3651, %v3656
    %v3658 = vadd.f32 %v3652, %v3656
    %v3659 = vld [vmem:[#allocation2 + $0x190] sm:$0x1]
    %v3660 = vld [vmem:[#allocation2 + $0x191] sm:$0x1]
    %v3661 = vsel %vm66, %v3657, 0.0
    %3662 = vadd.xlane.f32.xlu0 %v3661
    %v3663 = vpop.xlane.xlu0 %3662
    %v3664 = vsel %vm66, %v3658, 0.0
    %3665 = vadd.xlane.f32.xlu0 %v3664
    %v3666 = vpop.xlane.xlu0 %3665
    %v3667 = vmul.f32 %v3663, %v1603
    %v3668 = vmul.f32 %v3666, %v1603
    %v3669 = vsub.f32 %v3657, %v3667
    %v3670 = vsub.f32 %v3658, %v3668
    %v3671 = vmul.f32 %v3669, %v3669
    %v3672 = vmul.f32 %v3670, %v3670
    %v3673 = vsel %vm66, %v3671, 0.0
    %3674 = vadd.xlane.f32.xlu0 %v3673
    %v3675 = vpop.xlane.xlu0 %3674
    %v3676 = vsel %vm66, %v3672, 0.0
    %3677 = vadd.xlane.f32.xlu0 %v3676
    %v3678 = vpop.xlane.xlu0 %3677
    %v3679 = vmul.f32 %v3675, %v1603
    %v3680 = vmul.f32 %v3678, %v1603
    %v3681 = vadd.f32 %v3679, 1e-05
    %v3682 = vadd.f32 %v3680, 1e-05
    %v3683 = vrsqrt.pop %v3681
    %v3684 = vrsqrt.pop %v3682
    %v3685 = vmul.f32 %v3669, %v3683
    %v3686 = vmul.f32 %v3670, %v3684
    %v3687 = vlaneseq
    %v3688 = vshrl.u32 %v3687, 7
    %v3689 = vsub.s32 0, %v3688
    %v3690 = vrot.slane %v3659, %v3689
    %v3691 = vmul.f32 %v3685, %v3690
    %v3692 = vmul.f32 %v3686, %v3690
    %v3693 = vlaneseq
    %v3694 = vshrl.u32 %v3693, 7
    %v3695 = vsub.s32 0, %v3694
    %v3696 = vrot.slane %v3660, %v3695
    %v3697 = vadd.f32 %v3691, %v3696
    %v3698 = vadd.f32 %v3692, %v3696
    %v3701 = vcombine.high %v3697, %v3697
    %v3702 = vcombine.high %v3698, %v3698
    %v3703 = vlaneseq
    %v3704 = vshrl.u32 %v3703, 7
    %v3705 = vsub.s32 0, %v3704
    %v3706 = vrot.slane %v3697, %v3705
    %v3707 = vlaneseq
    %v3708 = vshrl.u32 %v3707, 7
    %v3709 = vsub.s32 0, %v3708
    %v3710 = vrot.slane %v3701, %v3709
    %v3711 = vlaneseq
    %v3712 = vshrl.u32 %v3711, 7
    %v3713 = vsub.s32 0, %v3712
    %v3714 = vrot.slane %v3698, %v3713
    %v3715 = vlaneseq
    %v3716 = vshrl.u32 %v3715, 7
    %v3717 = vsub.s32 0, %v3716
    %v3718 = vrot.slane %v3702, %v3717
    %vm3719 = vcmask 1041409
    %v3720 = vsel %vm3719, %v3710, %v3706
    %vm3721 = vcmask 1042434
    %v3722 = vsel %vm3721, %v3714, %v3720
    %vm3723 = vcmask 1043459
    %v3724 = vsel %vm3723, %v3718, %v3722
    %v3726 = vlaneseq
    %v3727 = vshrl.u32 %v3726, 7
    %v3728 = vsub.s32 1, %v3727
    %v3729 = vrot.slane %v3697, %v3728
    %v3730 = vlaneseq
    %v3731 = vshrl.u32 %v3730, 7
    %v3732 = vsub.s32 1, %v3731
    %v3733 = vrot.slane %v3701, %v3732
    %v3734 = vlaneseq
    %v3735 = vshrl.u32 %v3734, 7
    %v3736 = vsub.s32 1, %v3735
    %v3737 = vrot.slane %v3698, %v3736
    %v3738 = vlaneseq
    %v3739 = vshrl.u32 %v3738, 7
    %v3740 = vsub.s32 1, %v3739
    %v3741 = vrot.slane %v3702, %v3740
    %v3742 = vsel %vm3719, %v3733, %v3729
    %v3743 = vsel %vm3721, %v3737, %v3742
    %v3744 = vsel %vm3723, %v3741, %v3743
    %3745 = vrot.lane.b32.xlu0 %v3744, 32
    %v3746 = vpop.permute.xlu0 %3745
    %v3748 = vlaneseq
    %v3749 = vshrl.u32 %v3748, 7
    %v3750 = vsub.s32 2, %v3749
    %v3751 = vrot.slane %v3697, %v3750
    %v3752 = vlaneseq
    %v3753 = vshrl.u32 %v3752, 7
    %v3754 = vsub.s32 2, %v3753
    %v3755 = vrot.slane %v3701, %v3754
    %v3756 = vlaneseq
    %v3757 = vshrl.u32 %v3756, 7
    %v3758 = vsub.s32 2, %v3757
    %v3759 = vrot.slane %v3698, %v3758
    %v3760 = vlaneseq
    %v3761 = vshrl.u32 %v3760, 7
    %v3762 = vsub.s32 2, %v3761
    %v3763 = vrot.slane %v3702, %v3762
    %v3764 = vsel %vm3719, %v3755, %v3751
    %v3765 = vsel %vm3721, %v3759, %v3764
    %v3766 = vsel %vm3723, %v3763, %v3765
    %3767 = vrot.lane.b32.xlu0 %v3766, 64
    %v3768 = vpop.permute.xlu0 %3767
    %v3770 = vlaneseq
    %v3771 = vshrl.u32 %v3770, 7
    %v3772 = vsub.s32 3, %v3771
    %v3773 = vrot.slane %v3697, %v3772
    %v3774 = vlaneseq
    %v3775 = vshrl.u32 %v3774, 7
    %v3776 = vsub.s32 3, %v3775
    %v3777 = vrot.slane %v3701, %v3776
    %v3778 = vlaneseq
    %v3779 = vshrl.u32 %v3778, 7
    %v3780 = vsub.s32 3, %v3779
    %v3781 = vrot.slane %v3698, %v3780
    %v3782 = vlaneseq
    %v3783 = vshrl.u32 %v3782, 7
    %v3784 = vsub.s32 3, %v3783
    %v3785 = vrot.slane %v3702, %v3784
    %v3786 = vsel %vm3719, %v3777, %v3773
    %v3787 = vsel %vm3721, %v3781, %v3786
    %v3788 = vsel %vm3723, %v3785, %v3787
    %3789 = vrot.lane.b32.xlu0 %v3788, 96
    %v3790 = vpop.permute.xlu0 %3789
    %v3792 = vsel %vm66, %v3724, %v3746
    %v3793 = vsel %vm73, %v3792, %v3768
    %vm3794 = vcmask 785408
    %v3795 = vsel %vm3794, %v3793, %v3790
    %3796 = vst [vmem:[%s3] sm:$0xf] %v3795
    // Predicated region
    $region18: #{_lambda_.1} parent=1 // pred_check
      _
    $region19: #{_lambda_.1} parent=1 // pred_check_branch
      %3798 = sbr.rel (0) target = $region21
    $region20: #{_lambda_.1} parent=1 // pred_region
      _
    $region21: #{_lambda_.1} parent=1 // pred_fallthru
      _
    // Predicated region
    $region22: #{_lambda_.1} parent=1 // pred_check
      _
    $region23: #{_lambda_.1} parent=1 // pred_check_branch
      %3800 = sbr.rel (0) target = $region25
    $region24: #{_lambda_.1} parent=1 // pred_region
      _
    $region25: #{_lambda_.1} parent=1 // pred_fallthru
      _
    %3801 = vsyncpa [#allocation3], 1

</llo_original>
